<compile_context>
chip_gen: v7x
topology: tpu7x:2x2x1
jax: 0.10.0
libtpu: 0.0.40
codegen_flags: <defaults>
</compile_context>

<pallas_src>
import functools
import math

import jax
import jax.numpy as jnp
import numpy as np
from jax.experimental import pallas as pl
from jax.experimental.pallas import tpu as pltpu

LN_EPS = 1e-5  # PyTorch nn.LayerNorm default

_LAYER_KEYS = ("ln1_g", "ln1_b", "wqkv", "bqkv", "wo", "bo",
               "ln2_g", "ln2_b", "w1", "b1", "w2", "b2")


# ----------------------------- kernel ---------------------------------------


def _layernorm(x, g, b):
    """LayerNorm over the last axis (f32).  g, b broadcast over rows."""
    mu = jnp.mean(x, axis=-1, keepdims=True)
    var = jnp.mean(jnp.square(x - mu), axis=-1, keepdims=True)
    return (x - mu) * jax.lax.rsqrt(var + LN_EPS) * g + b


def clip_fused_kernel(x_ref, ln1g, ln1b, wqkv, bqkv, wo, bo,
                      ln2g, ln2b, w1, b1, w2, b2, lnfg, lnfb,
                      o_ref, *, n_head):
    """grid = (batch_tiles, n_layers); one full CLIPLayer per grid step.

    The output block (index constant over the layer axis) carries the f32
    residual stream across layers; the final LayerNorm is applied on the last
    layer iteration.
    """
    l_idx = pl.program_id(1)
    n_layers = pl.num_programs(1)

    # Initialize the resident activation from the embeddings on the first layer.
    @pl.when(l_idx == 0)
    def _():
        o_ref[...] = x_ref[...]

    x = o_ref[...]                       # (Bt, S, D) f32 residual stream
    Bt, S, D = x.shape
    dh = D // n_head
    xf = x.reshape(Bt * S, D)

    # ---- attention block: x = x + out_proj(attn(LN1(x))) ----
    h = _layernorm(xf, ln1g[0], ln1b[0]).astype(jnp.bfloat16)
    # Single big QKV projection: (Bt*S, D) @ (D, 3D), bf16 MXU, f32 accumulate.
    # 1/sqrt(dh) is already folded into the q columns of wqkv / bqkv.
    qkv = jnp.dot(h, wqkv[0], preferred_element_type=jnp.float32) + bqkv[0]

    row = jax.lax.broadcasted_iota(jnp.int32, (S, S), 0)
    col = jax.lax.broadcasted_iota(jnp.int32, (S, S), 1)
    causal = col > row                   # strictly-upper triangle masked

    # Per-batch-item, per-head attention (static unrolled loops; S, dh small).
    attn_rows = []
    for b in range(Bt):
        r0 = b * S
        heads = []
        for hd in range(n_head):
            qh = qkv[r0:r0 + S, hd * dh:(hd + 1) * dh]
            kh = qkv[r0:r0 + S, D + hd * dh:D + (hd + 1) * dh]
            vh = qkv[r0:r0 + S, 2 * D + hd * dh:2 * D + (hd + 1) * dh]
            s = jnp.dot(qh, kh.T, preferred_element_type=jnp.float32)
            s = jnp.where(causal, -jnp.inf, s)
            s = s - jnp.max(s, axis=-1, keepdims=True)
            e = jnp.exp(s)
            denom = jnp.sum(e, axis=-1, keepdims=True)
            p = e * pl.reciprocal(denom)          # EUP divide
            heads.append(jnp.dot(p, vh, preferred_element_type=jnp.float32))
        heads_cat = heads[0] if len(heads) == 1 else jnp.concatenate(heads, -1)
        attn_rows.append(heads_cat)               # (S, D)
    attn = attn_rows[0] if Bt == 1 else jnp.concatenate(attn_rows, axis=0)

    # Single out-projection matmul over all heads: (Bt*S, D) @ (D, D), K = D.
    attn = jnp.dot(attn.astype(jnp.bfloat16), wo[0],
                   preferred_element_type=jnp.float32) + bo[0]
    xf = xf + attn

    # ---- MLP block: x = x + W2( quickGELU( W1( LN2(x) ) ) ) ----
    h2 = _layernorm(xf, ln2g[0], ln2b[0]).astype(jnp.bfloat16)
    m = jnp.dot(h2, w1[0], preferred_element_type=jnp.float32) + b1[0]
    m = m * jax.nn.sigmoid(1.702 * m)             # quick-GELU (f32)
    m = jnp.dot(m.astype(jnp.bfloat16), w2[0],
                preferred_element_type=jnp.float32) + b2[0]
    xf = xf + m

    o_ref[...] = xf.reshape(Bt, S, D)

    # Fused final LayerNorm on the last layer iteration.
    @pl.when(l_idx == n_layers - 1)
    def _():
        o_ref[...] = _layernorm(xf, lnfg[...], lnfb[...]).reshape(Bt, S, D)


# ----------------------------- wrapper ---------------------------------------


def prepare_layer_params(params, n_head):
    """Stack per-layer params to (L, ...), fold softmax scale, cast to bf16."""
    D = params["layers"][0]["wqkv"].shape[0]
    dh = D // n_head
    scale = 1.0 / math.sqrt(dh)
    stacked = {k: jnp.stack([lp[k] for lp in params["layers"]])
               for k in _LAYER_KEYS}
    # Fold 1/sqrt(dh) into the q projection (first D output columns).
    stacked["wqkv"] = stacked["wqkv"].at[:, :, :D].multiply(scale)
    stacked["bqkv"] = stacked["bqkv"].at[:, :, :D].multiply(scale)
    # bf16 matmul weights (MXU peak path); biases / LN params stay f32.
    for k in ("wqkv", "wo", "w1", "w2"):
        stacked[k] = stacked[k].astype(jnp.bfloat16)
    return stacked


def run_clip_fused(x, stacked, lnf_g, lnf_b, n_head, *, block_b=1,
                   vmem_limit_bytes=64 * 1024 * 1024):
    B, S, D = x.shape
    assert B % block_b == 0
    L = stacked["wqkv"].shape[0]
    grid = (B // block_b, L)              # layer axis innermost ("arbitrary")

    x_map = lambda b, l: (b, 0, 0)        # constant over l -> loaded once per b
    w_map = lambda b, l: (l, 0, 0)        # streamed / prefetched per layer
    rep_map = lambda b, l: (0, 0)

    w_arrays = [stacked[k] for k in _LAYER_KEYS]
    in_specs = [pl.BlockSpec((block_b, S, D), x_map)]
    in_specs += [pl.BlockSpec((1,) + w.shape[1:], w_map) for w in w_arrays]
    in_specs += [pl.BlockSpec(lnf_g.shape, rep_map),
                 pl.BlockSpec(lnf_b.shape, rep_map)]

    return pl.pallas_call(
        functools.partial(clip_fused_kernel, n_head=n_head),
        out_shape=jax.ShapeDtypeStruct((B, S, D), jnp.float32),
        grid=grid,
        in_specs=in_specs,
        out_specs=pl.BlockSpec((block_b, S, D), x_map),
        compiler_params=pltpu.CompilerParams(
            dimension_semantics=("parallel", "arbitrary"),
            vmem_limit_bytes=vmem_limit_bytes),
    )(x, *w_arrays, lnf_g, lnf_b)


def clip_forward(tokens, params, n_head, *, block_b=1):
    # Glue: embedding row-gather + learned position add (not a matmul hot path).
    x = jnp.take(params["token_emb"], tokens, axis=0) + params["pos_emb"][None]
    stacked = prepare_layer_params(params, n_head)
    return run_clip_fused(x, stacked, params["ln_f_g"], params["ln_f_b"],
                          n_head, block_b=block_b)


# ------------------------- parameter init -----------------------------------


def init_params(key, n_vocab, n_tokens, n_embd, n_layers):
    keys = jax.random.split(key, 2 + n_layers)
    D = n_embd
    params = {
        "token_emb": 0.02 * jax.random.normal(keys[0], (n_vocab, D), jnp.float32),
        # PyTorch initializes the position embedding to zeros; use small random
        # values so the add is exercised (synthetic init).
        "pos_emb": 0.02 * jax.random.normal(keys[1], (n_tokens, D), jnp.float32),
        "ln_f_g": jnp.ones((1, D), jnp.float32),
        "ln_f_b": jnp.zeros((1, D), jnp.float32),
        "layers": [],
    }
    for i in range(n_layers):
        ks = jax.random.split(keys[2 + i], 4)
        params["layers"].append(dict(
            ln1_g=jnp.ones((1, D), jnp.float32),
            ln1_b=jnp.zeros((1, D), jnp.float32),
            wqkv=0.02 * jax.random.normal(ks[0], (D, 3 * D), jnp.float32),
            bqkv=jnp.zeros((1, 3 * D), jnp.float32),
            wo=0.02 * jax.random.normal(ks[1], (D, D), jnp.float32),
            bo=jnp.zeros((1, D), jnp.float32),
            ln2_g=jnp.ones((1, D), jnp.float32),
            ln2_b=jnp.zeros((1, D), jnp.float32),
            w1=0.02 * jax.random.normal(ks[2], (D, 4 * D), jnp.float32),
            b1=jnp.zeros((1, 4 * D), jnp.float32),
            w2=0.02 * jax.random.normal(ks[3], (4 * D, D), jnp.float32),
            b2=jnp.zeros((1, D), jnp.float32),
        ))
    return params


# --------------------------- pure-JAX reference ------------------------------


def clip_reference(tokens, params, n_head):
    """Same forward pass / same precision policy (bf16 weight matmuls, f32
    accumulation and LN/softmax), implemented with plain JAX ops."""
    stacked = prepare_layer_params(params, n_head)
    x = jnp.take(params["token_emb"], tokens, axis=0) + params["pos_emb"][None]
    B, S, D = x.shape
    dh = D // n_head
    L = stacked["wqkv"].shape[0]
    mask = jnp.triu(jnp.ones((S, S), bool), 1)

    def ln(v, g, b):
        mu = v.mean(-1, keepdims=True)
        var = jnp.square(v - mu).mean(-1, keepdims=True)
        return (v - mu) * jax.lax.rsqrt(var + LN_EPS) * g + b

    def bf16_dot(a, w):
        return jnp.einsum("bsd,de->bse", a.astype(jnp.bfloat16), w,
                          preferred_element_type=jnp.float32)

    for l in range(L):
        p = {k: stacked[k][l] for k in _LAYER_KEYS}
        h = ln(x, p["ln1_g"][0], p["ln1_b"][0])
        qkv = bf16_dot(h, p["wqkv"]) + p["bqkv"][0]   # scale folded into wq/bq
        q, k, v = jnp.split(qkv, 3, axis=-1)
        q = q.reshape(B, S, n_head, dh).transpose(0, 2, 1, 3)
        k = k.reshape(B, S, n_head, dh).transpose(0, 2, 1, 3)
        v = v.reshape(B, S, n_head, dh).transpose(0, 2, 1, 3)
        w = jnp.einsum("bhqd,bhkd->bhqk", q, k)
        w = jnp.where(mask, -jnp.inf, w)
        w = jax.nn.softmax(w, axis=-1)
        o = jnp.einsum("bhqk,bhkd->bhqd", w, v)
        o = o.transpose(0, 2, 1, 3).reshape(B, S, D)
        x = x + bf16_dot(o, p["wo"]) + p["bo"][0]
        h = ln(x, p["ln2_g"][0], p["ln2_b"][0])
        m = bf16_dot(h, p["w1"]) + p["b1"][0]
        m = m * jax.nn.sigmoid(1.702 * m)
        x = x + bf16_dot(m, p["w2"]) + p["b2"][0]
    return ln(x, params["ln_f_g"][0], params["ln_f_b"][0])


# ------------------------------- main ----------------------------------------

if __name__ == "__main__":
    # Scaled-down CLIP config (original: vocab=49408, seq=77, d=768, 12 heads,
    # 12 layers).  D=128 keeps every block lane-dense (multiple of 128).
    N_VOCAB, N_TOKENS, N_EMBD, N_HEAD, N_LAYERS = 512, 16, 128, 4, 4
    BATCH = 2

    key = jax.random.PRNGKey(0)
    pkey, tkey = jax.random.split(key)
    params = init_params(pkey, N_VOCAB, N_TOKENS, N_EMBD, N_LAYERS)
    tokens = jax.random.randint(tkey, (BATCH, N_TOKENS), 0, N_VOCAB,
                                dtype=jnp.int32)

    out = clip_forward(tokens, params, N_HEAD)
    out = jax.block_until_ready(out)

    ref = clip_reference(tokens, params, N_HEAD)
    np.testing.assert_allclose(np.asarray(out), np.asarray(ref),
                               rtol=2e-3, atol=2e-3)
    print("KERNEL_OK")
</pallas_src>

<mosaic_0001>
module attributes {stable_mosaic.version = 11 : i64} {
  func.func @clip_fused_kernel(%arg0: i32, %arg1: i32, %arg2: memref<1x16x128xf32, #tpu.memory_space<vmem>>, %arg3: memref<1x1x128xf32, #tpu.memory_space<vmem>>, %arg4: memref<1x1x128xf32, #tpu.memory_space<vmem>>, %arg5: memref<1x128x384xbf16, #tpu.memory_space<vmem>>, %arg6: memref<1x1x384xf32, #tpu.memory_space<vmem>>, %arg7: memref<1x128x128xbf16, #tpu.memory_space<vmem>>, %arg8: memref<1x1x128xf32, #tpu.memory_space<vmem>>, %arg9: memref<1x1x128xf32, #tpu.memory_space<vmem>>, %arg10: memref<1x1x128xf32, #tpu.memory_space<vmem>>, %arg11: memref<1x128x512xbf16, #tpu.memory_space<vmem>>, %arg12: memref<1x1x512xf32, #tpu.memory_space<vmem>>, %arg13: memref<1x512x128xbf16, #tpu.memory_space<vmem>>, %arg14: memref<1x1x128xf32, #tpu.memory_space<vmem>>, %arg15: memref<1x128xf32, #tpu.memory_space<vmem>>, %arg16: memref<1x128xf32, #tpu.memory_space<vmem>>, %arg17: memref<1x16x128xf32, #tpu.memory_space<vmem>>) attributes {dimension_semantics = [#tpu.dimension_semantics<parallel>, #tpu.dimension_semantics<arbitrary>], iteration_bounds = array<i64: 2, 4>, scalar_prefetch = 0 : i64, scratch_operands = 0 : i64, tpu.core_type = #tpu.core_type<tc>, window_params = [{transform_indices = @transform_0, window_bounds = array<i64: 1, 16, 128>}, {transform_indices = @transform_1, window_bounds = array<i64: 1, 1, 128>}, {transform_indices = @transform_2, window_bounds = array<i64: 1, 1, 128>}, {transform_indices = @transform_3, window_bounds = array<i64: 1, 128, 384>}, {transform_indices = @transform_4, window_bounds = array<i64: 1, 1, 384>}, {transform_indices = @transform_5, window_bounds = array<i64: 1, 128, 128>}, {transform_indices = @transform_6, window_bounds = array<i64: 1, 1, 128>}, {transform_indices = @transform_7, window_bounds = array<i64: 1, 1, 128>}, {transform_indices = @transform_8, window_bounds = array<i64: 1, 1, 128>}, {transform_indices = @transform_9, window_bounds = array<i64: 1, 128, 512>}, {transform_indices = @transform_10, window_bounds = array<i64: 1, 1, 512>}, {transform_indices = @transform_11, window_bounds = array<i64: 1, 512, 128>}, {transform_indices = @transform_12, window_bounds = array<i64: 1, 1, 128>}, {pipeline_mode = #tpu.pipeline_mode<synchronous>, transform_indices = @transform_13, window_bounds = array<i64: 1, 128>}, {pipeline_mode = #tpu.pipeline_mode<synchronous>, transform_indices = @transform_14, window_bounds = array<i64: 1, 128>}, {transform_indices = @transform_15, window_bounds = array<i64: 1, 16, 128>}]} {
    %c0_i32 = arith.constant 0 : i32
    %0 = arith.cmpi eq, %arg1, %c0_i32 : i32
    %1 = arith.extui %0 : i1 to i32
    %c0_i32_0 = arith.constant 0 : i32
    %2 = arith.cmpi ne, %1, %c0_i32_0 : i32
    scf.if %2 {
      %c0_78 = arith.constant 0 : index
      %c0_79 = arith.constant 0 : index
      %c0_80 = arith.constant 0 : index
      %180 = vector.load %arg2[%c0_78, %c0_79, %c0_80] : memref<1x16x128xf32, #tpu.memory_space<vmem>>, vector<1x16x128xf32>
      %c0_81 = arith.constant 0 : index
      %c0_82 = arith.constant 0 : index
      %c0_83 = arith.constant 0 : index
      %181 = vector.load %arg17[%c0_81, %c0_82, %c0_83] : memref<1x16x128xf32, #tpu.memory_space<vmem>>, vector<1x16x128xf32>
      tpu.vector_store %arg17[%c0_81, %c0_82, %c0_83], %180 {strides = array<i32>} : memref<1x16x128xf32, #tpu.memory_space<vmem>>, vector<1x16x128xf32>,
    } else {
    }
    %c0 = arith.constant 0 : index
    %c0_1 = arith.constant 0 : index
    %c0_2 = arith.constant 0 : index
    %3 = vector.load %arg17[%c0, %c0_1, %c0_2] : memref<1x16x128xf32, #tpu.memory_space<vmem>>, vector<1x16x128xf32>
    %4 = vector.shape_cast %3 : vector<1x16x128xf32> to vector<16x128xf32>
    %c0_3 = arith.constant 0 : index
    %c0_4 = arith.constant 0 : index
    %c0_5 = arith.constant 0 : index
    %5 = vector.load %arg3[%c0_3, %c0_4, %c0_5] : memref<1x1x128xf32, #tpu.memory_space<vmem>>, vector<1x1x128xf32>
    %6 = vector.shape_cast %5 : vector<1x1x128xf32> to vector<1x128xf32>
    %c0_6 = arith.constant 0 : index
    %c0_7 = arith.constant 0 : index
    %c0_8 = arith.constant 0 : index
    %7 = vector.load %arg4[%c0_6, %c0_7, %c0_8] : memref<1x1x128xf32, #tpu.memory_space<vmem>>, vector<1x1x128xf32>
    %8 = vector.shape_cast %7 : vector<1x1x128xf32> to vector<1x128xf32>
    %cst = arith.constant dense<0.000000e+00> : vector<16xf32>
    %9 = vector.multi_reduction <add>, %4, %cst [1] : vector<16x128xf32> to vector<16xf32>
    %10 = vector.shape_cast %9 : vector<16xf32> to vector<16x1xf32>
    %cst_9 = arith.constant 1.280000e+02 : f32
    %11 = vector.broadcast %cst_9 : f32 to vector<16x1xf32>
    %12 = arith.divf %10, %11 : vector<16x1xf32>
    %13 = vector.broadcast %12 : vector<16x1xf32> to vector<16x128xf32>
    %14 = arith.subf %4, %13 : vector<16x128xf32>
    %15 = arith.mulf %14, %14 : vector<16x128xf32>
    %cst_10 = arith.constant dense<0.000000e+00> : vector<16xf32>
    %16 = vector.multi_reduction <add>, %15, %cst_10 [1] : vector<16x128xf32> to vector<16xf32>
    %17 = vector.shape_cast %16 : vector<16xf32> to vector<16x1xf32>
    %cst_11 = arith.constant 1.280000e+02 : f32
    %18 = vector.broadcast %cst_11 : f32 to vector<16x1xf32>
    %19 = arith.divf %17, %18 : vector<16x1xf32>
    %20 = vector.broadcast %12 : vector<16x1xf32> to vector<16x128xf32>
    %21 = arith.subf %4, %20 : vector<16x128xf32>
    %cst_12 = arith.constant 9.99999974E-6 : f32
    %22 = vector.broadcast %cst_12 : f32 to vector<16x1xf32>
    %23 = arith.addf %19, %22 : vector<16x1xf32>
    %24 = math.rsqrt %23 : vector<16x1xf32>
    %25 = vector.broadcast %24 : vector<16x1xf32> to vector<16x128xf32>
    %26 = arith.mulf %21, %25 : vector<16x128xf32>
    %27 = vector.broadcast %6 : vector<1x128xf32> to vector<16x128xf32>
    %28 = arith.mulf %26, %27 : vector<16x128xf32>
    %29 = vector.broadcast %8 : vector<1x128xf32> to vector<16x128xf32>
    %30 = arith.addf %28, %29 : vector<16x128xf32>
    %31 = arith.truncf %30 : vector<16x128xf32> to vector<16x128xbf16>
    %c0_13 = arith.constant 0 : index
    %c0_14 = arith.constant 0 : index
    %c0_15 = arith.constant 0 : index
    %32 = vector.load %arg5[%c0_13, %c0_14, %c0_15] : memref<1x128x384xbf16, #tpu.memory_space<vmem>>, vector<1x128x384xbf16>
    %33 = vector.shape_cast %32 : vector<1x128x384xbf16> to vector<128x384xbf16>
    %cst_16 = arith.constant dense<0.000000e+00> : vector<16x384xf32>
    %34 = tpu.matmul %31, %33, %cst_16 {dimension_numbers = #tpu.dot_dimension_numbers<[1], [0], [0], [1], [0, 0, 1, 1], [], []>} : vector<16x128xbf16>, vector<128x384xbf16>, vector<16x384xf32> -> vector<16x384xf32>
    %c0_17 = arith.constant 0 : index
    %c0_18 = arith.constant 0 : index
    %c0_19 = arith.constant 0 : index
    %35 = vector.load %arg6[%c0_17, %c0_18, %c0_19] : memref<1x1x384xf32, #tpu.memory_space<vmem>>, vector<1x1x384xf32>
    %36 = vector.shape_cast %35 : vector<1x1x384xf32> to vector<1x384xf32>
    %37 = vector.broadcast %36 : vector<1x384xf32> to vector<16x384xf32>
    %38 = arith.addf %34, %37 : vector<16x384xf32>
    %39 = tpu.iota {dimensions = array<i32: 0>} : vector<16x16xi32>
    %40 = tpu.iota {dimensions = array<i32: 1>} : vector<16x16xi32>
    %41 = arith.cmpi sgt, %40, %39 : vector<16x16xi32>
    %42 = vector.extract_strided_slice %38 {offsets = [0, 0], sizes = [16, 32], strides = [1, 1]} : vector<16x384xf32> to vector<16x32xf32>
    %43 = vector.extract_strided_slice %38 {offsets = [0, 128], sizes = [16, 32], strides = [1, 1]} : vector<16x384xf32> to vector<16x32xf32>
    %44 = vector.extract_strided_slice %38 {offsets = [0, 256], sizes = [16, 32], strides = [1, 1]} : vector<16x384xf32> to vector<16x32xf32>
    %45 = tpu.transpose %43, [1, 0] : vector<16x32xf32> -> vector<32x16xf32>
    %cst_20 = arith.constant dense<0.000000e+00> : vector<16x16xf32>
    %46 = tpu.matmul %42, %45, %cst_20 {dimension_numbers = #tpu.dot_dimension_numbers<[1], [0], [0], [1], [0, 0, 1, 1], [], []>} : vector<16x32xf32>, vector<32x16xf32>, vector<16x16xf32> -> vector<16x16xf32>
    %cst_21 = arith.constant 0xFF800000 : f32
    %47 = vector.broadcast %cst_21 : f32 to vector<16x16xf32>
    %48 = arith.select %41, %47, %46 : vector<16x16xi1>, vector<16x16xf32>
    %cst_22 = arith.constant dense<0xFF800000> : vector<16xf32>
    %49 = vector.multi_reduction <maximumf>, %48, %cst_22 [1] : vector<16x16xf32> to vector<16xf32>
    %50 = vector.shape_cast %49 : vector<16xf32> to vector<16x1xf32>
    %51 = vector.broadcast %50 : vector<16x1xf32> to vector<16x16xf32>
    %52 = arith.subf %48, %51 : vector<16x16xf32>
    %53 = math.exp %52 : vector<16x16xf32>
    %cst_23 = arith.constant dense<0.000000e+00> : vector<16xf32>
    %54 = vector.multi_reduction <add>, %53, %cst_23 [1] : vector<16x16xf32> to vector<16xf32>
    %55 = vector.shape_cast %54 : vector<16xf32> to vector<16x1xf32>
    %56 = tpu.reciprocal %55 : vector<16x1xf32> -> vector<16x1xf32>
    %57 = vector.broadcast %56 : vector<16x1xf32> to vector<16x16xf32>
    %58 = arith.mulf %53, %57 : vector<16x16xf32>
    %cst_24 = arith.constant dense<0.000000e+00> : vector<16x32xf32>
    %59 = tpu.matmul %58, %44, %cst_24 {dimension_numbers = #tpu.dot_dimension_numbers<[1], [0], [0], [1], [0, 0, 1, 1], [], []>} : vector<16x16xf32>, vector<16x32xf32>, vector<16x32xf32> -> vector<16x32xf32>
    %60 = vector.extract_strided_slice %38 {offsets = [0, 32], sizes = [16, 32], strides = [1, 1]} : vector<16x384xf32> to vector<16x32xf32>
    %61 = vector.extract_strided_slice %38 {offsets = [0, 160], sizes = [16, 32], strides = [1, 1]} : vector<16x384xf32> to vector<16x32xf32>
    %62 = vector.extract_strided_slice %38 {offsets = [0, 288], sizes = [16, 32], strides = [1, 1]} : vector<16x384xf32> to vector<16x32xf32>
    %63 = tpu.transpose %61, [1, 0] : vector<16x32xf32> -> vector<32x16xf32>
    %cst_25 = arith.constant dense<0.000000e+00> : vector<16x16xf32>
    %64 = tpu.matmul %60, %63, %cst_25 {dimension_numbers = #tpu.dot_dimension_numbers<[1], [0], [0], [1], [0, 0, 1, 1], [], []>} : vector<16x32xf32>, vector<32x16xf32>, vector<16x16xf32> -> vector<16x16xf32>
    %cst_26 = arith.constant 0xFF800000 : f32
    %65 = vector.broadcast %cst_26 : f32 to vector<16x16xf32>
    %66 = arith.select %41, %65, %64 : vector<16x16xi1>, vector<16x16xf32>
    %cst_27 = arith.constant dense<0xFF800000> : vector<16xf32>
    %67 = vector.multi_reduction <maximumf>, %66, %cst_27 [1] : vector<16x16xf32> to vector<16xf32>
    %68 = vector.shape_cast %67 : vector<16xf32> to vector<16x1xf32>
    %69 = vector.broadcast %68 : vector<16x1xf32> to vector<16x16xf32>
    %70 = arith.subf %66, %69 : vector<16x16xf32>
    %71 = math.exp %70 : vector<16x16xf32>
    %cst_28 = arith.constant dense<0.000000e+00> : vector<16xf32>
    %72 = vector.multi_reduction <add>, %71, %cst_28 [1] : vector<16x16xf32> to vector<16xf32>
    %73 = vector.shape_cast %72 : vector<16xf32> to vector<16x1xf32>
    %74 = tpu.reciprocal %73 : vector<16x1xf32> -> vector<16x1xf32>
    %75 = vector.broadcast %74 : vector<16x1xf32> to vector<16x16xf32>
    %76 = arith.mulf %71, %75 : vector<16x16xf32>
    %cst_29 = arith.constant dense<0.000000e+00> : vector<16x32xf32>
    %77 = tpu.matmul %76, %62, %cst_29 {dimension_numbers = #tpu.dot_dimension_numbers<[1], [0], [0], [1], [0, 0, 1, 1], [], []>} : vector<16x16xf32>, vector<16x32xf32>, vector<16x32xf32> -> vector<16x32xf32>
    %78 = vector.extract_strided_slice %38 {offsets = [0, 64], sizes = [16, 32], strides = [1, 1]} : vector<16x384xf32> to vector<16x32xf32>
    %79 = vector.extract_strided_slice %38 {offsets = [0, 192], sizes = [16, 32], strides = [1, 1]} : vector<16x384xf32> to vector<16x32xf32>
    %80 = vector.extract_strided_slice %38 {offsets = [0, 320], sizes = [16, 32], strides = [1, 1]} : vector<16x384xf32> to vector<16x32xf32>
    %81 = tpu.transpose %79, [1, 0] : vector<16x32xf32> -> vector<32x16xf32>
    %cst_30 = arith.constant dense<0.000000e+00> : vector<16x16xf32>
    %82 = tpu.matmul %78, %81, %cst_30 {dimension_numbers = #tpu.dot_dimension_numbers<[1], [0], [0], [1], [0, 0, 1, 1], [], []>} : vector<16x32xf32>, vector<32x16xf32>, vector<16x16xf32> -> vector<16x16xf32>
    %cst_31 = arith.constant 0xFF800000 : f32
    %83 = vector.broadcast %cst_31 : f32 to vector<16x16xf32>
    %84 = arith.select %41, %83, %82 : vector<16x16xi1>, vector<16x16xf32>
    %cst_32 = arith.constant dense<0xFF800000> : vector<16xf32>
    %85 = vector.multi_reduction <maximumf>, %84, %cst_32 [1] : vector<16x16xf32> to vector<16xf32>
    %86 = vector.shape_cast %85 : vector<16xf32> to vector<16x1xf32>
    %87 = vector.broadcast %86 : vector<16x1xf32> to vector<16x16xf32>
    %88 = arith.subf %84, %87 : vector<16x16xf32>
    %89 = math.exp %88 : vector<16x16xf32>
    %cst_33 = arith.constant dense<0.000000e+00> : vector<16xf32>
    %90 = vector.multi_reduction <add>, %89, %cst_33 [1] : vector<16x16xf32> to vector<16xf32>
    %91 = vector.shape_cast %90 : vector<16xf32> to vector<16x1xf32>
    %92 = tpu.reciprocal %91 : vector<16x1xf32> -> vector<16x1xf32>
    %93 = vector.broadcast %92 : vector<16x1xf32> to vector<16x16xf32>
    %94 = arith.mulf %89, %93 : vector<16x16xf32>
    %cst_34 = arith.constant dense<0.000000e+00> : vector<16x32xf32>
    %95 = tpu.matmul %94, %80, %cst_34 {dimension_numbers = #tpu.dot_dimension_numbers<[1], [0], [0], [1], [0, 0, 1, 1], [], []>} : vector<16x16xf32>, vector<16x32xf32>, vector<16x32xf32> -> vector<16x32xf32>
    %96 = vector.extract_strided_slice %38 {offsets = [0, 96], sizes = [16, 32], strides = [1, 1]} : vector<16x384xf32> to vector<16x32xf32>
    %97 = vector.extract_strided_slice %38 {offsets = [0, 224], sizes = [16, 32], strides = [1, 1]} : vector<16x384xf32> to vector<16x32xf32>
    %98 = vector.extract_strided_slice %38 {offsets = [0, 352], sizes = [16, 32], strides = [1, 1]} : vector<16x384xf32> to vector<16x32xf32>
    %99 = tpu.transpose %97, [1, 0] : vector<16x32xf32> -> vector<32x16xf32>
    %cst_35 = arith.constant dense<0.000000e+00> : vector<16x16xf32>
    %100 = tpu.matmul %96, %99, %cst_35 {dimension_numbers = #tpu.dot_dimension_numbers<[1], [0], [0], [1], [0, 0, 1, 1], [], []>} : vector<16x32xf32>, vector<32x16xf32>, vector<16x16xf32> -> vector<16x16xf32>
    %cst_36 = arith.constant 0xFF800000 : f32
    %101 = vector.broadcast %cst_36 : f32 to vector<16x16xf32>
    %102 = arith.select %41, %101, %100 : vector<16x16xi1>, vector<16x16xf32>
    %cst_37 = arith.constant dense<0xFF800000> : vector<16xf32>
    %103 = vector.multi_reduction <maximumf>, %102, %cst_37 [1] : vector<16x16xf32> to vector<16xf32>
    %104 = vector.shape_cast %103 : vector<16xf32> to vector<16x1xf32>
    %105 = vector.broadcast %104 : vector<16x1xf32> to vector<16x16xf32>
    %106 = arith.subf %102, %105 : vector<16x16xf32>
    %107 = math.exp %106 : vector<16x16xf32>
    %cst_38 = arith.constant dense<0.000000e+00> : vector<16xf32>
    %108 = vector.multi_reduction <add>, %107, %cst_38 [1] : vector<16x16xf32> to vector<16xf32>
    %109 = vector.shape_cast %108 : vector<16xf32> to vector<16x1xf32>
    %110 = tpu.reciprocal %109 : vector<16x1xf32> -> vector<16x1xf32>
    %111 = vector.broadcast %110 : vector<16x1xf32> to vector<16x16xf32>
    %112 = arith.mulf %107, %111 : vector<16x16xf32>
    %cst_39 = arith.constant dense<0.000000e+00> : vector<16x32xf32>
    %113 = tpu.matmul %112, %98, %cst_39 {dimension_numbers = #tpu.dot_dimension_numbers<[1], [0], [0], [1], [0, 0, 1, 1], [], []>} : vector<16x16xf32>, vector<16x32xf32>, vector<16x32xf32> -> vector<16x32xf32>
    %114 = tpu.concatenate %59, %77, %95, %113 in 1 : vector<16x32xf32>, vector<16x32xf32>, vector<16x32xf32>, vector<16x32xf32> -> vector<16x128xf32>
    %115 = arith.truncf %114 : vector<16x128xf32> to vector<16x128xbf16>
    %c0_40 = arith.constant 0 : index
    %c0_41 = arith.constant 0 : index
    %c0_42 = arith.constant 0 : index
    %116 = vector.load %arg7[%c0_40, %c0_41, %c0_42] : memref<1x128x128xbf16, #tpu.memory_space<vmem>>, vector<1x128x128xbf16>
    %117 = vector.shape_cast %116 : vector<1x128x128xbf16> to vector<128x128xbf16>
    %cst_43 = arith.constant dense<0.000000e+00> : vector<16x128xf32>
    %118 = tpu.matmul %115, %117, %cst_43 {dimension_numbers = #tpu.dot_dimension_numbers<[1], [0], [0], [1], [0, 0, 1, 1], [], []>} : vector<16x128xbf16>, vector<128x128xbf16>, vector<16x128xf32> -> vector<16x128xf32>
    %c0_44 = arith.constant 0 : index
    %c0_45 = arith.constant 0 : index
    %c0_46 = arith.constant 0 : index
    %119 = vector.load %arg8[%c0_44, %c0_45, %c0_46] : memref<1x1x128xf32, #tpu.memory_space<vmem>>, vector<1x1x128xf32>
    %120 = vector.shape_cast %119 : vector<1x1x128xf32> to vector<1x128xf32>
    %121 = vector.broadcast %120 : vector<1x128xf32> to vector<16x128xf32>
    %122 = arith.addf %118, %121 : vector<16x128xf32>
    %123 = arith.addf %4, %122 : vector<16x128xf32>
    %c0_47 = arith.constant 0 : index
    %c0_48 = arith.constant 0 : index
    %c0_49 = arith.constant 0 : index
    %124 = vector.load %arg9[%c0_47, %c0_48, %c0_49] : memref<1x1x128xf32, #tpu.memory_space<vmem>>, vector<1x1x128xf32>
    %125 = vector.shape_cast %124 : vector<1x1x128xf32> to vector<1x128xf32>
    %c0_50 = arith.constant 0 : index
    %c0_51 = arith.constant 0 : index
    %c0_52 = arith.constant 0 : index
    %126 = vector.load %arg10[%c0_50, %c0_51, %c0_52] : memref<1x1x128xf32, #tpu.memory_space<vmem>>, vector<1x1x128xf32>
    %127 = vector.shape_cast %126 : vector<1x1x128xf32> to vector<1x128xf32>
    %cst_53 = arith.constant dense<0.000000e+00> : vector<16xf32>
    %128 = vector.multi_reduction <add>, %123, %cst_53 [1] : vector<16x128xf32> to vector<16xf32>
    %129 = vector.shape_cast %128 : vector<16xf32> to vector<16x1xf32>
    %cst_54 = arith.constant 1.280000e+02 : f32
    %130 = vector.broadcast %cst_54 : f32 to vector<16x1xf32>
    %131 = arith.divf %129, %130 : vector<16x1xf32>
    %132 = vector.broadcast %131 : vector<16x1xf32> to vector<16x128xf32>
    %133 = arith.subf %123, %132 : vector<16x128xf32>
    %134 = arith.mulf %133, %133 : vector<16x128xf32>
    %cst_55 = arith.constant dense<0.000000e+00> : vector<16xf32>
    %135 = vector.multi_reduction <add>, %134, %cst_55 [1] : vector<16x128xf32> to vector<16xf32>
    %136 = vector.shape_cast %135 : vector<16xf32> to vector<16x1xf32>
    %cst_56 = arith.constant 1.280000e+02 : f32
    %137 = vector.broadcast %cst_56 : f32 to vector<16x1xf32>
    %138 = arith.divf %136, %137 : vector<16x1xf32>
    %139 = vector.broadcast %131 : vector<16x1xf32> to vector<16x128xf32>
    %140 = arith.subf %123, %139 : vector<16x128xf32>
    %cst_57 = arith.constant 9.99999974E-6 : f32
    %141 = vector.broadcast %cst_57 : f32 to vector<16x1xf32>
    %142 = arith.addf %138, %141 : vector<16x1xf32>
    %143 = math.rsqrt %142 : vector<16x1xf32>
    %144 = vector.broadcast %143 : vector<16x1xf32> to vector<16x128xf32>
    %145 = arith.mulf %140, %144 : vector<16x128xf32>
    %146 = vector.broadcast %125 : vector<1x128xf32> to vector<16x128xf32>
    %147 = arith.mulf %145, %146 : vector<16x128xf32>
    %148 = vector.broadcast %127 : vector<1x128xf32> to vector<16x128xf32>
    %149 = arith.addf %147, %148 : vector<16x128xf32>
    %150 = arith.truncf %149 : vector<16x128xf32> to vector<16x128xbf16>
    %c0_58 = arith.constant 0 : index
    %c0_59 = arith.constant 0 : index
    %c0_60 = arith.constant 0 : index
    %151 = vector.load %arg11[%c0_58, %c0_59, %c0_60] : memref<1x128x512xbf16, #tpu.memory_space<vmem>>, vector<1x128x512xbf16>
    %152 = vector.shape_cast %151 : vector<1x128x512xbf16> to vector<128x512xbf16>
    %cst_61 = arith.constant dense<0.000000e+00> : vector<16x512xf32>
    %153 = tpu.matmul %150, %152, %cst_61 {dimension_numbers = #tpu.dot_dimension_numbers<[1], [0], [0], [1], [0, 0, 1, 1], [], []>} : vector<16x128xbf16>, vector<128x512xbf16>, vector<16x512xf32> -> vector<16x512xf32>
    %c0_62 = arith.constant 0 : index
    %c0_63 = arith.constant 0 : index
    %c0_64 = arith.constant 0 : index
    %154 = vector.load %arg12[%c0_62, %c0_63, %c0_64] : memref<1x1x512xf32, #tpu.memory_space<vmem>>, vector<1x1x512xf32>
    %155 = vector.shape_cast %154 : vector<1x1x512xf32> to vector<1x512xf32>
    %156 = vector.broadcast %155 : vector<1x512xf32> to vector<16x512xf32>
    %157 = arith.addf %153, %156 : vector<16x512xf32>
    %cst_65 = arith.constant 1.702000e+00 : f32
    %158 = vector.broadcast %cst_65 : f32 to vector<16x512xf32>
    %159 = arith.mulf %158, %157 : vector<16x512xf32>
    %160 = arith.negf %159 : vector<16x512xf32>
    %161 = math.exp %160 : vector<16x512xf32>
    %cst_66 = arith.constant 1.000000e+00 : f32
    %162 = vector.broadcast %cst_66 : f32 to vector<16x512xf32>
    %163 = arith.addf %162, %161 : vector<16x512xf32>
    %164 = arith.divf %162, %163 : vector<16x512xf32>
    %165 = arith.mulf %157, %164 : vector<16x512xf32>
    %166 = arith.truncf %165 : vector<16x512xf32> to vector<16x512xbf16>
    %c0_67 = arith.constant 0 : index
    %c0_68 = arith.constant 0 : index
    %c0_69 = arith.constant 0 : index
    %167 = vector.load %arg13[%c0_67, %c0_68, %c0_69] : memref<1x512x128xbf16, #tpu.memory_space<vmem>>, vector<1x512x128xbf16>
    %168 = vector.shape_cast %167 : vector<1x512x128xbf16> to vector<512x128xbf16>
    %cst_70 = arith.constant dense<0.000000e+00> : vector<16x128xf32>
    %169 = tpu.matmul %166, %168, %cst_70 {dimension_numbers = #tpu.dot_dimension_numbers<[1], [0], [0], [1], [0, 0, 1, 1], [], []>} : vector<16x512xbf16>, vector<512x128xbf16>, vector<16x128xf32> -> vector<16x128xf32>
    %c0_71 = arith.constant 0 : index
    %c0_72 = arith.constant 0 : index
    %c0_73 = arith.constant 0 : index
    %170 = vector.load %arg14[%c0_71, %c0_72, %c0_73] : memref<1x1x128xf32, #tpu.memory_space<vmem>>, vector<1x1x128xf32>
    %171 = vector.shape_cast %170 : vector<1x1x128xf32> to vector<1x128xf32>
    %172 = vector.broadcast %171 : vector<1x128xf32> to vector<16x128xf32>
    %173 = arith.addf %169, %172 : vector<16x128xf32>
    %174 = arith.addf %123, %173 : vector<16x128xf32>
    %175 = vector.shape_cast %174 : vector<16x128xf32> to vector<1x16x128xf32>
    %c0_74 = arith.constant 0 : index
    %c0_75 = arith.constant 0 : index
    %c0_76 = arith.constant 0 : index
    %176 = vector.load %arg17[%c0_74, %c0_75, %c0_76] : memref<1x16x128xf32, #tpu.memory_space<vmem>>, vector<1x16x128xf32>
    tpu.vector_store %arg17[%c0_74, %c0_75, %c0_76], %175 {strides = array<i32>} : memref<1x16x128xf32, #tpu.memory_space<vmem>>, vector<1x16x128xf32>,
    %c3_i32 = arith.constant 3 : i32
    %177 = arith.cmpi eq, %arg1, %c3_i32 : i32
    %178 = arith.extui %177 : i1 to i32
    %c0_i32_77 = arith.constant 0 : i32
    %179 = arith.cmpi ne, %178, %c0_i32_77 : i32
    scf.if %179 {
      %c0_78 = arith.constant 0 : index
      %c0_79 = arith.constant 0 : index
      %180 = vector.load %arg15[%c0_78, %c0_79] : memref<1x128xf32, #tpu.memory_space<vmem>>, vector<1x128xf32>
      %c0_80 = arith.constant 0 : index
      %c0_81 = arith.constant 0 : index
      %181 = vector.load %arg16[%c0_80, %c0_81] : memref<1x128xf32, #tpu.memory_space<vmem>>, vector<1x128xf32>
      %cst_82 = arith.constant dense<0.000000e+00> : vector<16xf32>
      %182 = vector.multi_reduction <add>, %174, %cst_82 [1] : vector<16x128xf32> to vector<16xf32>
      %183 = vector.shape_cast %182 : vector<16xf32> to vector<16x1xf32>
      %cst_83 = arith.constant 1.280000e+02 : f32
      %184 = vector.broadcast %cst_83 : f32 to vector<16x1xf32>
      %185 = arith.divf %183, %184 : vector<16x1xf32>
      %186 = vector.broadcast %185 : vector<16x1xf32> to vector<16x128xf32>
      %187 = arith.subf %174, %186 : vector<16x128xf32>
      %188 = arith.mulf %187, %187 : vector<16x128xf32>
      %cst_84 = arith.constant dense<0.000000e+00> : vector<16xf32>
      %189 = vector.multi_reduction <add>, %188, %cst_84 [1] : vector<16x128xf32> to vector<16xf32>
      %190 = vector.shape_cast %189 : vector<16xf32> to vector<16x1xf32>
      %cst_85 = arith.constant 1.280000e+02 : f32
      %191 = vector.broadcast %cst_85 : f32 to vector<16x1xf32>
      %192 = arith.divf %190, %191 : vector<16x1xf32>
      %193 = vector.broadcast %185 : vector<16x1xf32> to vector<16x128xf32>
      %194 = arith.subf %174, %193 : vector<16x128xf32>
      %cst_86 = arith.constant 9.99999974E-6 : f32
      %195 = vector.broadcast %cst_86 : f32 to vector<16x1xf32>
      %196 = arith.addf %192, %195 : vector<16x1xf32>
      %197 = math.rsqrt %196 : vector<16x1xf32>
      %198 = vector.broadcast %197 : vector<16x1xf32> to vector<16x128xf32>
      %199 = arith.mulf %194, %198 : vector<16x128xf32>
      %200 = vector.broadcast %180 : vector<1x128xf32> to vector<16x128xf32>
      %201 = arith.mulf %199, %200 : vector<16x128xf32>
      %202 = vector.broadcast %181 : vector<1x128xf32> to vector<16x128xf32>
      %203 = arith.addf %201, %202 : vector<16x128xf32>
      %204 = vector.shape_cast %203 : vector<16x128xf32> to vector<1x16x128xf32>
      %c0_87 = arith.constant 0 : index
      %c0_88 = arith.constant 0 : index
      %c0_89 = arith.constant 0 : index
      %205 = vector.load %arg17[%c0_87, %c0_88, %c0_89] : memref<1x16x128xf32, #tpu.memory_space<vmem>>, vector<1x16x128xf32>
      tpu.vector_store %arg17[%c0_87, %c0_88, %c0_89], %204 {strides = array<i32>} : memref<1x16x128xf32, #tpu.memory_space<vmem>>, vector<1x16x128xf32>,
    } else {
    }
    return
  }
  func.func @transform_0(%arg0: i32, %arg1: i32) -> (i32, i32, i32) {
    %c0_i32 = arith.constant 0 : i32
    %c0_i32_0 = arith.constant 0 : i32
    %c0_i32_1 = arith.constant 0 : i32
    return %arg0, %c0_i32, %c0_i32_0 : i32, i32, i32
  }
  func.func @transform_1(%arg0: i32, %arg1: i32) -> (i32, i32, i32) {
    %c0_i32 = arith.constant 0 : i32
    %c0_i32_0 = arith.constant 0 : i32
    %c0_i32_1 = arith.constant 0 : i32
    return %arg1, %c0_i32, %c0_i32_0 : i32, i32, i32
  }
  func.func @transform_2(%arg0: i32, %arg1: i32) -> (i32, i32, i32) {
    %c0_i32 = arith.constant 0 : i32
    %c0_i32_0 = arith.constant 0 : i32
    %c0_i32_1 = arith.constant 0 : i32
    return %arg1, %c0_i32, %c0_i32_0 : i32, i32, i32
  }
  func.func @transform_3(%arg0: i32, %arg1: i32) -> (i32, i32, i32) {
    %c0_i32 = arith.constant 0 : i32
    %c0_i32_0 = arith.constant 0 : i32
    %c0_i32_1 = arith.constant 0 : i32
    return %arg1, %c0_i32, %c0_i32_0 : i32, i32, i32
  }
  func.func @transform_4(%arg0: i32, %arg1: i32) -> (i32, i32, i32) {
    %c0_i32 = arith.constant 0 : i32
    %c0_i32_0 = arith.constant 0 : i32
    %c0_i32_1 = arith.constant 0 : i32
    return %arg1, %c0_i32, %c0_i32_0 : i32, i32, i32
  }
  func.func @transform_5(%arg0: i32, %arg1: i32) -> (i32, i32, i32) {
    %c0_i32 = arith.constant 0 : i32
    %c0_i32_0 = arith.constant 0 : i32
    %c0_i32_1 = arith.constant 0 : i32
    return %arg1, %c0_i32, %c0_i32_0 : i32, i32, i32
  }
  func.func @transform_6(%arg0: i32, %arg1: i32) -> (i32, i32, i32) {
    %c0_i32 = arith.constant 0 : i32
    %c0_i32_0 = arith.constant 0 : i32
    %c0_i32_1 = arith.constant 0 : i32
    return %arg1, %c0_i32, %c0_i32_0 : i32, i32, i32
  }
  func.func @transform_7(%arg0: i32, %arg1: i32) -> (i32, i32, i32) {
    %c0_i32 = arith.constant 0 : i32
    %c0_i32_0 = arith.constant 0 : i32
    %c0_i32_1 = arith.constant 0 : i32
    return %arg1, %c0_i32, %c0_i32_0 : i32, i32, i32
  }
  func.func @transform_8(%arg0: i32, %arg1: i32) -> (i32, i32, i32) {
    %c0_i32 = arith.constant 0 : i32
    %c0_i32_0 = arith.constant 0 : i32
    %c0_i32_1 = arith.constant 0 : i32
    return %arg1, %c0_i32, %c0_i32_0 : i32, i32, i32
  }
  func.func @transform_9(%arg0: i32, %arg1: i32) -> (i32, i32, i32) {
    %c0_i32 = arith.constant 0 : i32
    %c0_i32_0 = arith.constant 0 : i32
    %c0_i32_1 = arith.constant 0 : i32
    return %arg1, %c0_i32, %c0_i32_0 : i32, i32, i32
  }
  func.func @transform_10(%arg0: i32, %arg1: i32) -> (i32, i32, i32) {
    %c0_i32 = arith.constant 0 : i32
    %c0_i32_0 = arith.constant 0 : i32
    %c0_i32_1 = arith.constant 0 : i32
    return %arg1, %c0_i32, %c0_i32_0 : i32, i32, i32
  }
  func.func @transform_11(%arg0: i32, %arg1: i32) -> (i32, i32, i32) {
    %c0_i32 = arith.constant 0 : i32
    %c0_i32_0 = arith.constant 0 : i32
    %c0_i32_1 = arith.constant 0 : i32
    return %arg1, %c0_i32, %c0_i32_0 : i32, i32, i32
  }
  func.func @transform_12(%arg0: i32, %arg1: i32) -> (i32, i32, i32) {
    %c0_i32 = arith.constant 0 : i32
    %c0_i32_0 = arith.constant 0 : i32
    %c0_i32_1 = arith.constant 0 : i32
    return %arg1, %c0_i32, %c0_i32_0 : i32, i32, i32
  }
  func.func @transform_13(%arg0: i32, %arg1: i32) -> (i32, i32) {
    %c0_i32 = arith.constant 0 : i32
    %c0_i32_0 = arith.constant 0 : i32
    %c0_i32_1 = arith.constant 0 : i32
    return %c0_i32, %c0_i32_0 : i32, i32
  }
  func.func @transform_14(%arg0: i32, %arg1: i32) -> (i32, i32) {
    %c0_i32 = arith.constant 0 : i32
    %c0_i32_0 = arith.constant 0 : i32
    %c0_i32_1 = arith.constant 0 : i32
    return %c0_i32, %c0_i32_0 : i32, i32
  }
  func.func @transform_15(%arg0: i32, %arg1: i32) -> (i32, i32, i32) {
    %c0_i32 = arith.constant 0 : i32
    %c0_i32_0 = arith.constant 0 : i32
    %c0_i32_1 = arith.constant 0 : i32
    return %arg0, %c0_i32, %c0_i32_0 : i32, i32, i32
  }
}

</mosaic_0001>

<llo_original>
// kernel: tpu_custom_call.1
$region0: #{tpu_custom_call.1}
  #allocation0 [shape = 'u32[]', space=smem, size = 0x4, offset = 0x4, fixed_abs, tag = 'smem constant byte address 0x4 - core index']
  #allocation1 [shape = 'u32[144,128]{1,0:T(1,128)}', space=vmem, size = 0x12000, scoped, tag = 'internal scratch']
  %s0 = inlined_call_operand.hbm [shape: f32[2,16,128], index: 0, kind: input, shape index: {}]
  %s1 = inlined_call_operand.hbm [shape: f32[4,1,128], index: 1, kind: input, shape index: {}]
  %s2 = inlined_call_operand.hbm [shape: f32[4,1,128], index: 2, kind: input, shape index: {}]
  %s3 = inlined_call_operand.hbm [shape: bf16[4,128,384], index: 3, kind: input, shape index: {}]
  %s4 = inlined_call_operand.hbm [shape: f32[4,1,384], index: 4, kind: input, shape index: {}]
  %s5 = inlined_call_operand.hbm [shape: bf16[4,128,128], index: 5, kind: input, shape index: {}]
  %s6 = inlined_call_operand.hbm [shape: f32[4,1,128], index: 6, kind: input, shape index: {}]
  %s7 = inlined_call_operand.hbm [shape: f32[4,1,128], index: 7, kind: input, shape index: {}]
  %s8 = inlined_call_operand.hbm [shape: f32[4,1,128], index: 8, kind: input, shape index: {}]
  %s9 = inlined_call_operand.hbm [shape: bf16[4,128,512], index: 9, kind: input, shape index: {}]
  %s10 = inlined_call_operand.hbm [shape: f32[4,1,512], index: 10, kind: input, shape index: {}]
  %s11 = inlined_call_operand.hbm [shape: bf16[4,512,128], index: 11, kind: input, shape index: {}]
  %s12 = inlined_call_operand.hbm [shape: f32[4,1,128], index: 12, kind: input, shape index: {}]
  %s13 = inlined_call_operand.hbm [shape: f32[1,128], index: 13, kind: input, shape index: {}]
  %s14 = inlined_call_operand.hbm [shape: f32[1,128], index: 14, kind: input, shape index: {}]
  %s15 = inlined_call_operand.hbm [shape: f32[2,16,128], index: 15, kind: output, shape index: {}]
  %s16 = sld [smem:[#allocation0]]
  $region161: #{tpu_custom_call.1} parent=0
    _
  %s18 = ssub.s32 1, %s16
  %s19 = scalar_select 0, %s18, %s16
  $region1: #{tpu_custom_call.1} parent=0
    #allocation2 [shape = 'u8[16384]{0}', space=vmem, size = 0x4000, scoped, tag = 'input window, operand 0']
    #allocation3 [shape = 's32[2]{0}', space=sflag, size = 0x8, scoped, tag = 'scoped memory for tpu_custom_call.1']
    #allocation4 [shape = 's32[2]{0}', space=sflag, size = 0x8, scoped, tag = 'scoped memory for tpu_custom_call.1']
    #allocation5 [shape = 'u8[1024]{0}', space=vmem, size = 0x400, scoped, tag = 'input window, operand 1']
    #allocation6 [shape = 's32[2]{0}', space=sflag, size = 0x8, scoped, tag = 'scoped memory for tpu_custom_call.1']
    #allocation7 [shape = 'u8[1024]{0}', space=vmem, size = 0x400, scoped, tag = 'input window, operand 2']
    #allocation8 [shape = 'u8[196608]{0}', space=vmem, size = 0x30000, scoped, tag = 'input window, operand 3']
    #allocation9 [shape = 's32[2]{0}', space=sflag, size = 0x8, scoped, tag = 'scoped memory for tpu_custom_call.1']
    #allocation10 [shape = 'u8[3072]{0}', space=vmem, size = 0xc00, scoped, tag = 'input window, operand 4']
    #allocation11 [shape = 'u8[65536]{0}', space=vmem, size = 0x10000, scoped, tag = 'input window, operand 5']
    #allocation12 [shape = 's32[2]{0}', space=sflag, size = 0x8, scoped, tag = 'scoped memory for tpu_custom_call.1']
    #allocation13 [shape = 'u8[1024]{0}', space=vmem, size = 0x400, scoped, tag = 'input window, operand 6']
    #allocation14 [shape = 'u8[1024]{0}', space=vmem, size = 0x400, scoped, tag = 'input window, operand 7']
    #allocation15 [shape = 's32[2]{0}', space=sflag, size = 0x8, scoped, tag = 'scoped memory for tpu_custom_call.1']
    #allocation16 [shape = 'u8[1024]{0}', space=vmem, size = 0x400, scoped, tag = 'input window, operand 8']
    #allocation17 [shape = 'u8[262144]{0}', space=vmem, size = 0x40000, scoped, tag = 'input window, operand 9']
    #allocation18 [shape = 's32[2]{0}', space=sflag, size = 0x8, scoped, tag = 'scoped memory for tpu_custom_call.1']
    #allocation19 [shape = 'u8[4096]{0}', space=vmem, size = 0x1000, scoped, tag = 'input window, operand 10']
    #allocation20 [shape = 'u8[262144]{0}', space=vmem, size = 0x40000, scoped, tag = 'input window, operand 11']
    #allocation21 [shape = 's32[2]{0}', space=sflag, size = 0x8, scoped, tag = 'scoped memory for tpu_custom_call.1']
    #allocation22 [shape = 'u8[1024]{0}', space=vmem, size = 0x400, scoped, tag = 'input window, operand 12']
    #allocation23 [shape = 'u8[512]{0}', space=vmem, size = 0x400, scoped, tag = 'input window, operand 13, single buffered']
    #allocation24 [shape = 's32[1]{0}', space=sflag, size = 0x4, scoped, tag = 'scoped memory for tpu_custom_call.1']
    #allocation25 [shape = 'u8[512]{0}', space=vmem, size = 0x400, scoped, tag = 'input window, operand 14, single buffered']
    #allocation26 [shape = 'u8[16384]{0}', space=vmem, size = 0x4000, scoped, tag = 'output window, operand 0']
    %20 = vsyncpa [#allocation3], 0
    %s21 = scalar_lea.sflag [#allocation3], 1
    %22 = vsyncpa %s21, 0
    %23 = vsyncpa [#allocation6], 0
    %s24 = scalar_lea.sflag [#allocation6], 1
    %25 = vsyncpa %s24, 0
    %26 = vsyncpa [#allocation9], 0
    %s27 = scalar_lea.sflag [#allocation9], 1
    %28 = vsyncpa %s27, 0
    %29 = vsyncpa [#allocation12], 0
    %s30 = scalar_lea.sflag [#allocation12], 1
    %31 = vsyncpa %s30, 0
    %32 = vsyncpa [#allocation15], 0
    %s33 = scalar_lea.sflag [#allocation15], 1
    %34 = vsyncpa %s33, 0
    %35 = vsyncpa [#allocation18], 0
    %s36 = scalar_lea.sflag [#allocation18], 1
    %37 = vsyncpa %s36, 0
    %38 = vsyncpa [#allocation21], 0
    %s39 = scalar_lea.sflag [#allocation21], 1
    %40 = vsyncpa %s39, 0
    %41 = vsyncpa [#allocation24], 0
    %42 = vsyncpa [#allocation4], 0
    %s43 = scalar_lea.sflag [#allocation4], 1
    %44 = vsyncpa %s43, 0
    loop: start=0, step=1, limit=10
    $region2: #{tpu_custom_call.1} parent=1 // loop_pre_header
      _
    $region3: #{tpu_custom_call.1} parent=1 // loop_header
      %s46 = sphi 0, %s50
      %p47 = scmp.ge.s32.totalorder %s46, 10
      %s53 = sphi 0, %s65
      %s54 = sphi 0, %s61
      %s55 = sphi 0, %s53
      %s56 = sphi 0, %s54
      %s57 = sphi 0, %s55
      %s58 = sphi 0, %s56
      %s68 = sphi 0, %s70
      %s71 = sphi 0, %s68
      %s72 = sphi 0, %s71
      %s88 = sphi 0, %s72
      %s94 = sphi 0, %s96
      %s97 = sphi 0, %s94
      %s98 = sphi 0, %s97
      %s114 = sphi 0, %s98
      %s120 = sphi 0, %s122
      %s123 = sphi 0, %s120
      %s124 = sphi 0, %s123
      %s140 = sphi 0, %s124
      %s146 = sphi 0, %s148
      %s149 = sphi 0, %s146
      %s150 = sphi 0, %s149
      %s166 = sphi 0, %s150
      %s172 = sphi 0, %s174
      %s175 = sphi 0, %s172
      %s176 = sphi 0, %s175
      %s192 = sphi 0, %s176
      %s198 = sphi 0, %s200
      %s201 = sphi 0, %s198
      %s202 = sphi 0, %s201
      %s218 = sphi 0, %s202
      %s224 = sphi 0, %s226
      %s227 = sphi 0, %s224
      %s228 = sphi 0, %s227
      %s244 = sphi 0, %s228
      %s250 = sphi 0, %s252
      %s253 = sphi 0, %s250
      %s254 = sphi 0, %s253
      %s270 = sphi 0, %s254
      %s276 = sphi 0, %s278
      %s279 = sphi 0, %s276
      %s280 = sphi 0, %s279
      %s296 = sphi 0, %s280
      %s302 = sphi 0, %s304
      %s305 = sphi 0, %s302
      %s306 = sphi 0, %s305
      %s322 = sphi 0, %s306
      %s328 = sphi 0, %s330
      %s331 = sphi 0, %s328
      %s332 = sphi 0, %s331
      %s348 = sphi 0, %s332
      %s354 = sphi 0, %s356
      %s357 = sphi 0, %s354
      %s358 = sphi 0, %s357
      %s374 = sphi 0, %s358
      %s380 = sphi 0, %s382
      %s383 = sphi 0, %s380
      %s384 = sphi 0, %s383
      %s400 = sphi 0, %s384
      %s404 = sphi 0, %s404
      %s406 = sphi 0, %s404
      %s407 = sphi 0, %s406
      %s421 = sphi 0, %s407
      %s425 = sphi 0, %s425
      %s427 = sphi 0, %s425
      %s428 = sphi 0, %s427
      %s442 = sphi 0, %s428
      %s448 = sphi 0, %s450
      %s451 = sphi 0, %s448
      %s452 = sphi 0, %s451
      %s468 = sphi 0, %s452
    $region4: #{tpu_custom_call.1} parent=1 // loop_header_branch
      %49 = sbr.rel (%p47) target = $region8
    $region5: #{tpu_custom_call.1} parent=1 // loop_body
      %s51 = ssub.s32 %s46, 1
      %s52 = ssub.s32 %s46, 2
      %s59 = sadd.s32 1, %s54
      %p60 = scmp.ge.s32.totalorder %s59, 4
      %s61 = scalar_select %p60, 0, %s59
      %s62 = sadd.s32 1, %s53
      %s63 = scalar_select %p60, %s62, %s53
      %p64 = scmp.ge.s32.totalorder %s63, 2
      %s65 = scalar_select %p64, 0, %s63
      %s66 = ssub.s32 %s53, %s65
      %p67 = scmp.eq.s32.totalorder %s66, 0
      %s69 = sadd.s32 %s68, 1
      %s70 = scalar_select %p67, %s68, %s69
      %p73 = pneg %p67
      %p74 = scmp.eq.s32.totalorder %s46, 7
      %p75 = por %p73, %p74
      %p76 = scmp.ne.s32.totalorder %s68, %s71
      %p77 = scmp.eq.s32.totalorder %s46, 0
      %p78 = por %p76, %p77
      %p79 = scmp.ne.s32.totalorder %s68, %s71
      %p80 = scmp.eq.s32.totalorder %s51, 7
      %p81 = por %p79, %p80
      %p82 = scmp.ne.s32.totalorder %s71, %s72
      %p83 = scmp.eq.s32.totalorder %s51, 0
      %p84 = por %p82, %p83
      %p85 = scmp.ne.s32.totalorder %s71, %s72
      %p86 = scmp.eq.s32.totalorder %s52, 7
      %p87 = por %p85, %p86
      %p89 = scmp.ne.s32.totalorder %s72, %s88
      %p90 = scmp.eq.s32.totalorder %s52, 0
      %p91 = por %p89, %p90
      %s92 = ssub.s32 %s54, %s61
      %p93 = scmp.eq.s32.totalorder %s92, 0
      %s95 = sadd.s32 %s94, 1
      %s96 = scalar_select %p93, %s94, %s95
      %p99 = pneg %p93
      %p100 = scmp.eq.s32.totalorder %s46, 7
      %p101 = por %p99, %p100
      %p102 = scmp.ne.s32.totalorder %s94, %s97
      %p103 = scmp.eq.s32.totalorder %s46, 0
      %p104 = por %p102, %p103
      %p105 = scmp.ne.s32.totalorder %s94, %s97
      %p106 = scmp.eq.s32.totalorder %s51, 7
      %p107 = por %p105, %p106
      %p108 = scmp.ne.s32.totalorder %s97, %s98
      %p109 = scmp.eq.s32.totalorder %s51, 0
      %p110 = por %p108, %p109
      %p111 = scmp.ne.s32.totalorder %s97, %s98
      %p112 = scmp.eq.s32.totalorder %s52, 7
      %p113 = por %p111, %p112
      %p115 = scmp.ne.s32.totalorder %s98, %s114
      %p116 = scmp.eq.s32.totalorder %s52, 0
      %p117 = por %p115, %p116
      %s118 = ssub.s32 %s54, %s61
      %p119 = scmp.eq.s32.totalorder %s118, 0
      %s121 = sadd.s32 %s120, 1
      %s122 = scalar_select %p119, %s120, %s121
      %p125 = pneg %p119
      %p126 = scmp.eq.s32.totalorder %s46, 7
      %p127 = por %p125, %p126
      %p128 = scmp.ne.s32.totalorder %s120, %s123
      %p129 = scmp.eq.s32.totalorder %s46, 0
      %p130 = por %p128, %p129
      %p131 = scmp.ne.s32.totalorder %s120, %s123
      %p132 = scmp.eq.s32.totalorder %s51, 7
      %p133 = por %p131, %p132
      %p134 = scmp.ne.s32.totalorder %s123, %s124
      %p135 = scmp.eq.s32.totalorder %s51, 0
      %p136 = por %p134, %p135
      %p137 = scmp.ne.s32.totalorder %s123, %s124
      %p138 = scmp.eq.s32.totalorder %s52, 7
      %p139 = por %p137, %p138
      %p141 = scmp.ne.s32.totalorder %s124, %s140
      %p142 = scmp.eq.s32.totalorder %s52, 0
      %p143 = por %p141, %p142
      %s144 = ssub.s32 %s54, %s61
      %p145 = scmp.eq.s32.totalorder %s144, 0
      %s147 = sadd.s32 %s146, 1
      %s148 = scalar_select %p145, %s146, %s147
      %p151 = pneg %p145
      %p152 = scmp.eq.s32.totalorder %s46, 7
      %p153 = por %p151, %p152
      %p154 = scmp.ne.s32.totalorder %s146, %s149
      %p155 = scmp.eq.s32.totalorder %s46, 0
      %p156 = por %p154, %p155
      %p157 = scmp.ne.s32.totalorder %s146, %s149
      %p158 = scmp.eq.s32.totalorder %s51, 7
      %p159 = por %p157, %p158
      %p160 = scmp.ne.s32.totalorder %s149, %s150
      %p161 = scmp.eq.s32.totalorder %s51, 0
      %p162 = por %p160, %p161
      %p163 = scmp.ne.s32.totalorder %s149, %s150
      %p164 = scmp.eq.s32.totalorder %s52, 7
      %p165 = por %p163, %p164
      %p167 = scmp.ne.s32.totalorder %s150, %s166
      %p168 = scmp.eq.s32.totalorder %s52, 0
      %p169 = por %p167, %p168
      %s170 = ssub.s32 %s54, %s61
      %p171 = scmp.eq.s32.totalorder %s170, 0
      %s173 = sadd.s32 %s172, 1
      %s174 = scalar_select %p171, %s172, %s173
      %p177 = pneg %p171
      %p178 = scmp.eq.s32.totalorder %s46, 7
      %p179 = por %p177, %p178
      %p180 = scmp.ne.s32.totalorder %s172, %s175
      %p181 = scmp.eq.s32.totalorder %s46, 0
      %p182 = por %p180, %p181
      %p183 = scmp.ne.s32.totalorder %s172, %s175
      %p184 = scmp.eq.s32.totalorder %s51, 7
      %p185 = por %p183, %p184
      %p186 = scmp.ne.s32.totalorder %s175, %s176
      %p187 = scmp.eq.s32.totalorder %s51, 0
      %p188 = por %p186, %p187
      %p189 = scmp.ne.s32.totalorder %s175, %s176
      %p190 = scmp.eq.s32.totalorder %s52, 7
      %p191 = por %p189, %p190
      %p193 = scmp.ne.s32.totalorder %s176, %s192
      %p194 = scmp.eq.s32.totalorder %s52, 0
      %p195 = por %p193, %p194
      %s196 = ssub.s32 %s54, %s61
      %p197 = scmp.eq.s32.totalorder %s196, 0
      %s199 = sadd.s32 %s198, 1
      %s200 = scalar_select %p197, %s198, %s199
      %p203 = pneg %p197
      %p204 = scmp.eq.s32.totalorder %s46, 7
      %p205 = por %p203, %p204
      %p206 = scmp.ne.s32.totalorder %s198, %s201
      %p207 = scmp.eq.s32.totalorder %s46, 0
      %p208 = por %p206, %p207
      %p209 = scmp.ne.s32.totalorder %s198, %s201
      %p210 = scmp.eq.s32.totalorder %s51, 7
      %p211 = por %p209, %p210
      %p212 = scmp.ne.s32.totalorder %s201, %s202
      %p213 = scmp.eq.s32.totalorder %s51, 0
      %p214 = por %p212, %p213
      %p215 = scmp.ne.s32.totalorder %s201, %s202
      %p216 = scmp.eq.s32.totalorder %s52, 7
      %p217 = por %p215, %p216
      %p219 = scmp.ne.s32.totalorder %s202, %s218
      %p220 = scmp.eq.s32.totalorder %s52, 0
      %p221 = por %p219, %p220
      %s222 = ssub.s32 %s54, %s61
      %p223 = scmp.eq.s32.totalorder %s222, 0
      %s225 = sadd.s32 %s224, 1
      %s226 = scalar_select %p223, %s224, %s225
      %p229 = pneg %p223
      %p230 = scmp.eq.s32.totalorder %s46, 7
      %p231 = por %p229, %p230
      %p232 = scmp.ne.s32.totalorder %s224, %s227
      %p233 = scmp.eq.s32.totalorder %s46, 0
      %p234 = por %p232, %p233
      %p235 = scmp.ne.s32.totalorder %s224, %s227
      %p236 = scmp.eq.s32.totalorder %s51, 7
      %p237 = por %p235, %p236
      %p238 = scmp.ne.s32.totalorder %s227, %s228
      %p239 = scmp.eq.s32.totalorder %s51, 0
      %p240 = por %p238, %p239
      %p241 = scmp.ne.s32.totalorder %s227, %s228
      %p242 = scmp.eq.s32.totalorder %s52, 7
      %p243 = por %p241, %p242
      %p245 = scmp.ne.s32.totalorder %s228, %s244
      %p246 = scmp.eq.s32.totalorder %s52, 0
      %p247 = por %p245, %p246
      %s248 = ssub.s32 %s54, %s61
      %p249 = scmp.eq.s32.totalorder %s248, 0
      %s251 = sadd.s32 %s250, 1
      %s252 = scalar_select %p249, %s250, %s251
      %p255 = pneg %p249
      %p256 = scmp.eq.s32.totalorder %s46, 7
      %p257 = por %p255, %p256
      %p258 = scmp.ne.s32.totalorder %s250, %s253
      %p259 = scmp.eq.s32.totalorder %s46, 0
      %p260 = por %p258, %p259
      %p261 = scmp.ne.s32.totalorder %s250, %s253
      %p262 = scmp.eq.s32.totalorder %s51, 7
      %p263 = por %p261, %p262
      %p264 = scmp.ne.s32.totalorder %s253, %s254
      %p265 = scmp.eq.s32.totalorder %s51, 0
      %p266 = por %p264, %p265
      %p267 = scmp.ne.s32.totalorder %s253, %s254
      %p268 = scmp.eq.s32.totalorder %s52, 7
      %p269 = por %p267, %p268
      %p271 = scmp.ne.s32.totalorder %s254, %s270
      %p272 = scmp.eq.s32.totalorder %s52, 0
      %p273 = por %p271, %p272
      %s274 = ssub.s32 %s54, %s61
      %p275 = scmp.eq.s32.totalorder %s274, 0
      %s277 = sadd.s32 %s276, 1
      %s278 = scalar_select %p275, %s276, %s277
      %p281 = pneg %p275
      %p282 = scmp.eq.s32.totalorder %s46, 7
      %p283 = por %p281, %p282
      %p284 = scmp.ne.s32.totalorder %s276, %s279
      %p285 = scmp.eq.s32.totalorder %s46, 0
      %p286 = por %p284, %p285
      %p287 = scmp.ne.s32.totalorder %s276, %s279
      %p288 = scmp.eq.s32.totalorder %s51, 7
      %p289 = por %p287, %p288
      %p290 = scmp.ne.s32.totalorder %s279, %s280
      %p291 = scmp.eq.s32.totalorder %s51, 0
      %p292 = por %p290, %p291
      %p293 = scmp.ne.s32.totalorder %s279, %s280
      %p294 = scmp.eq.s32.totalorder %s52, 7
      %p295 = por %p293, %p294
      %p297 = scmp.ne.s32.totalorder %s280, %s296
      %p298 = scmp.eq.s32.totalorder %s52, 0
      %p299 = por %p297, %p298
      %s300 = ssub.s32 %s54, %s61
      %p301 = scmp.eq.s32.totalorder %s300, 0
      %s303 = sadd.s32 %s302, 1
      %s304 = scalar_select %p301, %s302, %s303
      %p307 = pneg %p301
      %p308 = scmp.eq.s32.totalorder %s46, 7
      %p309 = por %p307, %p308
      %p310 = scmp.ne.s32.totalorder %s302, %s305
      %p311 = scmp.eq.s32.totalorder %s46, 0
      %p312 = por %p310, %p311
      %p313 = scmp.ne.s32.totalorder %s302, %s305
      %p314 = scmp.eq.s32.totalorder %s51, 7
      %p315 = por %p313, %p314
      %p316 = scmp.ne.s32.totalorder %s305, %s306
      %p317 = scmp.eq.s32.totalorder %s51, 0
      %p318 = por %p316, %p317
      %p319 = scmp.ne.s32.totalorder %s305, %s306
      %p320 = scmp.eq.s32.totalorder %s52, 7
      %p321 = por %p319, %p320
      %p323 = scmp.ne.s32.totalorder %s306, %s322
      %p324 = scmp.eq.s32.totalorder %s52, 0
      %p325 = por %p323, %p324
      %s326 = ssub.s32 %s54, %s61
      %p327 = scmp.eq.s32.totalorder %s326, 0
      %s329 = sadd.s32 %s328, 1
      %s330 = scalar_select %p327, %s328, %s329
      %p333 = pneg %p327
      %p334 = scmp.eq.s32.totalorder %s46, 7
      %p335 = por %p333, %p334
      %p336 = scmp.ne.s32.totalorder %s328, %s331
      %p337 = scmp.eq.s32.totalorder %s46, 0
      %p338 = por %p336, %p337
      %p339 = scmp.ne.s32.totalorder %s328, %s331
      %p340 = scmp.eq.s32.totalorder %s51, 7
      %p341 = por %p339, %p340
      %p342 = scmp.ne.s32.totalorder %s331, %s332
      %p343 = scmp.eq.s32.totalorder %s51, 0
      %p344 = por %p342, %p343
      %p345 = scmp.ne.s32.totalorder %s331, %s332
      %p346 = scmp.eq.s32.totalorder %s52, 7
      %p347 = por %p345, %p346
      %p349 = scmp.ne.s32.totalorder %s332, %s348
      %p350 = scmp.eq.s32.totalorder %s52, 0
      %p351 = por %p349, %p350
      %s352 = ssub.s32 %s54, %s61
      %p353 = scmp.eq.s32.totalorder %s352, 0
      %s355 = sadd.s32 %s354, 1
      %s356 = scalar_select %p353, %s354, %s355
      %p359 = pneg %p353
      %p360 = scmp.eq.s32.totalorder %s46, 7
      %p361 = por %p359, %p360
      %p362 = scmp.ne.s32.totalorder %s354, %s357
      %p363 = scmp.eq.s32.totalorder %s46, 0
      %p364 = por %p362, %p363
      %p365 = scmp.ne.s32.totalorder %s354, %s357
      %p366 = scmp.eq.s32.totalorder %s51, 7
      %p367 = por %p365, %p366
      %p368 = scmp.ne.s32.totalorder %s357, %s358
      %p369 = scmp.eq.s32.totalorder %s51, 0
      %p370 = por %p368, %p369
      %p371 = scmp.ne.s32.totalorder %s357, %s358
      %p372 = scmp.eq.s32.totalorder %s52, 7
      %p373 = por %p371, %p372
      %p375 = scmp.ne.s32.totalorder %s358, %s374
      %p376 = scmp.eq.s32.totalorder %s52, 0
      %p377 = por %p375, %p376
      %s378 = ssub.s32 %s54, %s61
      %p379 = scmp.eq.s32.totalorder %s378, 0
      %s381 = sadd.s32 %s380, 1
      %s382 = scalar_select %p379, %s380, %s381
      %p385 = pneg %p379
      %p386 = scmp.eq.s32.totalorder %s46, 7
      %p387 = por %p385, %p386
      %p388 = scmp.ne.s32.totalorder %s380, %s383
      %p389 = scmp.eq.s32.totalorder %s46, 0
      %p390 = por %p388, %p389
      %p391 = scmp.ne.s32.totalorder %s380, %s383
      %p392 = scmp.eq.s32.totalorder %s51, 7
      %p393 = por %p391, %p392
      %p394 = scmp.ne.s32.totalorder %s383, %s384
      %p395 = scmp.eq.s32.totalorder %s51, 0
      %p396 = por %p394, %p395
      %p397 = scmp.ne.s32.totalorder %s383, %s384
      %p398 = scmp.eq.s32.totalorder %s52, 7
      %p399 = por %p397, %p398
      %p401 = scmp.ne.s32.totalorder %s384, %s400
      %p402 = scmp.eq.s32.totalorder %s52, 0
      %p403 = por %p401, %p402
      %s405 = sadd.s32 %s404, 1
      %p408 = scmp.eq.s32.totalorder %s46, 7
      %p409 = scmp.ne.s32.totalorder %s404, %s406
      %p410 = scmp.eq.s32.totalorder %s46, 0
      %p411 = por %p409, %p410
      %p412 = scmp.ne.s32.totalorder %s404, %s406
      %p413 = scmp.eq.s32.totalorder %s51, 7
      %p414 = por %p412, %p413
      %p415 = scmp.ne.s32.totalorder %s406, %s407
      %p416 = scmp.eq.s32.totalorder %s51, 0
      %p417 = por %p415, %p416
      %p418 = scmp.ne.s32.totalorder %s406, %s407
      %p419 = scmp.eq.s32.totalorder %s52, 7
      %p420 = por %p418, %p419
      %p422 = scmp.ne.s32.totalorder %s407, %s421
      %p423 = scmp.eq.s32.totalorder %s52, 0
      %p424 = por %p422, %p423
      %s426 = sadd.s32 %s425, 1
      %p429 = scmp.eq.s32.totalorder %s46, 7
      %p430 = scmp.ne.s32.totalorder %s425, %s427
      %p431 = scmp.eq.s32.totalorder %s46, 0
      %p432 = por %p430, %p431
      %p433 = scmp.ne.s32.totalorder %s425, %s427
      %p434 = scmp.eq.s32.totalorder %s51, 7
      %p435 = por %p433, %p434
      %p436 = scmp.ne.s32.totalorder %s427, %s428
      %p437 = scmp.eq.s32.totalorder %s51, 0
      %p438 = por %p436, %p437
      %p439 = scmp.ne.s32.totalorder %s427, %s428
      %p440 = scmp.eq.s32.totalorder %s52, 7
      %p441 = por %p439, %p440
      %p443 = scmp.ne.s32.totalorder %s428, %s442
      %p444 = scmp.eq.s32.totalorder %s52, 0
      %p445 = por %p443, %p444
      %s446 = ssub.s32 %s53, %s65
      %p447 = scmp.eq.s32.totalorder %s446, 0
      %s449 = sadd.s32 %s448, 1
      %s450 = scalar_select %p447, %s448, %s449
      %p453 = pneg %p447
      %p454 = scmp.eq.s32.totalorder %s46, 7
      %p455 = por %p453, %p454
      %p456 = scmp.ne.s32.totalorder %s448, %s451
      %p457 = scmp.eq.s32.totalorder %s46, 0
      %p458 = por %p456, %p457
      %p459 = scmp.ne.s32.totalorder %s448, %s451
      %p460 = scmp.eq.s32.totalorder %s51, 7
      %p461 = por %p459, %p460
      %p462 = scmp.ne.s32.totalorder %s451, %s452
      %p463 = scmp.eq.s32.totalorder %s51, 0
      %p464 = por %p462, %p463
      %p465 = scmp.ne.s32.totalorder %s451, %s452
      %p466 = scmp.eq.s32.totalorder %s52, 7
      %p467 = por %p465, %p466
      %p469 = scmp.ne.s32.totalorder %s452, %s468
      %p470 = scmp.eq.s32.totalorder %s52, 0
      %p471 = por %p469, %p470
      %p472 = scmp.le.s32.totalorder 1, %s46
      %p473 = scmp.lt.s32.totalorder %s46, 9
      %p474 = pnand %p472, %p473
      %p475 = pneg %p474
      // Predicated region
      $region9: #{tpu_custom_call.1} parent=5 // pred_check
        _
      $region10: #{tpu_custom_call.1} parent=5 // pred_check_branch
        %477 = sbr.rel (%p474) target = $region12
      $region11: #{tpu_custom_call.1} parent=5 // pred_region
        %s478 = ssub.s32 %s46, 1
        // Predicated region
        $region13: #{tpu_custom_call.1} parent=11 // pred_check
          %p479 = pneg %p417
        $region14: #{tpu_custom_call.1} parent=11 // pred_check_branch
          %481 = sbr.rel (%p479) target = $region16
        $region15: #{tpu_custom_call.1} parent=11 // pred_region
          %s483 = ssub.s32 16, 16
          %484 = vsyncadd [#allocation24], %s483
          %s486 = sshll.u32 [#allocation23], 4
          %s487 = int_to_ptr.vmem [resolvable:$true] %s486
          %489 = dma.hbm_to_vmem [thread:$0]  %s13, 16, %s487, [#allocation24]
        $region16: #{tpu_custom_call.1} parent=11 // pred_fallthru
          _
        // Predicated region
        $region17: #{tpu_custom_call.1} parent=11 // pred_check
          %p490 = pneg %p438
        $region18: #{tpu_custom_call.1} parent=11 // pred_check_branch
          %492 = sbr.rel (%p490) target = $region20
        $region19: #{tpu_custom_call.1} parent=11 // pred_region
          %s494 = ssub.s32 16, 16
          %495 = vsyncadd [#allocation24], %s494
          %s497 = sshll.u32 [#allocation25], 4
          %s498 = int_to_ptr.vmem [resolvable:$true] %s497
          %500 = dma.hbm_to_vmem [thread:$0]  %s14, 16, %s498, [#allocation24]
        $region20: #{tpu_custom_call.1} parent=11 // pred_fallthru
          _
      $region12: #{tpu_custom_call.1} parent=5 // pred_fallthru
        _
      %p501 = scmp.lt.s32.totalorder %s46, 8
      // Predicated region
      $region21: #{tpu_custom_call.1} parent=5 // pred_check
        %p502 = pneg %p501
      $region22: #{tpu_custom_call.1} parent=5 // pred_check_branch
        %504 = sbr.rel (%p502) target = $region24
      $region23: #{tpu_custom_call.1} parent=5 // pred_region
        // Predicated region
        $region25: #{tpu_custom_call.1} parent=23 // pred_check
          %p505 = pneg %p78
        $region26: #{tpu_custom_call.1} parent=23 // pred_check_branch
          %507 = sbr.rel (%p505) target = $region28
        $region27: #{tpu_custom_call.1} parent=23 // pred_region
          %s508 = sand.u32 %s68, 1
          %s509 = scalar_lea.sflag [#allocation3], %s508
          %s510 = sand.u32 %s68, 1
          %s511 = smul.addr %s510, 16
          %s512 = scalar_lea.vmem [#allocation2], %s511
          %s514 = ssub.s32 256, 256
          %515 = vsyncadd %s509, %s514
          %s516 = smul.addr %s53, 2
          %s517 = smul.addr %s516, 128
          %s518 = scalar_lea.hbm %s0, %s517
          %s519 = sshll.u32 %s512, 4
          %s520 = int_to_ptr.vmem [resolvable:$true] %s519
          %525 = dma.hbm_to_vmem [thread:$0]  %s518, 256, %s520, %s509, 128, 128, 8
        $region28: #{tpu_custom_call.1} parent=23 // pred_fallthru
          _
        // Predicated region
        $region29: #{tpu_custom_call.1} parent=23 // pred_check
          %p526 = pneg %p104
        $region30: #{tpu_custom_call.1} parent=23 // pred_check_branch
          %528 = sbr.rel (%p526) target = $region32
        $region31: #{tpu_custom_call.1} parent=23 // pred_region
          %s529 = sand.u32 %s46, 1
          %s530 = scalar_lea.sflag [#allocation6], %s529
          %s531 = sand.u32 %s94, 1
          %s532 = scalar_lea.vmem [#allocation5], %s531
          %s534 = ssub.s32 16, 16
          %535 = vsyncadd %s530, %s534
          %s536 = smul.addr %s54, 16
          %s537 = scalar_lea.hbm %s1, %s536
          %s539 = sshll.u32 %s532, 4
          %s540 = int_to_ptr.vmem [resolvable:$true] %s539
          %542 = dma.hbm_to_vmem [thread:$0]  %s537, 16, %s540, %s530
        $region32: #{tpu_custom_call.1} parent=23 // pred_fallthru
          _
        // Predicated region
        $region33: #{tpu_custom_call.1} parent=23 // pred_check
          %p543 = pneg %p130
        $region34: #{tpu_custom_call.1} parent=23 // pred_check_branch
          %545 = sbr.rel (%p543) target = $region36
        $region35: #{tpu_custom_call.1} parent=23 // pred_region
          %s546 = sand.u32 %s46, 1
          %s547 = scalar_lea.sflag [#allocation6], %s546
          %s548 = sand.u32 %s120, 1
          %s549 = scalar_lea.vmem [#allocation7], %s548
          %s551 = ssub.s32 16, 16
          %552 = vsyncadd %s547, %s551
          %s553 = smul.addr %s54, 16
          %s554 = scalar_lea.hbm %s2, %s553
          %s556 = sshll.u32 %s549, 4
          %s557 = int_to_ptr.vmem [resolvable:$true] %s556
          %559 = dma.hbm_to_vmem [thread:$0]  %s554, 16, %s557, %s547
        $region36: #{tpu_custom_call.1} parent=23 // pred_fallthru
          _
        // Predicated region
        $region37: #{tpu_custom_call.1} parent=23 // pred_check
          %p560 = pneg %p156
        $region38: #{tpu_custom_call.1} parent=23 // pred_check_branch
          %562 = sbr.rel (%p560) target = $region40
        $region39: #{tpu_custom_call.1} parent=23 // pred_region
          %s563 = sand.u32 %s46, 1
          %s564 = scalar_lea.sflag [#allocation9], %s563
          %s565 = sand.u32 %s146, 1
          %s566 = smul.addr %s565, 192
          %s567 = scalar_lea.vmem [#allocation8], %s566
          %s569 = ssub.s32 3072, 3072
          %570 = vsyncadd %s564, %s569
          %s571 = smul.addr %s54, 48
          %s572 = smul.addr %s571, 64
          %s573 = scalar_lea.hbm %s3, %s572
          %s574 = sshll.u32 %s567, 4
          %s575 = int_to_ptr.vmem [resolvable:$true] %s574
          %580 = dma.hbm_to_vmem [thread:$0]  %s573, 3072, %s575, %s564, 192, 192, 12
        $region40: #{tpu_custom_call.1} parent=23 // pred_fallthru
          _
        // Predicated region
        $region41: #{tpu_custom_call.1} parent=23 // pred_check
          %p581 = pneg %p182
        $region42: #{tpu_custom_call.1} parent=23 // pred_check_branch
          %583 = sbr.rel (%p581) target = $region44
        $region43: #{tpu_custom_call.1} parent=23 // pred_region
          %s584 = sand.u32 %s46, 1
          %s585 = scalar_lea.sflag [#allocation9], %s584
          %s586 = sand.u32 %s172, 1
          %s587 = smul.addr %s586, 3
          %s588 = scalar_lea.vmem [#allocation10], %s587
          %s590 = ssub.s32 48, 48
          %591 = vsyncadd %s585, %s590
          %s592 = smul.addr %s54, 3
          %s593 = smul.addr %s592, 16
          %s594 = scalar_lea.hbm %s4, %s593
          %s596 = sshll.u32 %s588, 4
          %s597 = int_to_ptr.vmem [resolvable:$true] %s596
          %599 = dma.hbm_to_vmem [thread:$0]  %s594, 48, %s597, %s585
        $region44: #{tpu_custom_call.1} parent=23 // pred_fallthru
          _
        // Predicated region
        $region45: #{tpu_custom_call.1} parent=23 // pred_check
          %p600 = pneg %p208
        $region46: #{tpu_custom_call.1} parent=23 // pred_check_branch
          %602 = sbr.rel (%p600) target = $region48
        $region47: #{tpu_custom_call.1} parent=23 // pred_region
          %s603 = sand.u32 %s46, 1
          %s604 = scalar_lea.sflag [#allocation12], %s603
          %s605 = sand.u32 %s198, 1
          %s606 = smul.addr %s605, 64
          %s607 = scalar_lea.vmem [#allocation11], %s606
          %s609 = ssub.s32 1024, 1024
          %610 = vsyncadd %s604, %s609
          %s611 = smul.addr %s54, 16
          %s612 = smul.addr %s611, 64
          %s613 = scalar_lea.hbm %s5, %s612
          %s614 = sshll.u32 %s607, 4
          %s615 = int_to_ptr.vmem [resolvable:$true] %s614
          %620 = dma.hbm_to_vmem [thread:$0]  %s613, 1024, %s615, %s604, 64, 64, 4
        $region48: #{tpu_custom_call.1} parent=23 // pred_fallthru
          _
        // Predicated region
        $region49: #{tpu_custom_call.1} parent=23 // pred_check
          %p621 = pneg %p234
        $region50: #{tpu_custom_call.1} parent=23 // pred_check_branch
          %623 = sbr.rel (%p621) target = $region52
        $region51: #{tpu_custom_call.1} parent=23 // pred_region
          %s624 = sand.u32 %s46, 1
          %s625 = scalar_lea.sflag [#allocation12], %s624
          %s626 = sand.u32 %s224, 1
          %s627 = scalar_lea.vmem [#allocation13], %s626
          %s629 = ssub.s32 16, 16
          %630 = vsyncadd %s625, %s629
          %s631 = smul.addr %s54, 16
          %s632 = scalar_lea.hbm %s6, %s631
          %s634 = sshll.u32 %s627, 4
          %s635 = int_to_ptr.vmem [resolvable:$true] %s634
          %637 = dma.hbm_to_vmem [thread:$0]  %s632, 16, %s635, %s625
        $region52: #{tpu_custom_call.1} parent=23 // pred_fallthru
          _
        // Predicated region
        $region53: #{tpu_custom_call.1} parent=23 // pred_check
          %p638 = pneg %p260
        $region54: #{tpu_custom_call.1} parent=23 // pred_check_branch
          %640 = sbr.rel (%p638) target = $region56
        $region55: #{tpu_custom_call.1} parent=23 // pred_region
          %s641 = sand.u32 %s46, 1
          %s642 = scalar_lea.sflag [#allocation15], %s641
          %s643 = sand.u32 %s250, 1
          %s644 = scalar_lea.vmem [#allocation14], %s643
          %s646 = ssub.s32 16, 16
          %647 = vsyncadd %s642, %s646
          %s648 = smul.addr %s54, 16
          %s649 = scalar_lea.hbm %s7, %s648
          %s651 = sshll.u32 %s644, 4
          %s652 = int_to_ptr.vmem [resolvable:$true] %s651
          %654 = dma.hbm_to_vmem [thread:$0]  %s649, 16, %s652, %s642
        $region56: #{tpu_custom_call.1} parent=23 // pred_fallthru
          _
        // Predicated region
        $region57: #{tpu_custom_call.1} parent=23 // pred_check
          %p655 = pneg %p286
        $region58: #{tpu_custom_call.1} parent=23 // pred_check_branch
          %657 = sbr.rel (%p655) target = $region60
        $region59: #{tpu_custom_call.1} parent=23 // pred_region
          %s658 = sand.u32 %s46, 1
          %s659 = scalar_lea.sflag [#allocation15], %s658
          %s660 = sand.u32 %s276, 1
          %s661 = scalar_lea.vmem [#allocation16], %s660
          %s663 = ssub.s32 16, 16
          %664 = vsyncadd %s659, %s663
          %s665 = smul.addr %s54, 16
          %s666 = scalar_lea.hbm %s8, %s665
          %s668 = sshll.u32 %s661, 4
          %s669 = int_to_ptr.vmem [resolvable:$true] %s668
          %671 = dma.hbm_to_vmem [thread:$0]  %s666, 16, %s669, %s659
        $region60: #{tpu_custom_call.1} parent=23 // pred_fallthru
          _
        // Predicated region
        $region61: #{tpu_custom_call.1} parent=23 // pred_check
          %p672 = pneg %p312
        $region62: #{tpu_custom_call.1} parent=23 // pred_check_branch
          %674 = sbr.rel (%p672) target = $region64
        $region63: #{tpu_custom_call.1} parent=23 // pred_region
          %s675 = sand.u32 %s46, 1
          %s676 = scalar_lea.sflag [#allocation18], %s675
          %s677 = sand.u32 %s302, 1
          %s678 = smul.addr %s677, 256
          %s679 = scalar_lea.vmem [#allocation17], %s678
          %s681 = ssub.s32 4096, 4096
          %682 = vsyncadd %s676, %s681
          %s683 = smul.addr %s54, 64
          %s684 = smul.addr %s683, 64
          %s685 = scalar_lea.hbm %s9, %s684
          %s686 = sshll.u32 %s679, 4
          %s687 = int_to_ptr.vmem [resolvable:$true] %s686
          %692 = dma.hbm_to_vmem [thread:$0]  %s685, 4096, %s687, %s676, 256, 256, 16
        $region64: #{tpu_custom_call.1} parent=23 // pred_fallthru
          _
        // Predicated region
        $region65: #{tpu_custom_call.1} parent=23 // pred_check
          %p693 = pneg %p338
        $region66: #{tpu_custom_call.1} parent=23 // pred_check_branch
          %695 = sbr.rel (%p693) target = $region68
        $region67: #{tpu_custom_call.1} parent=23 // pred_region
          %s696 = sand.u32 %s46, 1
          %s697 = scalar_lea.sflag [#allocation18], %s696
          %s698 = sand.u32 %s328, 1
          %s699 = smul.addr %s698, 4
          %s700 = scalar_lea.vmem [#allocation19], %s699
          %s702 = ssub.s32 64, 64
          %703 = vsyncadd %s697, %s702
          %s704 = smul.addr %s54, 4
          %s705 = smul.addr %s704, 16
          %s706 = scalar_lea.hbm %s10, %s705
          %s708 = sshll.u32 %s700, 4
          %s709 = int_to_ptr.vmem [resolvable:$true] %s708
          %711 = dma.hbm_to_vmem [thread:$0]  %s706, 64, %s709, %s697
        $region68: #{tpu_custom_call.1} parent=23 // pred_fallthru
          _
        // Predicated region
        $region69: #{tpu_custom_call.1} parent=23 // pred_check
          %p712 = pneg %p364
        $region70: #{tpu_custom_call.1} parent=23 // pred_check_branch
          %714 = sbr.rel (%p712) target = $region72
        $region71: #{tpu_custom_call.1} parent=23 // pred_region
          %s715 = sand.u32 %s46, 1
          %s716 = scalar_lea.sflag [#allocation21], %s715
          %s717 = sand.u32 %s354, 1
          %s718 = smul.addr %s717, 256
          %s719 = scalar_lea.vmem [#allocation20], %s718
          %s721 = ssub.s32 4096, 4096
          %722 = vsyncadd %s716, %s721
          %s723 = smul.addr %s54, 64
          %s724 = smul.addr %s723, 64
          %s725 = scalar_lea.hbm %s11, %s724
          %s726 = sshll.u32 %s719, 4
          %s727 = int_to_ptr.vmem [resolvable:$true] %s726
          %732 = dma.hbm_to_vmem [thread:$0]  %s725, 4096, %s727, %s716, 64, 64, 4
        $region72: #{tpu_custom_call.1} parent=23 // pred_fallthru
          _
        // Predicated region
        $region73: #{tpu_custom_call.1} parent=23 // pred_check
          %p733 = pneg %p390
        $region74: #{tpu_custom_call.1} parent=23 // pred_check_branch
          %735 = sbr.rel (%p733) target = $region76
        $region75: #{tpu_custom_call.1} parent=23 // pred_region
          %s736 = sand.u32 %s46, 1
          %s737 = scalar_lea.sflag [#allocation21], %s736
          %s738 = sand.u32 %s380, 1
          %s739 = scalar_lea.vmem [#allocation22], %s738
          %s741 = ssub.s32 16, 16
          %742 = vsyncadd %s737, %s741
          %s743 = smul.addr %s54, 16
          %s744 = scalar_lea.hbm %s12, %s743
          %s746 = sshll.u32 %s739, 4
          %s747 = int_to_ptr.vmem [resolvable:$true] %s746
          %749 = dma.hbm_to_vmem [thread:$0]  %s744, 16, %s747, %s737
        $region76: #{tpu_custom_call.1} parent=23 // pred_fallthru
          _
      $region24: #{tpu_custom_call.1} parent=5 // pred_fallthru
        _
      %p750 = scmp.le.s32.totalorder 1, %s46
      %p751 = scmp.lt.s32.totalorder %s46, 9
      %p752 = pnand %p750, %p751
      %p753 = pneg %p752
      // Predicated region
      $region77: #{tpu_custom_call.1} parent=5 // pred_check
        _
      $region78: #{tpu_custom_call.1} parent=5 // pred_check_branch
        %755 = sbr.rel (%p752) target = $region80
      $region79: #{tpu_custom_call.1} parent=5 // pred_region
        %s756 = ssub.s32 %s46, 1
        %s757 = sand.u32 %s71, 1
        %s758 = scalar_lea.sflag [#allocation3], %s757
        %s759 = sand.u32 %s71, 1
        %s760 = smul.addr %s759, 16
        %s761 = scalar_lea.vmem [#allocation2], %s760
        // Predicated region
        $region81: #{tpu_custom_call.1} parent=79 // pred_check
          %p762 = pneg %p84
        $region82: #{tpu_custom_call.1} parent=79 // pred_check_branch
          %764 = sbr.rel (%p762) target = $region84
        $region83: #{tpu_custom_call.1} parent=79 // pred_region
          %765 = dma.done %s758, 256
        $region84: #{tpu_custom_call.1} parent=79 // pred_fallthru
          _
        %s766 = sand.u32 %s51, 1
        %s767 = scalar_lea.sflag [#allocation6], %s766
        %s768 = sand.u32 %s97, 1
        %s769 = scalar_lea.vmem [#allocation5], %s768
        // Predicated region
        $region85: #{tpu_custom_call.1} parent=79 // pred_check
          %p770 = pneg %p110
        $region86: #{tpu_custom_call.1} parent=79 // pred_check_branch
          %772 = sbr.rel (%p770) target = $region88
        $region87: #{tpu_custom_call.1} parent=79 // pred_region
          %773 = dma.done %s767, 16
        $region88: #{tpu_custom_call.1} parent=79 // pred_fallthru
          _
        %s774 = sand.u32 %s51, 1
        %s775 = scalar_lea.sflag [#allocation6], %s774
        %s776 = sand.u32 %s123, 1
        %s777 = scalar_lea.vmem [#allocation7], %s776
        // Predicated region
        $region89: #{tpu_custom_call.1} parent=79 // pred_check
          %p778 = pneg %p136
        $region90: #{tpu_custom_call.1} parent=79 // pred_check_branch
          %780 = sbr.rel (%p778) target = $region92
        $region91: #{tpu_custom_call.1} parent=79 // pred_region
          %781 = dma.done %s775, 16
        $region92: #{tpu_custom_call.1} parent=79 // pred_fallthru
          _
        %s782 = sand.u32 %s51, 1
        %s783 = scalar_lea.sflag [#allocation9], %s782
        %s784 = sand.u32 %s149, 1
        %s785 = smul.addr %s784, 192
        %s786 = scalar_lea.vmem [#allocation8], %s785
        // Predicated region
        $region93: #{tpu_custom_call.1} parent=79 // pred_check
          %p787 = pneg %p162
        $region94: #{tpu_custom_call.1} parent=79 // pred_check_branch
          %789 = sbr.rel (%p787) target = $region96
        $region95: #{tpu_custom_call.1} parent=79 // pred_region
          %790 = dma.done %s783, 3072
        $region96: #{tpu_custom_call.1} parent=79 // pred_fallthru
          _
        %s791 = sand.u32 %s51, 1
        %s792 = scalar_lea.sflag [#allocation9], %s791
        %s793 = sand.u32 %s175, 1
        %s794 = smul.addr %s793, 3
        %s795 = scalar_lea.vmem [#allocation10], %s794
        // Predicated region
        $region97: #{tpu_custom_call.1} parent=79 // pred_check
          %p796 = pneg %p188
        $region98: #{tpu_custom_call.1} parent=79 // pred_check_branch
          %798 = sbr.rel (%p796) target = $region100
        $region99: #{tpu_custom_call.1} parent=79 // pred_region
          %799 = dma.done %s792, 48
        $region100: #{tpu_custom_call.1} parent=79 // pred_fallthru
          _
        %s800 = sand.u32 %s51, 1
        %s801 = scalar_lea.sflag [#allocation12], %s800
        %s802 = sand.u32 %s201, 1
        %s803 = smul.addr %s802, 64
        %s804 = scalar_lea.vmem [#allocation11], %s803
        // Predicated region
        $region101: #{tpu_custom_call.1} parent=79 // pred_check
          %p805 = pneg %p214
        $region102: #{tpu_custom_call.1} parent=79 // pred_check_branch
          %807 = sbr.rel (%p805) target = $region104
        $region103: #{tpu_custom_call.1} parent=79 // pred_region
          %808 = dma.done %s801, 1024
        $region104: #{tpu_custom_call.1} parent=79 // pred_fallthru
          _
        %s809 = sand.u32 %s51, 1
        %s810 = scalar_lea.sflag [#allocation12], %s809
        %s811 = sand.u32 %s227, 1
        %s812 = scalar_lea.vmem [#allocation13], %s811
        // Predicated region
        $region105: #{tpu_custom_call.1} parent=79 // pred_check
          %p813 = pneg %p240
        $region106: #{tpu_custom_call.1} parent=79 // pred_check_branch
          %815 = sbr.rel (%p813) target = $region108
        $region107: #{tpu_custom_call.1} parent=79 // pred_region
          %816 = dma.done %s810, 16
        $region108: #{tpu_custom_call.1} parent=79 // pred_fallthru
          _
        %s817 = sand.u32 %s51, 1
        %s818 = scalar_lea.sflag [#allocation15], %s817
        %s819 = sand.u32 %s253, 1
        %s820 = scalar_lea.vmem [#allocation14], %s819
        // Predicated region
        $region109: #{tpu_custom_call.1} parent=79 // pred_check
          %p821 = pneg %p266
        $region110: #{tpu_custom_call.1} parent=79 // pred_check_branch
          %823 = sbr.rel (%p821) target = $region112
        $region111: #{tpu_custom_call.1} parent=79 // pred_region
          %824 = dma.done %s818, 16
        $region112: #{tpu_custom_call.1} parent=79 // pred_fallthru
          _
        %s825 = sand.u32 %s51, 1
        %s826 = scalar_lea.sflag [#allocation15], %s825
        %s827 = sand.u32 %s279, 1
        %s828 = scalar_lea.vmem [#allocation16], %s827
        // Predicated region
        $region113: #{tpu_custom_call.1} parent=79 // pred_check
          %p829 = pneg %p292
        $region114: #{tpu_custom_call.1} parent=79 // pred_check_branch
          %831 = sbr.rel (%p829) target = $region116
        $region115: #{tpu_custom_call.1} parent=79 // pred_region
          %832 = dma.done %s826, 16
        $region116: #{tpu_custom_call.1} parent=79 // pred_fallthru
          _
        %s833 = sand.u32 %s51, 1
        %s834 = scalar_lea.sflag [#allocation18], %s833
        %s835 = sand.u32 %s305, 1
        %s836 = smul.addr %s835, 256
        %s837 = scalar_lea.vmem [#allocation17], %s836
        // Predicated region
        $region117: #{tpu_custom_call.1} parent=79 // pred_check
          %p838 = pneg %p318
        $region118: #{tpu_custom_call.1} parent=79 // pred_check_branch
          %840 = sbr.rel (%p838) target = $region120
        $region119: #{tpu_custom_call.1} parent=79 // pred_region
          %841 = dma.done %s834, 4096
        $region120: #{tpu_custom_call.1} parent=79 // pred_fallthru
          _
        %s842 = sand.u32 %s51, 1
        %s843 = scalar_lea.sflag [#allocation18], %s842
        %s844 = sand.u32 %s331, 1
        %s845 = smul.addr %s844, 4
        %s846 = scalar_lea.vmem [#allocation19], %s845
        // Predicated region
        $region121: #{tpu_custom_call.1} parent=79 // pred_check
          %p847 = pneg %p344
        $region122: #{tpu_custom_call.1} parent=79 // pred_check_branch
          %849 = sbr.rel (%p847) target = $region124
        $region123: #{tpu_custom_call.1} parent=79 // pred_region
          %850 = dma.done %s843, 64
        $region124: #{tpu_custom_call.1} parent=79 // pred_fallthru
          _
        %s851 = sand.u32 %s51, 1
        %s852 = scalar_lea.sflag [#allocation21], %s851
        %s853 = sand.u32 %s357, 1
        %s854 = smul.addr %s853, 256
        %s855 = scalar_lea.vmem [#allocation20], %s854
        // Predicated region
        $region125: #{tpu_custom_call.1} parent=79 // pred_check
          %p856 = pneg %p370
        $region126: #{tpu_custom_call.1} parent=79 // pred_check_branch
          %858 = sbr.rel (%p856) target = $region128
        $region127: #{tpu_custom_call.1} parent=79 // pred_region
          %859 = dma.done %s852, 4096
        $region128: #{tpu_custom_call.1} parent=79 // pred_fallthru
          _
        %s860 = sand.u32 %s51, 1
        %s861 = scalar_lea.sflag [#allocation21], %s860
        %s862 = sand.u32 %s383, 1
        %s863 = scalar_lea.vmem [#allocation22], %s862
        // Predicated region
        $region129: #{tpu_custom_call.1} parent=79 // pred_check
          %p864 = pneg %p396
        $region130: #{tpu_custom_call.1} parent=79 // pred_check_branch
          %866 = sbr.rel (%p864) target = $region132
        $region131: #{tpu_custom_call.1} parent=79 // pred_region
          %867 = dma.done %s861, 16
        $region132: #{tpu_custom_call.1} parent=79 // pred_fallthru
          _
        // Predicated region
        $region133: #{tpu_custom_call.1} parent=79 // pred_check
          %p868 = pneg %p417
        $region134: #{tpu_custom_call.1} parent=79 // pred_check_branch
          %870 = sbr.rel (%p868) target = $region136
        $region135: #{tpu_custom_call.1} parent=79 // pred_region
          %871 = dma.done [#allocation24], 16
        $region136: #{tpu_custom_call.1} parent=79 // pred_fallthru
          _
        // Predicated region
        $region137: #{tpu_custom_call.1} parent=79 // pred_check
          %p872 = pneg %p438
        $region138: #{tpu_custom_call.1} parent=79 // pred_check_branch
          %874 = sbr.rel (%p872) target = $region140
        $region139: #{tpu_custom_call.1} parent=79 // pred_region
          %875 = dma.done [#allocation24], 16
        $region140: #{tpu_custom_call.1} parent=79 // pred_fallthru
          _
        %s876 = sand.u32 %s71, 1
        %s877 = scalar_lea.sflag [#allocation3], %s876
        %s878 = sand.u32 %s71, 1
        %s879 = smul.addr %s878, 16
        %s880 = scalar_lea.vmem [#allocation2], %s879
        %p881 = pneg %p84
        %p882 = pneg %p81
        %s883 = sand.u32 %s51, 1
        %s884 = scalar_lea.sflag [#allocation6], %s883
        %s885 = sand.u32 %s97, 1
        %s886 = scalar_lea.vmem [#allocation5], %s885
        %p887 = pneg %p110
        %p888 = pneg %p107
        %s889 = sand.u32 %s51, 1
        %s890 = scalar_lea.sflag [#allocation6], %s889
        %s891 = sand.u32 %s123, 1
        %s892 = scalar_lea.vmem [#allocation7], %s891
        %p893 = pneg %p136
        %p894 = pneg %p133
        %s895 = sand.u32 %s51, 1
        %s896 = scalar_lea.sflag [#allocation9], %s895
        %s897 = sand.u32 %s149, 1
        %s898 = smul.addr %s897, 192
        %s899 = scalar_lea.vmem [#allocation8], %s898
        %p900 = pneg %p162
        %p901 = pneg %p159
        %s902 = sand.u32 %s51, 1
        %s903 = scalar_lea.sflag [#allocation9], %s902
        %s904 = sand.u32 %s175, 1
        %s905 = smul.addr %s904, 3
        %s906 = scalar_lea.vmem [#allocation10], %s905
        %p907 = pneg %p188
        %p908 = pneg %p185
        %s909 = sand.u32 %s51, 1
        %s910 = scalar_lea.sflag [#allocation12], %s909
        %s911 = sand.u32 %s201, 1
        %s912 = smul.addr %s911, 64
        %s913 = scalar_lea.vmem [#allocation11], %s912
        %p914 = pneg %p214
        %p915 = pneg %p211
        %s916 = sand.u32 %s51, 1
        %s917 = scalar_lea.sflag [#allocation12], %s916
        %s918 = sand.u32 %s227, 1
        %s919 = scalar_lea.vmem [#allocation13], %s918
        %p920 = pneg %p240
        %p921 = pneg %p237
        %s922 = sand.u32 %s51, 1
        %s923 = scalar_lea.sflag [#allocation15], %s922
        %s924 = sand.u32 %s253, 1
        %s925 = scalar_lea.vmem [#allocation14], %s924
        %p926 = pneg %p266
        %p927 = pneg %p263
        %s928 = sand.u32 %s51, 1
        %s929 = scalar_lea.sflag [#allocation15], %s928
        %s930 = sand.u32 %s279, 1
        %s931 = scalar_lea.vmem [#allocation16], %s930
        %p932 = pneg %p292
        %p933 = pneg %p289
        %s934 = sand.u32 %s51, 1
        %s935 = scalar_lea.sflag [#allocation18], %s934
        %s936 = sand.u32 %s305, 1
        %s937 = smul.addr %s936, 256
        %s938 = scalar_lea.vmem [#allocation17], %s937
        %p939 = pneg %p318
        %p940 = pneg %p315
        %s941 = sand.u32 %s51, 1
        %s942 = scalar_lea.sflag [#allocation18], %s941
        %s943 = sand.u32 %s331, 1
        %s944 = smul.addr %s943, 4
        %s945 = scalar_lea.vmem [#allocation19], %s944
        %p946 = pneg %p344
        %p947 = pneg %p341
        %s948 = sand.u32 %s51, 1
        %s949 = scalar_lea.sflag [#allocation21], %s948
        %s950 = sand.u32 %s357, 1
        %s951 = smul.addr %s950, 256
        %s952 = scalar_lea.vmem [#allocation20], %s951
        %p953 = pneg %p370
        %p954 = pneg %p367
        %s955 = sand.u32 %s51, 1
        %s956 = scalar_lea.sflag [#allocation21], %s955
        %s957 = sand.u32 %s383, 1
        %s958 = scalar_lea.vmem [#allocation22], %s957
        %p959 = pneg %p396
        %p960 = pneg %p393
        %p961 = pneg %p417
        %p962 = pneg %p414
        %p963 = pneg %p438
        %p964 = pneg %p435
        %p965 = pneg %p464
        %p966 = pneg %p461
        %s967 = sand.u32 %s451, 1
        %s968 = scalar_lea.sflag [#allocation4], %s967
        %s969 = sand.u32 %s451, 1
        %s970 = smul.addr %s969, 16
        %s971 = scalar_lea.vmem [#allocation26], %s970
        %p973 = scmp.eq.s32.totalorder %s56, 0
        // Predicated region
        $region141: #{tpu_custom_call.1} parent=79 // pred_check
          %p974 = pneg %p973
        $region142: #{tpu_custom_call.1} parent=79 // pred_check_branch
          %976 = sbr.rel (%p974) target = $region144
        $region143: #{tpu_custom_call.1} parent=79 // pred_region
          %v977 = vld [vmem:[%s761] sm:$0xff]
          %v978 = vld [vmem:[%s761 + $0x8] sm:$0xff]
          %979 = vst [vmem:[%s971] sm:$0xff] %v977
          %980 = vst [vmem:[%s971 + $0x8] sm:$0xff] %v978
        $region144: #{tpu_custom_call.1} parent=79 // pred_fallthru
          _
        %v981 = vld [vmem:[%s971] sm:$0xff]
        %v982 = vld [vmem:[%s971 + $0x8] sm:$0xff]
        %v983 = vld [vmem:[%s769] sm:$0x1]
        %v984 = vld [vmem:[%s777] sm:$0x1]
        %985 = vadd.xlane.f32.xlu0 %v981
        %v986 = vpop.xlane.xlu0 %985
        %987 = vadd.xlane.f32.xlu0 %v982
        %v988 = vpop.xlane.xlu0 %987
        %v989 = vrcp.pop 128.0
        %v990 = vmul.f32 %v986, %v989
        %v991 = vmul.f32 %v988, %v989
        %v992 = vsub.f32 %v981, %v990
        %v993 = vsub.f32 %v982, %v991
        %v994 = vmul.f32 %v992, %v992
        %v995 = vmul.f32 %v993, %v993
        %996 = vadd.xlane.f32.xlu0 %v994
        %v997 = vpop.xlane.xlu0 %996
        %998 = vadd.xlane.f32.xlu0 %v995
        %v999 = vpop.xlane.xlu0 %998
        %v1000 = vmul.f32 %v997, %v989
        %v1001 = vmul.f32 %v999, %v989
        %v1002 = vadd.f32 %v1000, 1e-05
        %v1003 = vadd.f32 %v1001, 1e-05
        %v1004 = vrsqrt.pop %v1002
        %v1005 = vrsqrt.pop %v1003
        %v1006 = vmul.f32 %v992, %v1004
        %v1007 = vmul.f32 %v993, %v1005
        %v1009 = vlaneseq
        %v1010 = vshrl.u32 %v1009, 7
        %v1011 = vsub.s32 0, %v1010
        %v1012 = vrot.slane %v983, %v1011
        %v1014 = vmul.f32 %v1006, %v1012
        %v1015 = vmul.f32 %v1007, %v1012
        %v1017 = vlaneseq
        %v1018 = vshrl.u32 %v1017, 7
        %v1019 = vsub.s32 0, %v1018
        %v1020 = vrot.slane %v984, %v1019
        %v1022 = vadd.f32 %v1014, %v1020
        %v1023 = vadd.f32 %v1015, %v1020
        %v1024 = vpack.c.bf16 %v1023, %v1022
        %v1025 = vld [vmem:[%s786] sm:$0xff]
        %v1026 = vld [vmem:[%s786 + $0x8] sm:$0xf]
        %v1027 = vld [vmem:[%s786 + $0xc] sm:$0xff]
        %v1028 = vld [vmem:[%s786 + $0x14] sm:$0xf]
        %v1029 = vld [vmem:[%s786 + $0x18] sm:$0xff]
        %v1030 = vld [vmem:[%s786 + $0x20] sm:$0xf]
        %v1031 = vld [vmem:[%s786 + $0x24] sm:$0xff]
        %v1032 = vld [vmem:[%s786 + $0x2c] sm:$0xf]
        %v1033 = vld [vmem:[%s786 + $0x30] sm:$0xff]
        %v1034 = vld [vmem:[%s786 + $0x38] sm:$0xf]
        %v1035 = vld [vmem:[%s786 + $0x3c] sm:$0xff]
        %v1036 = vld [vmem:[%s786 + $0x44] sm:$0xf]
        %v1037 = vld [vmem:[%s786 + $0x48] sm:$0xff]
        %v1038 = vld [vmem:[%s786 + $0x50] sm:$0xf]
        %v1039 = vld [vmem:[%s786 + $0x54] sm:$0xff]
        %v1040 = vld [vmem:[%s786 + $0x5c] sm:$0xf]
        %v1041 = vld [vmem:[%s786 + $0x60] sm:$0xff]
        %v1042 = vld [vmem:[%s786 + $0x68] sm:$0xf]
        %v1043 = vld [vmem:[%s786 + $0x6c] sm:$0xff]
        %v1044 = vld [vmem:[%s786 + $0x74] sm:$0xf]
        %v1045 = vld [vmem:[%s786 + $0x78] sm:$0xff]
        %v1046 = vld [vmem:[%s786 + $0x80] sm:$0xf]
        %v1047 = vld [vmem:[%s786 + $0x84] sm:$0xff]
        %v1048 = vld [vmem:[%s786 + $0x8c] sm:$0xf]
        %v1049 = vld [vmem:[%s786 + $0x90] sm:$0xff]
        %v1050 = vld [vmem:[%s786 + $0x98] sm:$0xf]
        %v1051 = vld [vmem:[%s786 + $0x9c] sm:$0xff]
        %v1052 = vld [vmem:[%s786 + $0xa4] sm:$0xf]
        %v1053 = vld [vmem:[%s786 + $0xa8] sm:$0xff]
        %v1054 = vld [vmem:[%s786 + $0xb0] sm:$0xf]
        %v1055 = vld [vmem:[%s786 + $0xb4] sm:$0xff]
        %v1056 = vld [vmem:[%s786 + $0xbc] sm:$0xf]
        %v1057 = vld [vmem:[%s795] sm:$0x7]
        %v1059 = vlaneseq
        %v1060 = vshrl.u32 %v1059, 7
        %v1061 = vsub.s32 0, %v1060
        %v1062 = vrot.slane %v1057, %v1061
        %v1063 = vlaneseq
        %v1064 = vshrl.u32 %v1063, 7
        %v1065 = vsub.s32 1, %v1064
        %v1066 = vrot.slane %v1057, %v1065
        %v1067 = vlaneseq
        %v1068 = vshrl.u32 %v1067, 7
        %v1069 = vsub.s32 2, %v1068
        %v1070 = vrot.slane %v1057, %v1069
        %v1106 = vunpack.c.l.b16 %v1025
        %v1107 = vunpack.c.h.b16 %v1025
        %v1108 = vunpack.c.l.b16 %v1026
        %v1109 = vunpack.c.l.b16 %v1027
        %v1110 = vunpack.c.h.b16 %v1027
        %v1111 = vunpack.c.l.b16 %v1028
        %v1112 = vunpack.c.l.b16 %v1029
        %v1113 = vunpack.c.h.b16 %v1029
        %v1114 = vunpack.c.l.b16 %v1030
        %v1115 = vunpack.c.l.b16 %v1031
        %v1116 = vunpack.c.h.b16 %v1031
        %v1117 = vunpack.c.l.b16 %v1032
        %v1118 = vunpack.c.l.b16 %v1033
        %v1119 = vunpack.c.h.b16 %v1033
        %v1120 = vunpack.c.l.b16 %v1034
        %v1121 = vunpack.c.l.b16 %v1035
        %v1122 = vunpack.c.h.b16 %v1035
        %v1123 = vunpack.c.l.b16 %v1036
        %v1124 = vunpack.c.l.b16 %v1037
        %v1125 = vunpack.c.h.b16 %v1037
        %v1126 = vunpack.c.l.b16 %v1038
        %v1127 = vunpack.c.l.b16 %v1039
        %v1128 = vunpack.c.h.b16 %v1039
        %v1129 = vunpack.c.l.b16 %v1040
        %v1130 = vunpack.c.l.b16 %v1041
        %v1131 = vunpack.c.h.b16 %v1041
        %v1132 = vunpack.c.l.b16 %v1042
        %v1133 = vunpack.c.l.b16 %v1043
        %v1134 = vunpack.c.h.b16 %v1043
        %v1135 = vunpack.c.l.b16 %v1044
        %v1136 = vunpack.c.l.b16 %v1045
        %v1137 = vunpack.c.h.b16 %v1045
        %v1138 = vunpack.c.l.b16 %v1046
        %v1139 = vunpack.c.l.b16 %v1047
        %v1140 = vunpack.c.h.b16 %v1047
        %v1141 = vunpack.c.l.b16 %v1048
        %v1142 = vunpack.c.l.b16 %v1049
        %v1143 = vunpack.c.h.b16 %v1049
        %v1144 = vunpack.c.l.b16 %v1050
        %v1145 = vunpack.c.l.b16 %v1051
        %v1146 = vunpack.c.h.b16 %v1051
        %v1147 = vunpack.c.l.b16 %v1052
        %v1148 = vunpack.c.l.b16 %v1053
        %v1149 = vunpack.c.h.b16 %v1053
        %v1150 = vunpack.c.l.b16 %v1054
        %v1151 = vunpack.c.l.b16 %v1055
        %v1152 = vunpack.c.h.b16 %v1055
        %v1153 = vunpack.c.l.b16 %v1056
        %v1154 = vpack.c.b16 %v1109, %v1106
        %v1155 = vpack.c.b16 %v1110, %v1107
        %v1156 = vpack.c.b16 %v1111, %v1108
        %v1157 = vpack.c.b16 %v1115, %v1112
        %v1158 = vpack.c.b16 %v1116, %v1113
        %v1159 = vpack.c.b16 %v1117, %v1114
        %v1160 = vpack.c.b16 %v1121, %v1118
        %v1161 = vpack.c.b16 %v1122, %v1119
        %v1162 = vpack.c.b16 %v1123, %v1120
        %v1163 = vpack.c.b16 %v1127, %v1124
        %v1164 = vpack.c.b16 %v1128, %v1125
        %v1165 = vpack.c.b16 %v1129, %v1126
        %v1166 = vpack.c.b16 %v1133, %v1130
        %v1167 = vpack.c.b16 %v1134, %v1131
        %v1168 = vpack.c.b16 %v1135, %v1132
        %v1169 = vpack.c.b16 %v1139, %v1136
        %v1170 = vpack.c.b16 %v1140, %v1137
        %v1171 = vpack.c.b16 %v1141, %v1138
        %v1172 = vpack.c.b16 %v1145, %v1142
        %v1173 = vpack.c.b16 %v1146, %v1143
        %v1174 = vpack.c.b16 %v1147, %v1144
        %v1175 = vpack.c.b16 %v1151, %v1148
        %v1176 = vpack.c.b16 %v1152, %v1149
        %v1177 = vpack.c.b16 %v1153, %v1150
        %1202 = vmatprep.subr.bf16.mxu0 %v1155
        %1203 = vmatpush1.bf16.msra.mxu0 %v1154
        %1204 = vmatprep.subr.bf16.mxu0 %v1158
        %1205 = vmatpush1.bf16.msra.mxu0 %v1157
        %1206 = vmatprep.subr.bf16.mxu0 %v1161
        %1207 = vmatpush1.bf16.msra.mxu0 %v1160
        %1208 = vmatprep.subr.bf16.mxu0 %v1164
        %1209 = vmatpush1.bf16.msra.mxu0 %v1163
        %1210 = vmatprep.subr.bf16.mxu0 %v1167
        %1211 = vmatpush1.bf16.msra.mxu0 %v1166
        %1212 = vmatprep.subr.bf16.mxu0 %v1170
        %1213 = vmatpush1.bf16.msra.mxu0 %v1169
        %1214 = vmatprep.subr.bf16.mxu0 %v1173
        %1215 = vmatpush1.bf16.msra.mxu0 %v1172
        %1216 = vmatprep.subr.bf16.mxu0 %v1176
        %1217 = vmatpush1.bf16.msra.mxu0 %v1175
        %1218 = vmatprep.subr.bf16.mxu0 0
        %1219 = vmatpush1.bf16.msra.mxu0 0
        %1220 = vmatprep.subr.bf16.mxu0 0
        %1221 = vmatpush1.bf16.msra.mxu0 0
        %1222 = vmatprep.subr.bf16.mxu0 0
        %1223 = vmatpush1.bf16.msra.mxu0 0
        %1224 = vmatprep.subr.bf16.mxu0 0
        %1225 = vmatpush1.bf16.msra.mxu0 0
        %1226 = vmatprep.subr.bf16.mxu0 0
        %1227 = vmatpush1.bf16.msra.mxu0 0
        %1228 = vmatprep.subr.bf16.mxu0 0
        %1229 = vmatpush1.bf16.msra.mxu0 0
        %1230 = vmatprep.subr.bf16.mxu0 0
        %1231 = vmatpush1.bf16.msra.mxu0 0
        %1232 = vmatprep.subr.bf16.mxu0 0
        %1233 = vmatpush1.bf16.msra.mxu0 0
        %1234 = vmatprep.mubr.bf16.mxu0 0
        %1235 = vmatmul.mubr.bf16.gmra.mrb[0].mxu0 %v1024
        %v1236 = vpop.f32.mrb[0].mxu0
        %v1237 = vadd.f32 %v1062, %v1236
        %v1238 = vpop.f32.mrb[0].mxu0
        %v1239 = vadd.f32 %v1066, %v1238
        %v1240 = vpop.f32.mrb[0].mxu0
        %v1241 = vadd.f32 %v1062, %v1240
        %v1242 = vpop.f32.mrb[0].mxu0
        %v1243 = vadd.f32 %v1066, %v1242
        %1244 = vdwg.mxu0
        %1245 = vmatprep.subr.bf16.mxu0 0
        %1246 = vmatpush1.bf16.msra.mxu0 %v1156
        %1247 = vmatprep.subr.bf16.mxu0 0
        %1248 = vmatpush1.bf16.msra.mxu0 %v1159
        %1249 = vmatprep.subr.bf16.mxu0 0
        %1250 = vmatpush1.bf16.msra.mxu0 %v1162
        %1251 = vmatprep.subr.bf16.mxu0 0
        %1252 = vmatpush1.bf16.msra.mxu0 %v1165
        %1253 = vmatprep.subr.bf16.mxu0 0
        %1254 = vmatpush1.bf16.msra.mxu0 %v1168
        %1255 = vmatprep.subr.bf16.mxu0 0
        %1256 = vmatpush1.bf16.msra.mxu0 %v1171
        %1257 = vmatprep.subr.bf16.mxu0 0
        %1258 = vmatpush1.bf16.msra.mxu0 %v1174
        %1259 = vmatprep.subr.bf16.mxu0 0
        %1260 = vmatpush1.bf16.msra.mxu0 %v1177
        %1261 = vmatprep.subr.bf16.mxu0 0
        %1262 = vmatpush1.bf16.msra.mxu0 0
        %1263 = vmatprep.subr.bf16.mxu0 0
        %1264 = vmatpush1.bf16.msra.mxu0 0
        %1265 = vmatprep.subr.bf16.mxu0 0
        %1266 = vmatpush1.bf16.msra.mxu0 0
        %1267 = vmatprep.subr.bf16.mxu0 0
        %1268 = vmatpush1.bf16.msra.mxu0 0
        %1269 = vmatprep.subr.bf16.mxu0 0
        %1270 = vmatpush1.bf16.msra.mxu0 0
        %1271 = vmatprep.subr.bf16.mxu0 0
        %1272 = vmatpush1.bf16.msra.mxu0 0
        %1273 = vmatprep.subr.bf16.mxu0 0
        %1274 = vmatpush1.bf16.msra.mxu0 0
        %1275 = vmatprep.subr.bf16.mxu0 0
        %1276 = vmatpush1.bf16.msra.mxu0 0
        %1277 = vmatprep.mubr.bf16.mxu0 0
        %1278 = vmatmul.mubr.bf16.gmra.mrb[0].mxu0 %v1024
        %v1279 = vpop.f32.mrb[0].mxu0
        %v1280 = vadd.f32 %v1070, %v1279
        %v1281 = vpop.f32.mrb[0].mxu0
        %v1282 = vpop.f32.mrb[0].mxu0
        %v1283 = vadd.f32 %v1070, %v1282
        %v1284 = vpop.f32.mrb[0].mxu0
        %1285 = vdwg.mxu0
        %v1286 = vlaneseq
        %v1287 = vshrl.u32 %v1286, 7
        %v1288 = vadd.s32 %v1287, 8
        %v1289 = vlaneseq
        %v1290 = vand.u32 %v1289, 127
        %vm1291 = vcmp.gt.s32.totalorder %v1290, %v1287
        %vm1292 = vcmp.gt.s32.totalorder %v1290, %v1288
        %vm1293 = vcmask 261120
        %v1295 = vsel %vm1293, %v1237, 0
        %v1298 = vsel %vm1293, %v1241, 0
        %v1301 = vsel %vm1293, %v1239, 0
        %v1304 = vsel %vm1293, %v1243, 0
        %1306 = vmatprep.subr.mxu0 0.0
        %1307 = vmatpush1.xpose.msra.mxu0 %v1301
        %1308 = vmatprep.subr.mxu0 0.0
        %1309 = vmatpush1.xpose.msra.mxu0 %v1304
        %1310 = vmatprep.subr.mxu0 0.0
        %1311 = vmatpush1.xpose.msra.mxu0 0.0
        %1312 = vmatprep.subr.mxu0 0.0
        %1313 = vmatpush1.xpose.msra.mxu0 0.0
        %1314 = vmatprep.subr.mxu0 0.0
        %1315 = vmatpush1.xpose.msra.mxu0 0.0
        %1316 = vmatprep.subr.mxu0 0.0
        %1317 = vmatpush1.xpose.msra.mxu0 0.0
        %1318 = vmatprep.subr.mxu0 0.0
        %1319 = vmatpush1.xpose.msra.mxu0 0.0
        %1320 = vmatprep.subr.mxu0 0.0
        %1321 = vmatpush1.xpose.msra.mxu0 0.0
        %1322 = vmatprep.subr.mxu0 0.0
        %1323 = vmatpush1.xpose.msra.mxu0 0.0
        %1324 = vmatprep.subr.mxu0 0.0
        %1325 = vmatpush1.xpose.msra.mxu0 0.0
        %1326 = vmatprep.subr.mxu0 0.0
        %1327 = vmatpush1.xpose.msra.mxu0 0.0
        %1328 = vmatprep.subr.mxu0 0.0
        %1329 = vmatpush1.xpose.msra.mxu0 0.0
        %1330 = vmatprep.subr.mxu0 0.0
        %1331 = vmatpush1.xpose.msra.mxu0 0.0
        %1332 = vmatprep.subr.mxu0 0.0
        %1333 = vmatpush1.xpose.msra.mxu0 0.0
        %1334 = vmatprep.subr.mxu0 0.0
        %1335 = vmatpush1.xpose.msra.mxu0 0.0
        %1336 = vmatprep.subr.mxu0 0.0
        %1337 = vmatpush1.xpose.msra.mxu0 0.0
        %1338 = vmatprep.subr.mxu0 0.0
        %1339 = vmatpush1.xpose.msra.mxu0 0.0
        %1340 = vmatprep.subr.mxu0 0.0
        %1341 = vmatpush1.xpose.msra.mxu0 0.0
        %1342 = vmatprep.subr.mxu0 0.0
        %1343 = vmatpush1.xpose.msra.mxu0 0.0
        %1344 = vmatprep.subr.mxu0 0.0
        %1345 = vmatpush1.xpose.msra.mxu0 0.0
        %1346 = vmatprep.subr.mxu0 0.0
        %1347 = vmatpush1.xpose.msra.mxu0 0.0
        %1348 = vmatprep.subr.mxu0 0.0
        %1349 = vmatpush1.xpose.msra.mxu0 0.0
        %1350 = vmatprep.subr.mxu0 0.0
        %1351 = vmatpush1.xpose.msra.mxu0 0.0
        %1352 = vmatprep.subr.mxu0 0.0
        %1353 = vmatpush1.xpose.msra.mxu0 0.0
        %1354 = vmatprep.subr.mxu0 0.0
        %1355 = vmatpush1.xpose.msra.mxu0 0.0
        %1356 = vmatprep.subr.mxu0 0.0
        %1357 = vmatpush1.xpose.msra.mxu0 0.0
        %1358 = vmatprep.subr.mxu0 0.0
        %1359 = vmatpush1.xpose.msra.mxu0 0.0
        %1360 = vmatprep.subr.mxu0 0.0
        %1361 = vmatpush1.xpose.msra.mxu0 0.0
        %1362 = vmatprep.subr.mxu0 0.0
        %1363 = vmatpush1.xpose.msra.mxu0 0.0
        %1364 = vmatprep.subr.mxu0 0.0
        %1365 = vmatpush1.xpose.msra.mxu0 0.0
        %1366 = vmatprep.subr.mxu0 0.0
        %1367 = vmatpush1.xpose.msra.mxu0 0.0
        %1368 = vmatprep.subr.mxu0 0.0
        %1369 = vmatpush1.xpose.msra.mxu0 0.0
        %1370 = vmatprep.mubr.f32.mxu0 0.0
        %1371 = vmatmul.mubr.f32.gmra.mrb[0].mxu0 %v1295
        %v1372 = vpop.f32.mrb[0].mxu0
        %v1373 = vadd.f32 0.0, %v1372
        %v1374 = vpop.f32.mrb[0].mxu0
        %1375 = vmatprep.mubr.f32.mxu0 0.0
        %1376 = vmatmul.mubr.f32.gmra.mrb[0].mxu0 %v1298
        %v1377 = vpop.f32.mrb[0].mxu0
        %v1378 = vadd.f32 0.0, %v1377
        %v1379 = vpop.f32.mrb[0].mxu0
        %1380 = vdwg.mxu0
        %v1381 = vsel %vm1291, -inf, %v1373
        %v1382 = vsel %vm1292, -inf, %v1378
        %vm1383 = vcmask 130048
        %v1384 = vsel %vm1383, %v1381, -inf
        %1385 = vmax.xlane.f32.xlu0 %v1384
        %v1386 = vpop.xlane.xlu0 %1385
        %v1387 = vsel %vm1383, %v1382, -inf
        %1388 = vmax.xlane.f32.xlu0 %v1387
        %v1389 = vpop.xlane.xlu0 %1388
        %v1390 = vsub.f32 %v1381, %v1386
        %v1391 = vsub.f32 %v1382, %v1389
        %v1392 = vmul.f32 %v1390, 1.442695
        %v1393 = vpow.pop %v1392
        %v1394 = vmul.f32 %v1391, 1.442695
        %v1395 = vpow.pop %v1394
        %v1396 = vsel %vm1383, %v1393, 0.0
        %1397 = vadd.xlane.f32.xlu0 %v1396
        %v1398 = vpop.xlane.xlu0 %1397
        %v1399 = vsel %vm1383, %v1395, 0.0
        %1400 = vadd.xlane.f32.xlu0 %v1399
        %v1401 = vpop.xlane.xlu0 %1400
        %v1402 = vrcp.pop %v1398
        %v1403 = vrcp.pop %v1401
        %v1404 = vmul.f32 %v1393, %v1402
        %v1405 = vmul.f32 %v1395, %v1403
        %v1407 = vsel %vm1383, %v1404, 0
        %v1410 = vsel %vm1383, %v1405, 0
        %1412 = vmatprep.subr.mxu0 0.0
        %1413 = vmatpush1.msra.mxu0 %v1280
        %1414 = vmatprep.subr.mxu0 0.0
        %1415 = vmatpush1.msra.mxu0 %v1283
        %1416 = vmatprep.subr.mxu0 0.0
        %1417 = vmatpush1.msra.mxu0 0.0
        %1418 = vmatprep.subr.mxu0 0.0
        %1419 = vmatpush1.msra.mxu0 0.0
        %1420 = vmatprep.subr.mxu0 0.0
        %1421 = vmatpush1.msra.mxu0 0.0
        %1422 = vmatprep.subr.mxu0 0.0
        %1423 = vmatpush1.msra.mxu0 0.0
        %1424 = vmatprep.subr.mxu0 0.0
        %1425 = vmatpush1.msra.mxu0 0.0
        %1426 = vmatprep.subr.mxu0 0.0
        %1427 = vmatpush1.msra.mxu0 0.0
        %1428 = vmatprep.subr.mxu0 0.0
        %1429 = vmatpush1.msra.mxu0 0.0
        %1430 = vmatprep.subr.mxu0 0.0
        %1431 = vmatpush1.msra.mxu0 0.0
        %1432 = vmatprep.subr.mxu0 0.0
        %1433 = vmatpush1.msra.mxu0 0.0
        %1434 = vmatprep.subr.mxu0 0.0
        %1435 = vmatpush1.msra.mxu0 0.0
        %1436 = vmatprep.subr.mxu0 0.0
        %1437 = vmatpush1.msra.mxu0 0.0
        %1438 = vmatprep.subr.mxu0 0.0
        %1439 = vmatpush1.msra.mxu0 0.0
        %1440 = vmatprep.subr.mxu0 0.0
        %1441 = vmatpush1.msra.mxu0 0.0
        %1442 = vmatprep.subr.mxu0 0.0
        %1443 = vmatpush1.msra.mxu0 0.0
        %1444 = vmatprep.subr.mxu0 0.0
        %1445 = vmatpush1.msra.mxu0 0.0
        %1446 = vmatprep.subr.mxu0 0.0
        %1447 = vmatpush1.msra.mxu0 0.0
        %1448 = vmatprep.subr.mxu0 0.0
        %1449 = vmatpush1.msra.mxu0 0.0
        %1450 = vmatprep.subr.mxu0 0.0
        %1451 = vmatpush1.msra.mxu0 0.0
        %1452 = vmatprep.subr.mxu0 0.0
        %1453 = vmatpush1.msra.mxu0 0.0
        %1454 = vmatprep.subr.mxu0 0.0
        %1455 = vmatpush1.msra.mxu0 0.0
        %1456 = vmatprep.subr.mxu0 0.0
        %1457 = vmatpush1.msra.mxu0 0.0
        %1458 = vmatprep.subr.mxu0 0.0
        %1459 = vmatpush1.msra.mxu0 0.0
        %1460 = vmatprep.subr.mxu0 0.0
        %1461 = vmatpush1.msra.mxu0 0.0
        %1462 = vmatprep.subr.mxu0 0.0
        %1463 = vmatpush1.msra.mxu0 0.0
        %1464 = vmatprep.subr.mxu0 0.0
        %1465 = vmatpush1.msra.mxu0 0.0
        %1466 = vmatprep.subr.mxu0 0.0
        %1467 = vmatpush1.msra.mxu0 0.0
        %1468 = vmatprep.subr.mxu0 0.0
        %1469 = vmatpush1.msra.mxu0 0.0
        %1470 = vmatprep.subr.mxu0 0.0
        %1471 = vmatpush1.msra.mxu0 0.0
        %1472 = vmatprep.subr.mxu0 0.0
        %1473 = vmatpush1.msra.mxu0 0.0
        %1474 = vmatprep.subr.mxu0 0.0
        %1475 = vmatpush1.msra.mxu0 0.0
        %1476 = vmatprep.mubr.f32.mxu0 0.0
        %1477 = vmatmul.mubr.f32.gmra.mrb[0].mxu0 %v1407
        %v1478 = vpop.f32.mrb[0].mxu0
        %v1479 = vadd.f32 0.0, %v1478
        %v1480 = vpop.f32.mrb[0].mxu0
        %1481 = vmatprep.mubr.f32.mxu0 0.0
        %1482 = vmatmul.mubr.f32.gmra.mrb[0].mxu0 %v1410
        %v1483 = vpop.f32.mrb[0].mxu0
        %v1484 = vadd.f32 0.0, %v1483
        %v1485 = vpop.f32.mrb[0].mxu0
        %1486 = vdwg.mxu0
        %1487 = vrot.lane.b32.xlu0 %v1237, 96
        %v1488 = vpop.permute.xlu0 %1487
        %1489 = vrot.lane.b32.xlu0 %v1241, 96
        %v1490 = vpop.permute.xlu0 %1489
        %1491 = vrot.lane.b32.xlu0 %v1239, 96
        %v1492 = vpop.permute.xlu0 %1491
        %1493 = vrot.lane.b32.xlu0 %v1243, 96
        %v1494 = vpop.permute.xlu0 %1493
        %v1495 = vsel %vm1293, %v1488, 0
        %v1497 = vsel %vm1293, %v1490, 0
        %v1499 = vsel %vm1293, %v1492, 0
        %v1501 = vsel %vm1293, %v1494, 0
        %1503 = vmatprep.subr.mxu0 0.0
        %1504 = vmatpush1.xpose.msra.mxu0 %v1499
        %1505 = vmatprep.subr.mxu0 0.0
        %1506 = vmatpush1.xpose.msra.mxu0 %v1501
        %1507 = vmatprep.subr.mxu0 0.0
        %1508 = vmatpush1.xpose.msra.mxu0 0.0
        %1509 = vmatprep.subr.mxu0 0.0
        %1510 = vmatpush1.xpose.msra.mxu0 0.0
        %1511 = vmatprep.subr.mxu0 0.0
        %1512 = vmatpush1.xpose.msra.mxu0 0.0
        %1513 = vmatprep.subr.mxu0 0.0
        %1514 = vmatpush1.xpose.msra.mxu0 0.0
        %1515 = vmatprep.subr.mxu0 0.0
        %1516 = vmatpush1.xpose.msra.mxu0 0.0
        %1517 = vmatprep.subr.mxu0 0.0
        %1518 = vmatpush1.xpose.msra.mxu0 0.0
        %1519 = vmatprep.subr.mxu0 0.0
        %1520 = vmatpush1.xpose.msra.mxu0 0.0
        %1521 = vmatprep.subr.mxu0 0.0
        %1522 = vmatpush1.xpose.msra.mxu0 0.0
        %1523 = vmatprep.subr.mxu0 0.0
        %1524 = vmatpush1.xpose.msra.mxu0 0.0
        %1525 = vmatprep.subr.mxu0 0.0
        %1526 = vmatpush1.xpose.msra.mxu0 0.0
        %1527 = vmatprep.subr.mxu0 0.0
        %1528 = vmatpush1.xpose.msra.mxu0 0.0
        %1529 = vmatprep.subr.mxu0 0.0
        %1530 = vmatpush1.xpose.msra.mxu0 0.0
        %1531 = vmatprep.subr.mxu0 0.0
        %1532 = vmatpush1.xpose.msra.mxu0 0.0
        %1533 = vmatprep.subr.mxu0 0.0
        %1534 = vmatpush1.xpose.msra.mxu0 0.0
        %1535 = vmatprep.subr.mxu0 0.0
        %1536 = vmatpush1.xpose.msra.mxu0 0.0
        %1537 = vmatprep.subr.mxu0 0.0
        %1538 = vmatpush1.xpose.msra.mxu0 0.0
        %1539 = vmatprep.subr.mxu0 0.0
        %1540 = vmatpush1.xpose.msra.mxu0 0.0
        %1541 = vmatprep.subr.mxu0 0.0
        %1542 = vmatpush1.xpose.msra.mxu0 0.0
        %1543 = vmatprep.subr.mxu0 0.0
        %1544 = vmatpush1.xpose.msra.mxu0 0.0
        %1545 = vmatprep.subr.mxu0 0.0
        %1546 = vmatpush1.xpose.msra.mxu0 0.0
        %1547 = vmatprep.subr.mxu0 0.0
        %1548 = vmatpush1.xpose.msra.mxu0 0.0
        %1549 = vmatprep.subr.mxu0 0.0
        %1550 = vmatpush1.xpose.msra.mxu0 0.0
        %1551 = vmatprep.subr.mxu0 0.0
        %1552 = vmatpush1.xpose.msra.mxu0 0.0
        %1553 = vmatprep.subr.mxu0 0.0
        %1554 = vmatpush1.xpose.msra.mxu0 0.0
        %1555 = vmatprep.subr.mxu0 0.0
        %1556 = vmatpush1.xpose.msra.mxu0 0.0
        %1557 = vmatprep.subr.mxu0 0.0
        %1558 = vmatpush1.xpose.msra.mxu0 0.0
        %1559 = vmatprep.subr.mxu0 0.0
        %1560 = vmatpush1.xpose.msra.mxu0 0.0
        %1561 = vmatprep.subr.mxu0 0.0
        %1562 = vmatpush1.xpose.msra.mxu0 0.0
        %1563 = vmatprep.subr.mxu0 0.0
        %1564 = vmatpush1.xpose.msra.mxu0 0.0
        %1565 = vmatprep.subr.mxu0 0.0
        %1566 = vmatpush1.xpose.msra.mxu0 0.0
        %1567 = vmatprep.mubr.f32.mxu0 0.0
        %1568 = vmatmul.mubr.f32.gmra.mrb[0].mxu0 %v1495
        %v1569 = vpop.f32.mrb[0].mxu0
        %v1570 = vadd.f32 0.0, %v1569
        %v1571 = vpop.f32.mrb[0].mxu0
        %1572 = vmatprep.mubr.f32.mxu0 0.0
        %1573 = vmatmul.mubr.f32.gmra.mrb[0].mxu0 %v1497
        %v1574 = vpop.f32.mrb[0].mxu0
        %v1575 = vadd.f32 0.0, %v1574
        %v1576 = vpop.f32.mrb[0].mxu0
        %1577 = vdwg.mxu0
        %v1578 = vsel %vm1291, -inf, %v1570
        %v1579 = vsel %vm1292, -inf, %v1575
        %v1580 = vsel %vm1383, %v1578, -inf
        %1581 = vmax.xlane.f32.xlu0 %v1580
        %v1582 = vpop.xlane.xlu0 %1581
        %v1583 = vsel %vm1383, %v1579, -inf
        %1584 = vmax.xlane.f32.xlu0 %v1583
        %v1585 = vpop.xlane.xlu0 %1584
        %v1586 = vsub.f32 %v1578, %v1582
        %v1587 = vsub.f32 %v1579, %v1585
        %v1588 = vmul.f32 %v1586, 1.442695
        %v1589 = vpow.pop %v1588
        %v1590 = vmul.f32 %v1587, 1.442695
        %v1591 = vpow.pop %v1590
        %v1592 = vsel %vm1383, %v1589, 0.0
        %1593 = vadd.xlane.f32.xlu0 %v1592
        %v1594 = vpop.xlane.xlu0 %1593
        %v1595 = vsel %vm1383, %v1591, 0.0
        %1596 = vadd.xlane.f32.xlu0 %v1595
        %v1597 = vpop.xlane.xlu0 %1596
        %v1598 = vrcp.pop %v1594
        %v1599 = vrcp.pop %v1597
        %v1600 = vmul.f32 %v1589, %v1598
        %v1601 = vmul.f32 %v1591, %v1599
        %1604 = vrot.lane.b32.xlu0 %v1280, 96
        %v1605 = vpop.permute.xlu0 %1604
        %1606 = vrot.lane.b32.xlu0 %v1283, 96
        %v1607 = vpop.permute.xlu0 %1606
        %v1611 = vsel %vm1383, %v1600, 0
        %v1614 = vsel %vm1383, %v1601, 0
        %1616 = vmatprep.subr.mxu0 0.0
        %1617 = vmatpush1.msra.mxu0 %v1605
        %1618 = vmatprep.subr.mxu0 0.0
        %1619 = vmatpush1.msra.mxu0 %v1607
        %1620 = vmatprep.subr.mxu0 0.0
        %1621 = vmatpush1.msra.mxu0 0.0
        %1622 = vmatprep.subr.mxu0 0.0
        %1623 = vmatpush1.msra.mxu0 0.0
        %1624 = vmatprep.subr.mxu0 0.0
        %1625 = vmatpush1.msra.mxu0 0.0
        %1626 = vmatprep.subr.mxu0 0.0
        %1627 = vmatpush1.msra.mxu0 0.0
        %1628 = vmatprep.subr.mxu0 0.0
        %1629 = vmatpush1.msra.mxu0 0.0
        %1630 = vmatprep.subr.mxu0 0.0
        %1631 = vmatpush1.msra.mxu0 0.0
        %1632 = vmatprep.subr.mxu0 0.0
        %1633 = vmatpush1.msra.mxu0 0.0
        %1634 = vmatprep.subr.mxu0 0.0
        %1635 = vmatpush1.msra.mxu0 0.0
        %1636 = vmatprep.subr.mxu0 0.0
        %1637 = vmatpush1.msra.mxu0 0.0
        %1638 = vmatprep.subr.mxu0 0.0
        %1639 = vmatpush1.msra.mxu0 0.0
        %1640 = vmatprep.subr.mxu0 0.0
        %1641 = vmatpush1.msra.mxu0 0.0
        %1642 = vmatprep.subr.mxu0 0.0
        %1643 = vmatpush1.msra.mxu0 0.0
        %1644 = vmatprep.subr.mxu0 0.0
        %1645 = vmatpush1.msra.mxu0 0.0
        %1646 = vmatprep.subr.mxu0 0.0
        %1647 = vmatpush1.msra.mxu0 0.0
        %1648 = vmatprep.subr.mxu0 0.0
        %1649 = vmatpush1.msra.mxu0 0.0
        %1650 = vmatprep.subr.mxu0 0.0
        %1651 = vmatpush1.msra.mxu0 0.0
        %1652 = vmatprep.subr.mxu0 0.0
        %1653 = vmatpush1.msra.mxu0 0.0
        %1654 = vmatprep.subr.mxu0 0.0
        %1655 = vmatpush1.msra.mxu0 0.0
        %1656 = vmatprep.subr.mxu0 0.0
        %1657 = vmatpush1.msra.mxu0 0.0
        %1658 = vmatprep.subr.mxu0 0.0
        %1659 = vmatpush1.msra.mxu0 0.0
        %1660 = vmatprep.subr.mxu0 0.0
        %1661 = vmatpush1.msra.mxu0 0.0
        %1662 = vmatprep.subr.mxu0 0.0
        %1663 = vmatpush1.msra.mxu0 0.0
        %1664 = vmatprep.subr.mxu0 0.0
        %1665 = vmatpush1.msra.mxu0 0.0
        %1666 = vmatprep.subr.mxu0 0.0
        %1667 = vmatpush1.msra.mxu0 0.0
        %1668 = vmatprep.subr.mxu0 0.0
        %1669 = vmatpush1.msra.mxu0 0.0
        %1670 = vmatprep.subr.mxu0 0.0
        %1671 = vmatpush1.msra.mxu0 0.0
        %1672 = vmatprep.subr.mxu0 0.0
        %1673 = vmatpush1.msra.mxu0 0.0
        %1674 = vmatprep.subr.mxu0 0.0
        %1675 = vmatpush1.msra.mxu0 0.0
        %1676 = vmatprep.subr.mxu0 0.0
        %1677 = vmatpush1.msra.mxu0 0.0
        %1678 = vmatprep.subr.mxu0 0.0
        %1679 = vmatpush1.msra.mxu0 0.0
        %1680 = vmatprep.mubr.f32.mxu0 0.0
        %1681 = vmatmul.mubr.f32.gmra.mrb[0].mxu0 %v1611
        %v1682 = vpop.f32.mrb[0].mxu0
        %v1683 = vadd.f32 0.0, %v1682
        %v1684 = vpop.f32.mrb[0].mxu0
        %1685 = vmatprep.mubr.f32.mxu0 0.0
        %1686 = vmatmul.mubr.f32.gmra.mrb[0].mxu0 %v1614
        %v1687 = vpop.f32.mrb[0].mxu0
        %v1688 = vadd.f32 0.0, %v1687
        %v1689 = vpop.f32.mrb[0].mxu0
        %1690 = vdwg.mxu0
        %1691 = vrot.lane.b32.xlu0 %v1237, 64
        %v1692 = vpop.permute.xlu0 %1691
        %1693 = vrot.lane.b32.xlu0 %v1241, 64
        %v1694 = vpop.permute.xlu0 %1693
        %1695 = vrot.lane.b32.xlu0 %v1239, 64
        %v1696 = vpop.permute.xlu0 %1695
        %1697 = vrot.lane.b32.xlu0 %v1243, 64
        %v1698 = vpop.permute.xlu0 %1697
        %v1699 = vsel %vm1293, %v1692, 0
        %v1701 = vsel %vm1293, %v1694, 0
        %v1703 = vsel %vm1293, %v1696, 0
        %v1705 = vsel %vm1293, %v1698, 0
        %1707 = vmatprep.subr.mxu0 0.0
        %1708 = vmatpush1.xpose.msra.mxu0 %v1703
        %1709 = vmatprep.subr.mxu0 0.0
        %1710 = vmatpush1.xpose.msra.mxu0 %v1705
        %1711 = vmatprep.subr.mxu0 0.0
        %1712 = vmatpush1.xpose.msra.mxu0 0.0
        %1713 = vmatprep.subr.mxu0 0.0
        %1714 = vmatpush1.xpose.msra.mxu0 0.0
        %1715 = vmatprep.subr.mxu0 0.0
        %1716 = vmatpush1.xpose.msra.mxu0 0.0
        %1717 = vmatprep.subr.mxu0 0.0
        %1718 = vmatpush1.xpose.msra.mxu0 0.0
        %1719 = vmatprep.subr.mxu0 0.0
        %1720 = vmatpush1.xpose.msra.mxu0 0.0
        %1721 = vmatprep.subr.mxu0 0.0
        %1722 = vmatpush1.xpose.msra.mxu0 0.0
        %1723 = vmatprep.subr.mxu0 0.0
        %1724 = vmatpush1.xpose.msra.mxu0 0.0
        %1725 = vmatprep.subr.mxu0 0.0
        %1726 = vmatpush1.xpose.msra.mxu0 0.0
        %1727 = vmatprep.subr.mxu0 0.0
        %1728 = vmatpush1.xpose.msra.mxu0 0.0
        %1729 = vmatprep.subr.mxu0 0.0
        %1730 = vmatpush1.xpose.msra.mxu0 0.0
        %1731 = vmatprep.subr.mxu0 0.0
        %1732 = vmatpush1.xpose.msra.mxu0 0.0
        %1733 = vmatprep.subr.mxu0 0.0
        %1734 = vmatpush1.xpose.msra.mxu0 0.0
        %1735 = vmatprep.subr.mxu0 0.0
        %1736 = vmatpush1.xpose.msra.mxu0 0.0
        %1737 = vmatprep.subr.mxu0 0.0
        %1738 = vmatpush1.xpose.msra.mxu0 0.0
        %1739 = vmatprep.subr.mxu0 0.0
        %1740 = vmatpush1.xpose.msra.mxu0 0.0
        %1741 = vmatprep.subr.mxu0 0.0
        %1742 = vmatpush1.xpose.msra.mxu0 0.0
        %1743 = vmatprep.subr.mxu0 0.0
        %1744 = vmatpush1.xpose.msra.mxu0 0.0
        %1745 = vmatprep.subr.mxu0 0.0
        %1746 = vmatpush1.xpose.msra.mxu0 0.0
        %1747 = vmatprep.subr.mxu0 0.0
        %1748 = vmatpush1.xpose.msra.mxu0 0.0
        %1749 = vmatprep.subr.mxu0 0.0
        %1750 = vmatpush1.xpose.msra.mxu0 0.0
        %1751 = vmatprep.subr.mxu0 0.0
        %1752 = vmatpush1.xpose.msra.mxu0 0.0
        %1753 = vmatprep.subr.mxu0 0.0
        %1754 = vmatpush1.xpose.msra.mxu0 0.0
        %1755 = vmatprep.subr.mxu0 0.0
        %1756 = vmatpush1.xpose.msra.mxu0 0.0
        %1757 = vmatprep.subr.mxu0 0.0
        %1758 = vmatpush1.xpose.msra.mxu0 0.0
        %1759 = vmatprep.subr.mxu0 0.0
        %1760 = vmatpush1.xpose.msra.mxu0 0.0
        %1761 = vmatprep.subr.mxu0 0.0
        %1762 = vmatpush1.xpose.msra.mxu0 0.0
        %1763 = vmatprep.subr.mxu0 0.0
        %1764 = vmatpush1.xpose.msra.mxu0 0.0
        %1765 = vmatprep.subr.mxu0 0.0
        %1766 = vmatpush1.xpose.msra.mxu0 0.0
        %1767 = vmatprep.subr.mxu0 0.0
        %1768 = vmatpush1.xpose.msra.mxu0 0.0
        %1769 = vmatprep.subr.mxu0 0.0
        %1770 = vmatpush1.xpose.msra.mxu0 0.0
        %1771 = vmatprep.mubr.f32.mxu0 0.0
        %1772 = vmatmul.mubr.f32.gmra.mrb[0].mxu0 %v1699
        %v1773 = vpop.f32.mrb[0].mxu0
        %v1774 = vadd.f32 0.0, %v1773
        %v1775 = vpop.f32.mrb[0].mxu0
        %1776 = vmatprep.mubr.f32.mxu0 0.0
        %1777 = vmatmul.mubr.f32.gmra.mrb[0].mxu0 %v1701
        %v1778 = vpop.f32.mrb[0].mxu0
        %v1779 = vadd.f32 0.0, %v1778
        %v1780 = vpop.f32.mrb[0].mxu0
        %1781 = vdwg.mxu0
        %v1782 = vsel %vm1291, -inf, %v1774
        %v1783 = vsel %vm1292, -inf, %v1779
        %v1784 = vsel %vm1383, %v1782, -inf
        %1785 = vmax.xlane.f32.xlu0 %v1784
        %v1786 = vpop.xlane.xlu0 %1785
        %v1787 = vsel %vm1383, %v1783, -inf
        %1788 = vmax.xlane.f32.xlu0 %v1787
        %v1789 = vpop.xlane.xlu0 %1788
        %v1790 = vsub.f32 %v1782, %v1786
        %v1791 = vsub.f32 %v1783, %v1789
        %v1792 = vmul.f32 %v1790, 1.442695
        %v1793 = vpow.pop %v1792
        %v1794 = vmul.f32 %v1791, 1.442695
        %v1795 = vpow.pop %v1794
        %v1796 = vsel %vm1383, %v1793, 0.0
        %1797 = vadd.xlane.f32.xlu0 %v1796
        %v1798 = vpop.xlane.xlu0 %1797
        %v1799 = vsel %vm1383, %v1795, 0.0
        %1800 = vadd.xlane.f32.xlu0 %v1799
        %v1801 = vpop.xlane.xlu0 %1800
        %v1802 = vrcp.pop %v1798
        %v1803 = vrcp.pop %v1801
        %v1804 = vmul.f32 %v1793, %v1802
        %v1805 = vmul.f32 %v1795, %v1803
        %1806 = vrot.lane.b32.xlu0 %v1280, 64
        %v1807 = vpop.permute.xlu0 %1806
        %1808 = vrot.lane.b32.xlu0 %v1283, 64
        %v1809 = vpop.permute.xlu0 %1808
        %v1813 = vsel %vm1383, %v1804, 0
        %v1816 = vsel %vm1383, %v1805, 0
        %1818 = vmatprep.subr.mxu0 0.0
        %1819 = vmatpush1.msra.mxu0 %v1807
        %1820 = vmatprep.subr.mxu0 0.0
        %1821 = vmatpush1.msra.mxu0 %v1809
        %1822 = vmatprep.subr.mxu0 0.0
        %1823 = vmatpush1.msra.mxu0 0.0
        %1824 = vmatprep.subr.mxu0 0.0
        %1825 = vmatpush1.msra.mxu0 0.0
        %1826 = vmatprep.subr.mxu0 0.0
        %1827 = vmatpush1.msra.mxu0 0.0
        %1828 = vmatprep.subr.mxu0 0.0
        %1829 = vmatpush1.msra.mxu0 0.0
        %1830 = vmatprep.subr.mxu0 0.0
        %1831 = vmatpush1.msra.mxu0 0.0
        %1832 = vmatprep.subr.mxu0 0.0
        %1833 = vmatpush1.msra.mxu0 0.0
        %1834 = vmatprep.subr.mxu0 0.0
        %1835 = vmatpush1.msra.mxu0 0.0
        %1836 = vmatprep.subr.mxu0 0.0
        %1837 = vmatpush1.msra.mxu0 0.0
        %1838 = vmatprep.subr.mxu0 0.0
        %1839 = vmatpush1.msra.mxu0 0.0
        %1840 = vmatprep.subr.mxu0 0.0
        %1841 = vmatpush1.msra.mxu0 0.0
        %1842 = vmatprep.subr.mxu0 0.0
        %1843 = vmatpush1.msra.mxu0 0.0
        %1844 = vmatprep.subr.mxu0 0.0
        %1845 = vmatpush1.msra.mxu0 0.0
        %1846 = vmatprep.subr.mxu0 0.0
        %1847 = vmatpush1.msra.mxu0 0.0
        %1848 = vmatprep.subr.mxu0 0.0
        %1849 = vmatpush1.msra.mxu0 0.0
        %1850 = vmatprep.subr.mxu0 0.0
        %1851 = vmatpush1.msra.mxu0 0.0
        %1852 = vmatprep.subr.mxu0 0.0
        %1853 = vmatpush1.msra.mxu0 0.0
        %1854 = vmatprep.subr.mxu0 0.0
        %1855 = vmatpush1.msra.mxu0 0.0
        %1856 = vmatprep.subr.mxu0 0.0
        %1857 = vmatpush1.msra.mxu0 0.0
        %1858 = vmatprep.subr.mxu0 0.0
        %1859 = vmatpush1.msra.mxu0 0.0
        %1860 = vmatprep.subr.mxu0 0.0
        %1861 = vmatpush1.msra.mxu0 0.0
        %1862 = vmatprep.subr.mxu0 0.0
        %1863 = vmatpush1.msra.mxu0 0.0
        %1864 = vmatprep.subr.mxu0 0.0
        %1865 = vmatpush1.msra.mxu0 0.0
        %1866 = vmatprep.subr.mxu0 0.0
        %1867 = vmatpush1.msra.mxu0 0.0
        %1868 = vmatprep.subr.mxu0 0.0
        %1869 = vmatpush1.msra.mxu0 0.0
        %1870 = vmatprep.subr.mxu0 0.0
        %1871 = vmatpush1.msra.mxu0 0.0
        %1872 = vmatprep.subr.mxu0 0.0
        %1873 = vmatpush1.msra.mxu0 0.0
        %1874 = vmatprep.subr.mxu0 0.0
        %1875 = vmatpush1.msra.mxu0 0.0
        %1876 = vmatprep.subr.mxu0 0.0
        %1877 = vmatpush1.msra.mxu0 0.0
        %1878 = vmatprep.subr.mxu0 0.0
        %1879 = vmatpush1.msra.mxu0 0.0
        %1880 = vmatprep.subr.mxu0 0.0
        %1881 = vmatpush1.msra.mxu0 0.0
        %1882 = vmatprep.mubr.f32.mxu0 0.0
        %1883 = vmatmul.mubr.f32.gmra.mrb[0].mxu0 %v1813
        %v1884 = vpop.f32.mrb[0].mxu0
        %v1885 = vadd.f32 0.0, %v1884
        %v1886 = vpop.f32.mrb[0].mxu0
        %1887 = vmatprep.mubr.f32.mxu0 0.0
        %1888 = vmatmul.mubr.f32.gmra.mrb[0].mxu0 %v1816
        %v1889 = vpop.f32.mrb[0].mxu0
        %v1890 = vadd.f32 0.0, %v1889
        %v1891 = vpop.f32.mrb[0].mxu0
        %1892 = vdwg.mxu0
        %1893 = vrot.lane.b32.xlu0 %v1237, 32
        %v1894 = vpop.permute.xlu0 %1893
        %1895 = vrot.lane.b32.xlu0 %v1241, 32
        %v1896 = vpop.permute.xlu0 %1895
        %1897 = vrot.lane.b32.xlu0 %v1239, 32
        %v1898 = vpop.permute.xlu0 %1897
        %1899 = vrot.lane.b32.xlu0 %v1243, 32
        %v1900 = vpop.permute.xlu0 %1899
        %v1901 = vsel %vm1293, %v1894, 0
        %v1903 = vsel %vm1293, %v1896, 0
        %v1905 = vsel %vm1293, %v1898, 0
        %v1907 = vsel %vm1293, %v1900, 0
        %1909 = vmatprep.subr.mxu0 0.0
        %1910 = vmatpush1.xpose.msra.mxu0 %v1905
        %1911 = vmatprep.subr.mxu0 0.0
        %1912 = vmatpush1.xpose.msra.mxu0 %v1907
        %1913 = vmatprep.subr.mxu0 0.0
        %1914 = vmatpush1.xpose.msra.mxu0 0.0
        %1915 = vmatprep.subr.mxu0 0.0
        %1916 = vmatpush1.xpose.msra.mxu0 0.0
        %1917 = vmatprep.subr.mxu0 0.0
        %1918 = vmatpush1.xpose.msra.mxu0 0.0
        %1919 = vmatprep.subr.mxu0 0.0
        %1920 = vmatpush1.xpose.msra.mxu0 0.0
        %1921 = vmatprep.subr.mxu0 0.0
        %1922 = vmatpush1.xpose.msra.mxu0 0.0
        %1923 = vmatprep.subr.mxu0 0.0
        %1924 = vmatpush1.xpose.msra.mxu0 0.0
        %1925 = vmatprep.subr.mxu0 0.0
        %1926 = vmatpush1.xpose.msra.mxu0 0.0
        %1927 = vmatprep.subr.mxu0 0.0
        %1928 = vmatpush1.xpose.msra.mxu0 0.0
        %1929 = vmatprep.subr.mxu0 0.0
        %1930 = vmatpush1.xpose.msra.mxu0 0.0
        %1931 = vmatprep.subr.mxu0 0.0
        %1932 = vmatpush1.xpose.msra.mxu0 0.0
        %1933 = vmatprep.subr.mxu0 0.0
        %1934 = vmatpush1.xpose.msra.mxu0 0.0
        %1935 = vmatprep.subr.mxu0 0.0
        %1936 = vmatpush1.xpose.msra.mxu0 0.0
        %1937 = vmatprep.subr.mxu0 0.0
        %1938 = vmatpush1.xpose.msra.mxu0 0.0
        %1939 = vmatprep.subr.mxu0 0.0
        %1940 = vmatpush1.xpose.msra.mxu0 0.0
        %1941 = vmatprep.subr.mxu0 0.0
        %1942 = vmatpush1.xpose.msra.mxu0 0.0
        %1943 = vmatprep.subr.mxu0 0.0
        %1944 = vmatpush1.xpose.msra.mxu0 0.0
        %1945 = vmatprep.subr.mxu0 0.0
        %1946 = vmatpush1.xpose.msra.mxu0 0.0
        %1947 = vmatprep.subr.mxu0 0.0
        %1948 = vmatpush1.xpose.msra.mxu0 0.0
        %1949 = vmatprep.subr.mxu0 0.0
        %1950 = vmatpush1.xpose.msra.mxu0 0.0
        %1951 = vmatprep.subr.mxu0 0.0
        %1952 = vmatpush1.xpose.msra.mxu0 0.0
        %1953 = vmatprep.subr.mxu0 0.0
        %1954 = vmatpush1.xpose.msra.mxu0 0.0
        %1955 = vmatprep.subr.mxu0 0.0
        %1956 = vmatpush1.xpose.msra.mxu0 0.0
        %1957 = vmatprep.subr.mxu0 0.0
        %1958 = vmatpush1.xpose.msra.mxu0 0.0
        %1959 = vmatprep.subr.mxu0 0.0
        %1960 = vmatpush1.xpose.msra.mxu0 0.0
        %1961 = vmatprep.subr.mxu0 0.0
        %1962 = vmatpush1.xpose.msra.mxu0 0.0
        %1963 = vmatprep.subr.mxu0 0.0
        %1964 = vmatpush1.xpose.msra.mxu0 0.0
        %1965 = vmatprep.subr.mxu0 0.0
        %1966 = vmatpush1.xpose.msra.mxu0 0.0
        %1967 = vmatprep.subr.mxu0 0.0
        %1968 = vmatpush1.xpose.msra.mxu0 0.0
        %1969 = vmatprep.subr.mxu0 0.0
        %1970 = vmatpush1.xpose.msra.mxu0 0.0
        %1971 = vmatprep.subr.mxu0 0.0
        %1972 = vmatpush1.xpose.msra.mxu0 0.0
        %1973 = vmatprep.mubr.f32.mxu0 0.0
        %1974 = vmatmul.mubr.f32.gmra.mrb[0].mxu0 %v1901
        %v1975 = vpop.f32.mrb[0].mxu0
        %v1976 = vadd.f32 0.0, %v1975
        %v1977 = vpop.f32.mrb[0].mxu0
        %1978 = vmatprep.mubr.f32.mxu0 0.0
        %1979 = vmatmul.mubr.f32.gmra.mrb[0].mxu0 %v1903
        %v1980 = vpop.f32.mrb[0].mxu0
        %v1981 = vadd.f32 0.0, %v1980
        %v1982 = vpop.f32.mrb[0].mxu0
        %1983 = vdwg.mxu0
        %v1984 = vsel %vm1291, -inf, %v1976
        %v1985 = vsel %vm1292, -inf, %v1981
        %v1986 = vsel %vm1383, %v1984, -inf
        %1987 = vmax.xlane.f32.xlu0 %v1986
        %v1988 = vpop.xlane.xlu0 %1987
        %v1989 = vsel %vm1383, %v1985, -inf
        %1990 = vmax.xlane.f32.xlu0 %v1989
        %v1991 = vpop.xlane.xlu0 %1990
        %v1992 = vsub.f32 %v1984, %v1988
        %v1993 = vsub.f32 %v1985, %v1991
        %v1994 = vmul.f32 %v1992, 1.442695
        %v1995 = vpow.pop %v1994
        %v1996 = vmul.f32 %v1993, 1.442695
        %v1997 = vpow.pop %v1996
        %v1998 = vsel %vm1383, %v1995, 0.0
        %1999 = vadd.xlane.f32.xlu0 %v1998
        %v2000 = vpop.xlane.xlu0 %1999
        %v2001 = vsel %vm1383, %v1997, 0.0
        %2002 = vadd.xlane.f32.xlu0 %v2001
        %v2003 = vpop.xlane.xlu0 %2002
        %v2004 = vrcp.pop %v2000
        %v2005 = vrcp.pop %v2003
        %v2006 = vmul.f32 %v1995, %v2004
        %v2007 = vmul.f32 %v1997, %v2005
        %2008 = vrot.lane.b32.xlu0 %v1280, 32
        %v2009 = vpop.permute.xlu0 %2008
        %2010 = vrot.lane.b32.xlu0 %v1283, 32
        %v2011 = vpop.permute.xlu0 %2010
        %v2015 = vsel %vm1383, %v2006, 0
        %v2018 = vsel %vm1383, %v2007, 0
        %2020 = vmatprep.subr.mxu0 0.0
        %2021 = vmatpush1.msra.mxu0 %v2009
        %2022 = vmatprep.subr.mxu0 0.0
        %2023 = vmatpush1.msra.mxu0 %v2011
        %2024 = vmatprep.subr.mxu0 0.0
        %2025 = vmatpush1.msra.mxu0 0.0
        %2026 = vmatprep.subr.mxu0 0.0
        %2027 = vmatpush1.msra.mxu0 0.0
        %2028 = vmatprep.subr.mxu0 0.0
        %2029 = vmatpush1.msra.mxu0 0.0
        %2030 = vmatprep.subr.mxu0 0.0
        %2031 = vmatpush1.msra.mxu0 0.0
        %2032 = vmatprep.subr.mxu0 0.0
        %2033 = vmatpush1.msra.mxu0 0.0
        %2034 = vmatprep.subr.mxu0 0.0
        %2035 = vmatpush1.msra.mxu0 0.0
        %2036 = vmatprep.subr.mxu0 0.0
        %2037 = vmatpush1.msra.mxu0 0.0
        %2038 = vmatprep.subr.mxu0 0.0
        %2039 = vmatpush1.msra.mxu0 0.0
        %2040 = vmatprep.subr.mxu0 0.0
        %2041 = vmatpush1.msra.mxu0 0.0
        %2042 = vmatprep.subr.mxu0 0.0
        %2043 = vmatpush1.msra.mxu0 0.0
        %2044 = vmatprep.subr.mxu0 0.0
        %2045 = vmatpush1.msra.mxu0 0.0
        %2046 = vmatprep.subr.mxu0 0.0
        %2047 = vmatpush1.msra.mxu0 0.0
        %2048 = vmatprep.subr.mxu0 0.0
        %2049 = vmatpush1.msra.mxu0 0.0
        %2050 = vmatprep.subr.mxu0 0.0
        %2051 = vmatpush1.msra.mxu0 0.0
        %2052 = vmatprep.subr.mxu0 0.0
        %2053 = vmatpush1.msra.mxu0 0.0
        %2054 = vmatprep.subr.mxu0 0.0
        %2055 = vmatpush1.msra.mxu0 0.0
        %2056 = vmatprep.subr.mxu0 0.0
        %2057 = vmatpush1.msra.mxu0 0.0
        %2058 = vmatprep.subr.mxu0 0.0
        %2059 = vmatpush1.msra.mxu0 0.0
        %2060 = vmatprep.subr.mxu0 0.0
        %2061 = vmatpush1.msra.mxu0 0.0
        %2062 = vmatprep.subr.mxu0 0.0
        %2063 = vmatpush1.msra.mxu0 0.0
        %2064 = vmatprep.subr.mxu0 0.0
        %2065 = vmatpush1.msra.mxu0 0.0
        %2066 = vmatprep.subr.mxu0 0.0
        %2067 = vmatpush1.msra.mxu0 0.0
        %2068 = vmatprep.subr.mxu0 0.0
        %2069 = vmatpush1.msra.mxu0 0.0
        %2070 = vmatprep.subr.mxu0 0.0
        %2071 = vmatpush1.msra.mxu0 0.0
        %2072 = vmatprep.subr.mxu0 0.0
        %2073 = vmatpush1.msra.mxu0 0.0
        %2074 = vmatprep.subr.mxu0 0.0
        %2075 = vmatpush1.msra.mxu0 0.0
        %2076 = vmatprep.subr.mxu0 0.0
        %2077 = vmatpush1.msra.mxu0 0.0
        %2078 = vmatprep.subr.mxu0 0.0
        %2079 = vmatpush1.msra.mxu0 0.0
        %2080 = vmatprep.subr.mxu0 0.0
        %2081 = vmatpush1.msra.mxu0 0.0
        %2082 = vmatprep.subr.mxu0 0.0
        %2083 = vmatpush1.msra.mxu0 0.0
        %2084 = vmatprep.mubr.f32.mxu0 0.0
        %2085 = vmatmul.mubr.f32.gmra.mrb[0].mxu0 %v2015
        %v2086 = vpop.f32.mrb[0].mxu0
        %v2087 = vadd.f32 0.0, %v2086
        %v2088 = vpop.f32.mrb[0].mxu0
        %2089 = vmatprep.mubr.f32.mxu0 0.0
        %2090 = vmatmul.mubr.f32.gmra.mrb[0].mxu0 %v2018
        %v2091 = vpop.f32.mrb[0].mxu0
        %v2092 = vadd.f32 0.0, %v2091
        %v2093 = vpop.f32.mrb[0].mxu0
        %2094 = vdwg.mxu0
        %2097 = vrot.lane.b32.xlu0 %v1683, 32
        %v2098 = vpop.permute.xlu0 %2097
        %2099 = vrot.lane.b32.xlu0 %v1688, 32
        %v2100 = vpop.permute.xlu0 %2099
        %2105 = vrot.lane.b32.xlu0 %v1885, 64
        %v2106 = vpop.permute.xlu0 %2105
        %2107 = vrot.lane.b32.xlu0 %v1890, 64
        %v2108 = vpop.permute.xlu0 %2107
        %2113 = vrot.lane.b32.xlu0 %v2087, 96
        %v2114 = vpop.permute.xlu0 %2113
        %2115 = vrot.lane.b32.xlu0 %v2092, 96
        %v2116 = vpop.permute.xlu0 %2115
        %v2119 = vsel %vm1293, %v1479, %v2098
        %v2120 = vsel %vm1293, %v1484, %v2100
        %vm2121 = vcmask 523264
        %v2122 = vsel %vm2121, %v2119, %v2106
        %v2123 = vsel %vm2121, %v2120, %v2108
        %vm2124 = vcmask 785408
        %v2125 = vsel %vm2124, %v2122, %v2114
        %v2126 = vsel %vm2124, %v2123, %v2116
        %v2127 = vpack.c.bf16 %v2126, %v2125
        %v2128 = vld [vmem:[%s804] sm:$0xf]
        %v2129 = vld [vmem:[%s804 + $0x4] sm:$0xf]
        %v2130 = vld [vmem:[%s804 + $0x8] sm:$0xf]
        %v2131 = vld [vmem:[%s804 + $0xc] sm:$0xf]
        %v2132 = vld [vmem:[%s804 + $0x10] sm:$0xf]
        %v2133 = vld [vmem:[%s804 + $0x14] sm:$0xf]
        %v2134 = vld [vmem:[%s804 + $0x18] sm:$0xf]
        %v2135 = vld [vmem:[%s804 + $0x1c] sm:$0xf]
        %v2136 = vld [vmem:[%s804 + $0x20] sm:$0xf]
        %v2137 = vld [vmem:[%s804 + $0x24] sm:$0xf]
        %v2138 = vld [vmem:[%s804 + $0x28] sm:$0xf]
        %v2139 = vld [vmem:[%s804 + $0x2c] sm:$0xf]
        %v2140 = vld [vmem:[%s804 + $0x30] sm:$0xf]
        %v2141 = vld [vmem:[%s804 + $0x34] sm:$0xf]
        %v2142 = vld [vmem:[%s804 + $0x38] sm:$0xf]
        %v2143 = vld [vmem:[%s804 + $0x3c] sm:$0xf]
        %v2144 = vld [vmem:[%s812] sm:$0x1]
        %v2146 = vlaneseq
        %v2147 = vshrl.u32 %v2146, 7
        %v2148 = vsub.s32 0, %v2147
        %v2149 = vrot.slane %v2144, %v2148
        %v2167 = vunpack.c.l.b16 %v2128
        %v2168 = vunpack.c.l.b16 %v2129
        %v2169 = vunpack.c.l.b16 %v2130
        %v2170 = vunpack.c.l.b16 %v2131
        %v2171 = vunpack.c.l.b16 %v2132
        %v2172 = vunpack.c.l.b16 %v2133
        %v2173 = vunpack.c.l.b16 %v2134
        %v2174 = vunpack.c.l.b16 %v2135
        %v2175 = vunpack.c.l.b16 %v2136
        %v2176 = vunpack.c.l.b16 %v2137
        %v2177 = vunpack.c.l.b16 %v2138
        %v2178 = vunpack.c.l.b16 %v2139
        %v2179 = vunpack.c.l.b16 %v2140
        %v2180 = vunpack.c.l.b16 %v2141
        %v2181 = vunpack.c.l.b16 %v2142
        %v2182 = vunpack.c.l.b16 %v2143
        %v2183 = vpack.c.b16 %v2168, %v2167
        %v2184 = vpack.c.b16 %v2170, %v2169
        %v2185 = vpack.c.b16 %v2172, %v2171
        %v2186 = vpack.c.b16 %v2174, %v2173
        %v2187 = vpack.c.b16 %v2176, %v2175
        %v2188 = vpack.c.b16 %v2178, %v2177
        %v2189 = vpack.c.b16 %v2180, %v2179
        %v2190 = vpack.c.b16 %v2182, %v2181
        %2199 = vmatprep.subr.bf16.mxu0 0
        %2200 = vmatpush1.bf16.msra.mxu0 %v2183
        %2201 = vmatprep.subr.bf16.mxu0 0
        %2202 = vmatpush1.bf16.msra.mxu0 %v2184
        %2203 = vmatprep.subr.bf16.mxu0 0
        %2204 = vmatpush1.bf16.msra.mxu0 %v2185
        %2205 = vmatprep.subr.bf16.mxu0 0
        %2206 = vmatpush1.bf16.msra.mxu0 %v2186
        %2207 = vmatprep.subr.bf16.mxu0 0
        %2208 = vmatpush1.bf16.msra.mxu0 %v2187
        %2209 = vmatprep.subr.bf16.mxu0 0
        %2210 = vmatpush1.bf16.msra.mxu0 %v2188
        %2211 = vmatprep.subr.bf16.mxu0 0
        %2212 = vmatpush1.bf16.msra.mxu0 %v2189
        %2213 = vmatprep.subr.bf16.mxu0 0
        %2214 = vmatpush1.bf16.msra.mxu0 %v2190
        %2215 = vmatprep.subr.bf16.mxu0 0
        %2216 = vmatpush1.bf16.msra.mxu0 0
        %2217 = vmatprep.subr.bf16.mxu0 0
        %2218 = vmatpush1.bf16.msra.mxu0 0
        %2219 = vmatprep.subr.bf16.mxu0 0
        %2220 = vmatpush1.bf16.msra.mxu0 0
        %2221 = vmatprep.subr.bf16.mxu0 0
        %2222 = vmatpush1.bf16.msra.mxu0 0
        %2223 = vmatprep.subr.bf16.mxu0 0
        %2224 = vmatpush1.bf16.msra.mxu0 0
        %2225 = vmatprep.subr.bf16.mxu0 0
        %2226 = vmatpush1.bf16.msra.mxu0 0
        %2227 = vmatprep.subr.bf16.mxu0 0
        %2228 = vmatpush1.bf16.msra.mxu0 0
        %2229 = vmatprep.subr.bf16.mxu0 0
        %2230 = vmatpush1.bf16.msra.mxu0 0
        %2231 = vmatprep.mubr.bf16.mxu0 0
        %2232 = vmatmul.mubr.bf16.gmra.mrb[0].mxu0 %v2127
        %v2233 = vpop.f32.mrb[0].mxu0
        %v2234 = vadd.f32 %v2149, %v2233
        %v2235 = vpop.f32.mrb[0].mxu0
        %v2236 = vpop.f32.mrb[0].mxu0
        %v2237 = vadd.f32 %v2149, %v2236
        %v2238 = vpop.f32.mrb[0].mxu0
        %2239 = vdwg.mxu0
        %v2240 = vadd.f32 %v981, %v2234
        %v2241 = vadd.f32 %v982, %v2237
        %v2242 = vld [vmem:[%s820] sm:$0x1]
        %v2243 = vld [vmem:[%s828] sm:$0x1]
        %2244 = vadd.xlane.f32.xlu0 %v2240
        %v2245 = vpop.xlane.xlu0 %2244
        %2246 = vadd.xlane.f32.xlu0 %v2241
        %v2247 = vpop.xlane.xlu0 %2246
        %v2248 = vmul.f32 %v2245, %v989
        %v2249 = vmul.f32 %v2247, %v989
        %v2250 = vsub.f32 %v2240, %v2248
        %v2251 = vsub.f32 %v2241, %v2249
        %v2252 = vmul.f32 %v2250, %v2250
        %v2253 = vmul.f32 %v2251, %v2251
        %2254 = vadd.xlane.f32.xlu0 %v2252
        %v2255 = vpop.xlane.xlu0 %2254
        %2256 = vadd.xlane.f32.xlu0 %v2253
        %v2257 = vpop.xlane.xlu0 %2256
        %v2258 = vmul.f32 %v2255, %v989
        %v2259 = vmul.f32 %v2257, %v989
        %v2260 = vadd.f32 %v2258, 1e-05
        %v2261 = vadd.f32 %v2259, 1e-05
        %v2262 = vrsqrt.pop %v2260
        %v2263 = vrsqrt.pop %v2261
        %v2264 = vmul.f32 %v2250, %v2262
        %v2265 = vmul.f32 %v2251, %v2263
        %v2267 = vlaneseq
        %v2268 = vshrl.u32 %v2267, 7
        %v2269 = vsub.s32 0, %v2268
        %v2270 = vrot.slane %v2242, %v2269
        %v2272 = vmul.f32 %v2264, %v2270
        %v2273 = vmul.f32 %v2265, %v2270
        %v2275 = vlaneseq
        %v2276 = vshrl.u32 %v2275, 7
        %v2277 = vsub.s32 0, %v2276
        %v2278 = vrot.slane %v2243, %v2277
        %v2280 = vadd.f32 %v2272, %v2278
        %v2281 = vadd.f32 %v2273, %v2278
        %v2282 = vpack.c.bf16 %v2281, %v2280
        %v2283 = vld [vmem:[%s837] sm:$0xff]
        %v2284 = vld [vmem:[%s837 + $0x8] sm:$0xff]
        %v2285 = vld [vmem:[%s837 + $0x10] sm:$0xff]
        %v2286 = vld [vmem:[%s837 + $0x18] sm:$0xff]
        %v2287 = vld [vmem:[%s837 + $0x20] sm:$0xff]
        %v2288 = vld [vmem:[%s837 + $0x28] sm:$0xff]
        %v2289 = vld [vmem:[%s837 + $0x30] sm:$0xff]
        %v2290 = vld [vmem:[%s837 + $0x38] sm:$0xff]
        %v2291 = vld [vmem:[%s837 + $0x40] sm:$0xff]
        %v2292 = vld [vmem:[%s837 + $0x48] sm:$0xff]
        %v2293 = vld [vmem:[%s837 + $0x50] sm:$0xff]
        %v2294 = vld [vmem:[%s837 + $0x58] sm:$0xff]
        %v2295 = vld [vmem:[%s837 + $0x60] sm:$0xff]
        %v2296 = vld [vmem:[%s837 + $0x68] sm:$0xff]
        %v2297 = vld [vmem:[%s837 + $0x70] sm:$0xff]
        %v2298 = vld [vmem:[%s837 + $0x78] sm:$0xff]
        %v2299 = vld [vmem:[%s837 + $0x80] sm:$0xff]
        %v2300 = vld [vmem:[%s837 + $0x88] sm:$0xff]
        %v2301 = vld [vmem:[%s837 + $0x90] sm:$0xff]
        %v2302 = vld [vmem:[%s837 + $0x98] sm:$0xff]
        %v2303 = vld [vmem:[%s837 + $0xa0] sm:$0xff]
        %v2304 = vld [vmem:[%s837 + $0xa8] sm:$0xff]
        %v2305 = vld [vmem:[%s837 + $0xb0] sm:$0xff]
        %v2306 = vld [vmem:[%s837 + $0xb8] sm:$0xff]
        %v2307 = vld [vmem:[%s837 + $0xc0] sm:$0xff]
        %v2308 = vld [vmem:[%s837 + $0xc8] sm:$0xff]
        %v2309 = vld [vmem:[%s837 + $0xd0] sm:$0xff]
        %v2310 = vld [vmem:[%s837 + $0xd8] sm:$0xff]
        %v2311 = vld [vmem:[%s837 + $0xe0] sm:$0xff]
        %v2312 = vld [vmem:[%s837 + $0xe8] sm:$0xff]
        %v2313 = vld [vmem:[%s837 + $0xf0] sm:$0xff]
        %v2314 = vld [vmem:[%s837 + $0xf8] sm:$0xff]
        %v2315 = vld [vmem:[%s846] sm:$0xf]
        %v2317 = vlaneseq
        %v2318 = vshrl.u32 %v2317, 7
        %v2319 = vsub.s32 0, %v2318
        %v2320 = vrot.slane %v2315, %v2319
        %v2321 = vlaneseq
        %v2322 = vshrl.u32 %v2321, 7
        %v2323 = vsub.s32 1, %v2322
        %v2324 = vrot.slane %v2315, %v2323
        %v2325 = vlaneseq
        %v2326 = vshrl.u32 %v2325, 7
        %v2327 = vsub.s32 2, %v2326
        %v2328 = vrot.slane %v2315, %v2327
        %v2329 = vlaneseq
        %v2330 = vshrl.u32 %v2329, 7
        %v2331 = vsub.s32 3, %v2330
        %v2332 = vrot.slane %v2315, %v2331
        %v2369 = vunpack.c.l.b16 %v2283
        %v2370 = vunpack.c.h.b16 %v2283
        %v2371 = vunpack.c.l.b16 %v2284
        %v2372 = vunpack.c.h.b16 %v2284
        %v2373 = vunpack.c.l.b16 %v2285
        %v2374 = vunpack.c.h.b16 %v2285
        %v2375 = vunpack.c.l.b16 %v2286
        %v2376 = vunpack.c.h.b16 %v2286
        %v2377 = vunpack.c.l.b16 %v2287
        %v2378 = vunpack.c.h.b16 %v2287
        %v2379 = vunpack.c.l.b16 %v2288
        %v2380 = vunpack.c.h.b16 %v2288
        %v2381 = vunpack.c.l.b16 %v2289
        %v2382 = vunpack.c.h.b16 %v2289
        %v2383 = vunpack.c.l.b16 %v2290
        %v2384 = vunpack.c.h.b16 %v2290
        %v2385 = vunpack.c.l.b16 %v2291
        %v2386 = vunpack.c.h.b16 %v2291
        %v2387 = vunpack.c.l.b16 %v2292
        %v2388 = vunpack.c.h.b16 %v2292
        %v2389 = vunpack.c.l.b16 %v2293
        %v2390 = vunpack.c.h.b16 %v2293
        %v2391 = vunpack.c.l.b16 %v2294
        %v2392 = vunpack.c.h.b16 %v2294
        %v2393 = vunpack.c.l.b16 %v2295
        %v2394 = vunpack.c.h.b16 %v2295
        %v2395 = vunpack.c.l.b16 %v2296
        %v2396 = vunpack.c.h.b16 %v2296
        %v2397 = vunpack.c.l.b16 %v2297
        %v2398 = vunpack.c.h.b16 %v2297
        %v2399 = vunpack.c.l.b16 %v2298
        %v2400 = vunpack.c.h.b16 %v2298
        %v2401 = vunpack.c.l.b16 %v2299
        %v2402 = vunpack.c.h.b16 %v2299
        %v2403 = vunpack.c.l.b16 %v2300
        %v2404 = vunpack.c.h.b16 %v2300
        %v2405 = vunpack.c.l.b16 %v2301
        %v2406 = vunpack.c.h.b16 %v2301
        %v2407 = vunpack.c.l.b16 %v2302
        %v2408 = vunpack.c.h.b16 %v2302
        %v2409 = vunpack.c.l.b16 %v2303
        %v2410 = vunpack.c.h.b16 %v2303
        %v2411 = vunpack.c.l.b16 %v2304
        %v2412 = vunpack.c.h.b16 %v2304
        %v2413 = vunpack.c.l.b16 %v2305
        %v2414 = vunpack.c.h.b16 %v2305
        %v2415 = vunpack.c.l.b16 %v2306
        %v2416 = vunpack.c.h.b16 %v2306
        %v2417 = vunpack.c.l.b16 %v2307
        %v2418 = vunpack.c.h.b16 %v2307
        %v2419 = vunpack.c.l.b16 %v2308
        %v2420 = vunpack.c.h.b16 %v2308
        %v2421 = vunpack.c.l.b16 %v2309
        %v2422 = vunpack.c.h.b16 %v2309
        %v2423 = vunpack.c.l.b16 %v2310
        %v2424 = vunpack.c.h.b16 %v2310
        %v2425 = vunpack.c.l.b16 %v2311
        %v2426 = vunpack.c.h.b16 %v2311
        %v2427 = vunpack.c.l.b16 %v2312
        %v2428 = vunpack.c.h.b16 %v2312
        %v2429 = vunpack.c.l.b16 %v2313
        %v2430 = vunpack.c.h.b16 %v2313
        %v2431 = vunpack.c.l.b16 %v2314
        %v2432 = vunpack.c.h.b16 %v2314
        %v2433 = vpack.c.b16 %v2373, %v2369
        %v2434 = vpack.c.b16 %v2374, %v2370
        %v2435 = vpack.c.b16 %v2375, %v2371
        %v2436 = vpack.c.b16 %v2376, %v2372
        %v2437 = vpack.c.b16 %v2381, %v2377
        %v2438 = vpack.c.b16 %v2382, %v2378
        %v2439 = vpack.c.b16 %v2383, %v2379
        %v2440 = vpack.c.b16 %v2384, %v2380
        %v2441 = vpack.c.b16 %v2389, %v2385
        %v2442 = vpack.c.b16 %v2390, %v2386
        %v2443 = vpack.c.b16 %v2391, %v2387
        %v2444 = vpack.c.b16 %v2392, %v2388
        %v2445 = vpack.c.b16 %v2397, %v2393
        %v2446 = vpack.c.b16 %v2398, %v2394
        %v2447 = vpack.c.b16 %v2399, %v2395
        %v2448 = vpack.c.b16 %v2400, %v2396
        %v2449 = vpack.c.b16 %v2405, %v2401
        %v2450 = vpack.c.b16 %v2406, %v2402
        %v2451 = vpack.c.b16 %v2407, %v2403
        %v2452 = vpack.c.b16 %v2408, %v2404
        %v2453 = vpack.c.b16 %v2413, %v2409
        %v2454 = vpack.c.b16 %v2414, %v2410
        %v2455 = vpack.c.b16 %v2415, %v2411
        %v2456 = vpack.c.b16 %v2416, %v2412
        %v2457 = vpack.c.b16 %v2421, %v2417
        %v2458 = vpack.c.b16 %v2422, %v2418
        %v2459 = vpack.c.b16 %v2423, %v2419
        %v2460 = vpack.c.b16 %v2424, %v2420
        %v2461 = vpack.c.b16 %v2429, %v2425
        %v2462 = vpack.c.b16 %v2430, %v2426
        %v2463 = vpack.c.b16 %v2431, %v2427
        %v2464 = vpack.c.b16 %v2432, %v2428
        %2497 = vmatprep.subr.bf16.mxu0 %v2434
        %2498 = vmatpush1.bf16.msra.mxu0 %v2433
        %2499 = vmatprep.subr.bf16.mxu0 %v2438
        %2500 = vmatpush1.bf16.msra.mxu0 %v2437
        %2501 = vmatprep.subr.bf16.mxu0 %v2442
        %2502 = vmatpush1.bf16.msra.mxu0 %v2441
        %2503 = vmatprep.subr.bf16.mxu0 %v2446
        %2504 = vmatpush1.bf16.msra.mxu0 %v2445
        %2505 = vmatprep.subr.bf16.mxu0 %v2450
        %2506 = vmatpush1.bf16.msra.mxu0 %v2449
        %2507 = vmatprep.subr.bf16.mxu0 %v2454
        %2508 = vmatpush1.bf16.msra.mxu0 %v2453
        %2509 = vmatprep.subr.bf16.mxu0 %v2458
        %2510 = vmatpush1.bf16.msra.mxu0 %v2457
        %2511 = vmatprep.subr.bf16.mxu0 %v2462
        %2512 = vmatpush1.bf16.msra.mxu0 %v2461
        %2513 = vmatprep.subr.bf16.mxu0 0
        %2514 = vmatpush1.bf16.msra.mxu0 0
        %2515 = vmatprep.subr.bf16.mxu0 0
        %2516 = vmatpush1.bf16.msra.mxu0 0
        %2517 = vmatprep.subr.bf16.mxu0 0
        %2518 = vmatpush1.bf16.msra.mxu0 0
        %2519 = vmatprep.subr.bf16.mxu0 0
        %2520 = vmatpush1.bf16.msra.mxu0 0
        %2521 = vmatprep.subr.bf16.mxu0 0
        %2522 = vmatpush1.bf16.msra.mxu0 0
        %2523 = vmatprep.subr.bf16.mxu0 0
        %2524 = vmatpush1.bf16.msra.mxu0 0
        %2525 = vmatprep.subr.bf16.mxu0 0
        %2526 = vmatpush1.bf16.msra.mxu0 0
        %2527 = vmatprep.subr.bf16.mxu0 0
        %2528 = vmatpush1.bf16.msra.mxu0 0
        %2529 = vmatprep.mubr.bf16.mxu0 0
        %2530 = vmatmul.mubr.bf16.gmra.mrb[0].mxu0 %v2282
        %v2531 = vpop.f32.mrb[0].mxu0
        %v2532 = vadd.f32 %v2320, %v2531
        %v2533 = vpop.f32.mrb[0].mxu0
        %v2534 = vadd.f32 %v2324, %v2533
        %v2535 = vpop.f32.mrb[0].mxu0
        %v2536 = vadd.f32 %v2320, %v2535
        %v2537 = vpop.f32.mrb[0].mxu0
        %v2538 = vadd.f32 %v2324, %v2537
        %2539 = vdwg.mxu0
        %2540 = vmatprep.subr.bf16.mxu0 %v2436
        %2541 = vmatpush1.bf16.msra.mxu0 %v2435
        %2542 = vmatprep.subr.bf16.mxu0 %v2440
        %2543 = vmatpush1.bf16.msra.mxu0 %v2439
        %2544 = vmatprep.subr.bf16.mxu0 %v2444
        %2545 = vmatpush1.bf16.msra.mxu0 %v2443
        %2546 = vmatprep.subr.bf16.mxu0 %v2448
        %2547 = vmatpush1.bf16.msra.mxu0 %v2447
        %2548 = vmatprep.subr.bf16.mxu0 %v2452
        %2549 = vmatpush1.bf16.msra.mxu0 %v2451
        %2550 = vmatprep.subr.bf16.mxu0 %v2456
        %2551 = vmatpush1.bf16.msra.mxu0 %v2455
        %2552 = vmatprep.subr.bf16.mxu0 %v2460
        %2553 = vmatpush1.bf16.msra.mxu0 %v2459
        %2554 = vmatprep.subr.bf16.mxu0 %v2464
        %2555 = vmatpush1.bf16.msra.mxu0 %v2463
        %2556 = vmatprep.subr.bf16.mxu0 0
        %2557 = vmatpush1.bf16.msra.mxu0 0
        %2558 = vmatprep.subr.bf16.mxu0 0
        %2559 = vmatpush1.bf16.msra.mxu0 0
        %2560 = vmatprep.subr.bf16.mxu0 0
        %2561 = vmatpush1.bf16.msra.mxu0 0
        %2562 = vmatprep.subr.bf16.mxu0 0
        %2563 = vmatpush1.bf16.msra.mxu0 0
        %2564 = vmatprep.subr.bf16.mxu0 0
        %2565 = vmatpush1.bf16.msra.mxu0 0
        %2566 = vmatprep.subr.bf16.mxu0 0
        %2567 = vmatpush1.bf16.msra.mxu0 0
        %2568 = vmatprep.subr.bf16.mxu0 0
        %2569 = vmatpush1.bf16.msra.mxu0 0
        %2570 = vmatprep.subr.bf16.mxu0 0
        %2571 = vmatpush1.bf16.msra.mxu0 0
        %2572 = vmatprep.mubr.bf16.mxu0 0
        %2573 = vmatmul.mubr.bf16.gmra.mrb[0].mxu0 %v2282
        %v2574 = vpop.f32.mrb[0].mxu0
        %v2575 = vadd.f32 %v2328, %v2574
        %v2576 = vpop.f32.mrb[0].mxu0
        %v2577 = vadd.f32 %v2332, %v2576
        %v2578 = vpop.f32.mrb[0].mxu0
        %v2579 = vadd.f32 %v2328, %v2578
        %v2580 = vpop.f32.mrb[0].mxu0
        %v2581 = vadd.f32 %v2332, %v2580
        %2582 = vdwg.mxu0
        %v2583 = vmul.f32 %v2532, 1.702
        %v2584 = vmul.f32 %v2534, 1.702
        %v2585 = vmul.f32 %v2575, 1.702
        %v2586 = vmul.f32 %v2577, 1.702
        %v2587 = vmul.f32 %v2536, 1.702
        %v2588 = vmul.f32 %v2538, 1.702
        %v2589 = vmul.f32 %v2579, 1.702
        %v2590 = vmul.f32 %v2581, 1.702
        %v2591 = vxor.u32 %v2583, 2147483648
        %v2592 = vxor.u32 %v2584, 2147483648
        %v2593 = vxor.u32 %v2585, 2147483648
        %v2594 = vxor.u32 %v2586, 2147483648
        %v2595 = vxor.u32 %v2587, 2147483648
        %v2596 = vxor.u32 %v2588, 2147483648
        %v2597 = vxor.u32 %v2589, 2147483648
        %v2598 = vxor.u32 %v2590, 2147483648
        %v2599 = vmul.f32 %v2591, 1.442695
        %v2600 = vpow.pop %v2599
        %v2601 = vmul.f32 %v2592, 1.442695
        %v2602 = vpow.pop %v2601
        %v2603 = vmul.f32 %v2593, 1.442695
        %v2604 = vpow.pop %v2603
        %v2605 = vmul.f32 %v2594, 1.442695
        %v2606 = vpow.pop %v2605
        %v2607 = vmul.f32 %v2595, 1.442695
        %v2608 = vpow.pop %v2607
        %v2609 = vmul.f32 %v2596, 1.442695
        %v2610 = vpow.pop %v2609
        %v2611 = vmul.f32 %v2597, 1.442695
        %v2612 = vpow.pop %v2611
        %v2613 = vmul.f32 %v2598, 1.442695
        %v2614 = vpow.pop %v2613
        %v2615 = vadd.f32 %v2600, 1.0
        %v2616 = vadd.f32 %v2602, 1.0
        %v2617 = vadd.f32 %v2604, 1.0
        %v2618 = vadd.f32 %v2606, 1.0
        %v2619 = vadd.f32 %v2608, 1.0
        %v2620 = vadd.f32 %v2610, 1.0
        %v2621 = vadd.f32 %v2612, 1.0
        %v2622 = vadd.f32 %v2614, 1.0
        %v2623 = vrcp.pop %v2615
        %v2624 = vmul.f32 1.0, %v2623
        %v2625 = vrcp.pop %v2616
        %v2626 = vmul.f32 1.0, %v2625
        %v2627 = vrcp.pop %v2617
        %v2628 = vmul.f32 1.0, %v2627
        %v2629 = vrcp.pop %v2618
        %v2630 = vmul.f32 1.0, %v2629
        %v2631 = vrcp.pop %v2619
        %v2632 = vmul.f32 1.0, %v2631
        %v2633 = vrcp.pop %v2620
        %v2634 = vmul.f32 1.0, %v2633
        %v2635 = vrcp.pop %v2621
        %v2636 = vmul.f32 1.0, %v2635
        %v2637 = vrcp.pop %v2622
        %v2638 = vmul.f32 1.0, %v2637
        %v2639 = vmul.f32 %v2532, %v2624
        %v2640 = vmul.f32 %v2534, %v2626
        %v2641 = vmul.f32 %v2575, %v2628
        %v2642 = vmul.f32 %v2577, %v2630
        %v2643 = vmul.f32 %v2536, %v2632
        %v2644 = vmul.f32 %v2538, %v2634
        %v2645 = vmul.f32 %v2579, %v2636
        %v2646 = vmul.f32 %v2581, %v2638
        %v2647 = vpack.c.bf16 %v2643, %v2639
        %v2648 = vpack.c.bf16 %v2644, %v2640
        %v2649 = vpack.c.bf16 %v2645, %v2641
        %v2650 = vpack.c.bf16 %v2646, %v2642
        %v2651 = vld [vmem:[%s855] sm:$0xf]
        %v2652 = vld [vmem:[%s855 + $0x4] sm:$0xf]
        %v2653 = vld [vmem:[%s855 + $0x8] sm:$0xf]
        %v2654 = vld [vmem:[%s855 + $0xc] sm:$0xf]
        %v2655 = vld [vmem:[%s855 + $0x10] sm:$0xf]
        %v2656 = vld [vmem:[%s855 + $0x14] sm:$0xf]
        %v2657 = vld [vmem:[%s855 + $0x18] sm:$0xf]
        %v2658 = vld [vmem:[%s855 + $0x1c] sm:$0xf]
        %v2659 = vld [vmem:[%s855 + $0x20] sm:$0xf]
        %v2660 = vld [vmem:[%s855 + $0x24] sm:$0xf]
        %v2661 = vld [vmem:[%s855 + $0x28] sm:$0xf]
        %v2662 = vld [vmem:[%s855 + $0x2c] sm:$0xf]
        %v2663 = vld [vmem:[%s855 + $0x30] sm:$0xf]
        %v2664 = vld [vmem:[%s855 + $0x34] sm:$0xf]
        %v2665 = vld [vmem:[%s855 + $0x38] sm:$0xf]
        %v2666 = vld [vmem:[%s855 + $0x3c] sm:$0xf]
        %v2667 = vld [vmem:[%s855 + $0x40] sm:$0xf]
        %v2668 = vld [vmem:[%s855 + $0x44] sm:$0xf]
        %v2669 = vld [vmem:[%s855 + $0x48] sm:$0xf]
        %v2670 = vld [vmem:[%s855 + $0x4c] sm:$0xf]
        %v2671 = vld [vmem:[%s855 + $0x50] sm:$0xf]
        %v2672 = vld [vmem:[%s855 + $0x54] sm:$0xf]
        %v2673 = vld [vmem:[%s855 + $0x58] sm:$0xf]
        %v2674 = vld [vmem:[%s855 + $0x5c] sm:$0xf]
        %v2675 = vld [vmem:[%s855 + $0x60] sm:$0xf]
        %v2676 = vld [vmem:[%s855 + $0x64] sm:$0xf]
        %v2677 = vld [vmem:[%s855 + $0x68] sm:$0xf]
        %v2678 = vld [vmem:[%s855 + $0x6c] sm:$0xf]
        %v2679 = vld [vmem:[%s855 + $0x70] sm:$0xf]
        %v2680 = vld [vmem:[%s855 + $0x74] sm:$0xf]
        %v2681 = vld [vmem:[%s855 + $0x78] sm:$0xf]
        %v2682 = vld [vmem:[%s855 + $0x7c] sm:$0xf]
        %v2683 = vld [vmem:[%s855 + $0x80] sm:$0xf]
        %v2684 = vld [vmem:[%s855 + $0x84] sm:$0xf]
        %v2685 = vld [vmem:[%s855 + $0x88] sm:$0xf]
        %v2686 = vld [vmem:[%s855 + $0x8c] sm:$0xf]
        %v2687 = vld [vmem:[%s855 + $0x90] sm:$0xf]
        %v2688 = vld [vmem:[%s855 + $0x94] sm:$0xf]
        %v2689 = vld [vmem:[%s855 + $0x98] sm:$0xf]
        %v2690 = vld [vmem:[%s855 + $0x9c] sm:$0xf]
        %v2691 = vld [vmem:[%s855 + $0xa0] sm:$0xf]
        %v2692 = vld [vmem:[%s855 + $0xa4] sm:$0xf]
        %v2693 = vld [vmem:[%s855 + $0xa8] sm:$0xf]
        %v2694 = vld [vmem:[%s855 + $0xac] sm:$0xf]
        %v2695 = vld [vmem:[%s855 + $0xb0] sm:$0xf]
        %v2696 = vld [vmem:[%s855 + $0xb4] sm:$0xf]
        %v2697 = vld [vmem:[%s855 + $0xb8] sm:$0xf]
        %v2698 = vld [vmem:[%s855 + $0xbc] sm:$0xf]
        %v2699 = vld [vmem:[%s855 + $0xc0] sm:$0xf]
        %v2700 = vld [vmem:[%s855 + $0xc4] sm:$0xf]
        %v2701 = vld [vmem:[%s855 + $0xc8] sm:$0xf]
        %v2702 = vld [vmem:[%s855 + $0xcc] sm:$0xf]
        %v2703 = vld [vmem:[%s855 + $0xd0] sm:$0xf]
        %v2704 = vld [vmem:[%s855 + $0xd4] sm:$0xf]
        %v2705 = vld [vmem:[%s855 + $0xd8] sm:$0xf]
        %v2706 = vld [vmem:[%s855 + $0xdc] sm:$0xf]
        %v2707 = vld [vmem:[%s855 + $0xe0] sm:$0xf]
        %v2708 = vld [vmem:[%s855 + $0xe4] sm:$0xf]
        %v2709 = vld [vmem:[%s855 + $0xe8] sm:$0xf]
        %v2710 = vld [vmem:[%s855 + $0xec] sm:$0xf]
        %v2711 = vld [vmem:[%s855 + $0xf0] sm:$0xf]
        %v2712 = vld [vmem:[%s855 + $0xf4] sm:$0xf]
        %v2713 = vld [vmem:[%s855 + $0xf8] sm:$0xf]
        %v2714 = vld [vmem:[%s855 + $0xfc] sm:$0xf]
        %v2715 = vld [vmem:[%s863] sm:$0x1]
        %v2717 = vlaneseq
        %v2718 = vshrl.u32 %v2717, 7
        %v2719 = vsub.s32 0, %v2718
        %v2720 = vrot.slane %v2715, %v2719
        %v2786 = vunpack.c.l.b16 %v2651
        %v2787 = vunpack.c.l.b16 %v2652
        %v2788 = vunpack.c.l.b16 %v2653
        %v2789 = vunpack.c.l.b16 %v2654
        %v2790 = vunpack.c.l.b16 %v2655
        %v2791 = vunpack.c.l.b16 %v2656
        %v2792 = vunpack.c.l.b16 %v2657
        %v2793 = vunpack.c.l.b16 %v2658
        %v2794 = vunpack.c.l.b16 %v2659
        %v2795 = vunpack.c.l.b16 %v2660
        %v2796 = vunpack.c.l.b16 %v2661
        %v2797 = vunpack.c.l.b16 %v2662
        %v2798 = vunpack.c.l.b16 %v2663
        %v2799 = vunpack.c.l.b16 %v2664
        %v2800 = vunpack.c.l.b16 %v2665
        %v2801 = vunpack.c.l.b16 %v2666
        %v2802 = vunpack.c.l.b16 %v2667
        %v2803 = vunpack.c.l.b16 %v2668
        %v2804 = vunpack.c.l.b16 %v2669
        %v2805 = vunpack.c.l.b16 %v2670
        %v2806 = vunpack.c.l.b16 %v2671
        %v2807 = vunpack.c.l.b16 %v2672
        %v2808 = vunpack.c.l.b16 %v2673
        %v2809 = vunpack.c.l.b16 %v2674
        %v2810 = vunpack.c.l.b16 %v2675
        %v2811 = vunpack.c.l.b16 %v2676
        %v2812 = vunpack.c.l.b16 %v2677
        %v2813 = vunpack.c.l.b16 %v2678
        %v2814 = vunpack.c.l.b16 %v2679
        %v2815 = vunpack.c.l.b16 %v2680
        %v2816 = vunpack.c.l.b16 %v2681
        %v2817 = vunpack.c.l.b16 %v2682
        %v2818 = vunpack.c.l.b16 %v2683
        %v2819 = vunpack.c.l.b16 %v2684
        %v2820 = vunpack.c.l.b16 %v2685
        %v2821 = vunpack.c.l.b16 %v2686
        %v2822 = vunpack.c.l.b16 %v2687
        %v2823 = vunpack.c.l.b16 %v2688
        %v2824 = vunpack.c.l.b16 %v2689
        %v2825 = vunpack.c.l.b16 %v2690
        %v2826 = vunpack.c.l.b16 %v2691
        %v2827 = vunpack.c.l.b16 %v2692
        %v2828 = vunpack.c.l.b16 %v2693
        %v2829 = vunpack.c.l.b16 %v2694
        %v2830 = vunpack.c.l.b16 %v2695
        %v2831 = vunpack.c.l.b16 %v2696
        %v2832 = vunpack.c.l.b16 %v2697
        %v2833 = vunpack.c.l.b16 %v2698
        %v2834 = vunpack.c.l.b16 %v2699
        %v2835 = vunpack.c.l.b16 %v2700
        %v2836 = vunpack.c.l.b16 %v2701
        %v2837 = vunpack.c.l.b16 %v2702
        %v2838 = vunpack.c.l.b16 %v2703
        %v2839 = vunpack.c.l.b16 %v2704
        %v2840 = vunpack.c.l.b16 %v2705
        %v2841 = vunpack.c.l.b16 %v2706
        %v2842 = vunpack.c.l.b16 %v2707
        %v2843 = vunpack.c.l.b16 %v2708
        %v2844 = vunpack.c.l.b16 %v2709
        %v2845 = vunpack.c.l.b16 %v2710
        %v2846 = vunpack.c.l.b16 %v2711
        %v2847 = vunpack.c.l.b16 %v2712
        %v2848 = vunpack.c.l.b16 %v2713
        %v2849 = vunpack.c.l.b16 %v2714
        %v2850 = vpack.c.b16 %v2787, %v2786
        %v2851 = vpack.c.b16 %v2789, %v2788
        %v2852 = vpack.c.b16 %v2791, %v2790
        %v2853 = vpack.c.b16 %v2793, %v2792
        %v2854 = vpack.c.b16 %v2795, %v2794
        %v2855 = vpack.c.b16 %v2797, %v2796
        %v2856 = vpack.c.b16 %v2799, %v2798
        %v2857 = vpack.c.b16 %v2801, %v2800
        %v2858 = vpack.c.b16 %v2803, %v2802
        %v2859 = vpack.c.b16 %v2805, %v2804
        %v2860 = vpack.c.b16 %v2807, %v2806
        %v2861 = vpack.c.b16 %v2809, %v2808
        %v2862 = vpack.c.b16 %v2811, %v2810
        %v2863 = vpack.c.b16 %v2813, %v2812
        %v2864 = vpack.c.b16 %v2815, %v2814
        %v2865 = vpack.c.b16 %v2817, %v2816
        %v2866 = vpack.c.b16 %v2819, %v2818
        %v2867 = vpack.c.b16 %v2821, %v2820
        %v2868 = vpack.c.b16 %v2823, %v2822
        %v2869 = vpack.c.b16 %v2825, %v2824
        %v2870 = vpack.c.b16 %v2827, %v2826
        %v2871 = vpack.c.b16 %v2829, %v2828
        %v2872 = vpack.c.b16 %v2831, %v2830
        %v2873 = vpack.c.b16 %v2833, %v2832
        %v2874 = vpack.c.b16 %v2835, %v2834
        %v2875 = vpack.c.b16 %v2837, %v2836
        %v2876 = vpack.c.b16 %v2839, %v2838
        %v2877 = vpack.c.b16 %v2841, %v2840
        %v2878 = vpack.c.b16 %v2843, %v2842
        %v2879 = vpack.c.b16 %v2845, %v2844
        %v2880 = vpack.c.b16 %v2847, %v2846
        %v2881 = vpack.c.b16 %v2849, %v2848
        %2914 = vmatprep.subr.bf16.mxu0 0
        %2915 = vmatpush1.bf16.msra.mxu0 %v2850
        %2916 = vmatprep.subr.bf16.mxu0 0
        %2917 = vmatpush1.bf16.msra.mxu0 %v2851
        %2918 = vmatprep.subr.bf16.mxu0 0
        %2919 = vmatpush1.bf16.msra.mxu0 %v2852
        %2920 = vmatprep.subr.bf16.mxu0 0
        %2921 = vmatpush1.bf16.msra.mxu0 %v2853
        %2922 = vmatprep.subr.bf16.mxu0 0
        %2923 = vmatpush1.bf16.msra.mxu0 %v2854
        %2924 = vmatprep.subr.bf16.mxu0 0
        %2925 = vmatpush1.bf16.msra.mxu0 %v2855
        %2926 = vmatprep.subr.bf16.mxu0 0
        %2927 = vmatpush1.bf16.msra.mxu0 %v2856
        %2928 = vmatprep.subr.bf16.mxu0 0
        %2929 = vmatpush1.bf16.msra.mxu0 %v2857
        %2930 = vmatprep.subr.bf16.mxu0 0
        %2931 = vmatpush1.bf16.msra.mxu0 %v2858
        %2932 = vmatprep.subr.bf16.mxu0 0
        %2933 = vmatpush1.bf16.msra.mxu0 %v2859
        %2934 = vmatprep.subr.bf16.mxu0 0
        %2935 = vmatpush1.bf16.msra.mxu0 %v2860
        %2936 = vmatprep.subr.bf16.mxu0 0
        %2937 = vmatpush1.bf16.msra.mxu0 %v2861
        %2938 = vmatprep.subr.bf16.mxu0 0
        %2939 = vmatpush1.bf16.msra.mxu0 %v2862
        %2940 = vmatprep.subr.bf16.mxu0 0
        %2941 = vmatpush1.bf16.msra.mxu0 %v2863
        %2942 = vmatprep.subr.bf16.mxu0 0
        %2943 = vmatpush1.bf16.msra.mxu0 %v2864
        %2944 = vmatprep.subr.bf16.mxu0 0
        %2945 = vmatpush1.bf16.msra.mxu0 %v2865
        %2946 = vmatprep.mubr.bf16.mxu0 %v2648
        %2947 = vmatmul.mubr.bf16.gmra.mrb[0].mxu0 %v2647
        %v2948 = vpop.f32.mrb[0].mxu0
        %v2949 = vadd.f32 %v2720, %v2948
        %v2950 = vpop.f32.mrb[0].mxu0
        %v2951 = vpop.f32.mrb[0].mxu0
        %v2952 = vadd.f32 %v2720, %v2951
        %v2953 = vpop.f32.mrb[0].mxu0
        %2954 = vdwg.mxu0
        %2955 = vmatprep.subr.bf16.mxu0 0
        %2956 = vmatpush1.bf16.msra.mxu0 %v2866
        %2957 = vmatprep.subr.bf16.mxu0 0
        %2958 = vmatpush1.bf16.msra.mxu0 %v2867
        %2959 = vmatprep.subr.bf16.mxu0 0
        %2960 = vmatpush1.bf16.msra.mxu0 %v2868
        %2961 = vmatprep.subr.bf16.mxu0 0
        %2962 = vmatpush1.bf16.msra.mxu0 %v2869
        %2963 = vmatprep.subr.bf16.mxu0 0
        %2964 = vmatpush1.bf16.msra.mxu0 %v2870
        %2965 = vmatprep.subr.bf16.mxu0 0
        %2966 = vmatpush1.bf16.msra.mxu0 %v2871
        %2967 = vmatprep.subr.bf16.mxu0 0
        %2968 = vmatpush1.bf16.msra.mxu0 %v2872
        %2969 = vmatprep.subr.bf16.mxu0 0
        %2970 = vmatpush1.bf16.msra.mxu0 %v2873
        %2971 = vmatprep.subr.bf16.mxu0 0
        %2972 = vmatpush1.bf16.msra.mxu0 %v2874
        %2973 = vmatprep.subr.bf16.mxu0 0
        %2974 = vmatpush1.bf16.msra.mxu0 %v2875
        %2975 = vmatprep.subr.bf16.mxu0 0
        %2976 = vmatpush1.bf16.msra.mxu0 %v2876
        %2977 = vmatprep.subr.bf16.mxu0 0
        %2978 = vmatpush1.bf16.msra.mxu0 %v2877
        %2979 = vmatprep.subr.bf16.mxu0 0
        %2980 = vmatpush1.bf16.msra.mxu0 %v2878
        %2981 = vmatprep.subr.bf16.mxu0 0
        %2982 = vmatpush1.bf16.msra.mxu0 %v2879
        %2983 = vmatprep.subr.bf16.mxu0 0
        %2984 = vmatpush1.bf16.msra.mxu0 %v2880
        %2985 = vmatprep.subr.bf16.mxu0 0
        %2986 = vmatpush1.bf16.msra.mxu0 %v2881
        %2987 = vmatprep.mubr.bf16.mxu0 %v2650
        %2988 = vmatmul.mubr.bf16.gmra.mrb[0].mxu0 %v2649
        %v2989 = vpop.f32.mrb[0].mxu0
        %v2990 = vadd.f32 %v2949, %v2989
        %v2991 = vpop.f32.mrb[0].mxu0
        %v2992 = vpop.f32.mrb[0].mxu0
        %v2993 = vadd.f32 %v2952, %v2992
        %v2994 = vpop.f32.mrb[0].mxu0
        %2995 = vdwg.mxu0
        %v2996 = vadd.f32 %v2240, %v2990
        %v2997 = vadd.f32 %v2241, %v2993
        %2998 = vst [vmem:[%s971] sm:$0xff] %v2996
        %2999 = vst [vmem:[%s971 + $0x8] sm:$0xff] %v2997
        %p3000 = scmp.eq.s32.totalorder %s56, 3
        // Predicated region
        $region145: #{tpu_custom_call.1} parent=79 // pred_check
          %p3001 = pneg %p3000
        $region146: #{tpu_custom_call.1} parent=79 // pred_check_branch
          %3003 = sbr.rel (%p3001) target = $region148
        $region147: #{tpu_custom_call.1} parent=79 // pred_region
          %v3004 = vld [vmem:[#allocation23] sm:$0x1]
          %v3005 = vld [vmem:[#allocation25] sm:$0x1]
          %3006 = vadd.xlane.f32.xlu0 %v2996
          %v3007 = vpop.xlane.xlu0 %3006
          %3008 = vadd.xlane.f32.xlu0 %v2997
          %v3009 = vpop.xlane.xlu0 %3008
          %v3010 = vmul.f32 %v3007, %v989
          %v3011 = vmul.f32 %v3009, %v989
          %v3012 = vsub.f32 %v2996, %v3010
          %v3013 = vsub.f32 %v2997, %v3011
          %v3014 = vmul.f32 %v3012, %v3012
          %v3015 = vmul.f32 %v3013, %v3013
          %3016 = vadd.xlane.f32.xlu0 %v3014
          %v3017 = vpop.xlane.xlu0 %3016
          %3018 = vadd.xlane.f32.xlu0 %v3015
          %v3019 = vpop.xlane.xlu0 %3018
          %v3020 = vmul.f32 %v3017, %v989
          %v3021 = vmul.f32 %v3019, %v989
          %v3022 = vadd.f32 %v3020, 1e-05
          %v3023 = vadd.f32 %v3021, 1e-05
          %v3024 = vrsqrt.pop %v3022
          %v3025 = vrsqrt.pop %v3023
          %v3026 = vmul.f32 %v3012, %v3024
          %v3027 = vmul.f32 %v3013, %v3025
          %v3029 = vlaneseq
          %v3030 = vshrl.u32 %v3029, 7
          %v3031 = vsub.s32 0, %v3030
          %v3032 = vrot.slane %v3004, %v3031
          %v3034 = vmul.f32 %v3026, %v3032
          %v3035 = vmul.f32 %v3027, %v3032
          %v3037 = vlaneseq
          %v3038 = vshrl.u32 %v3037, 7
          %v3039 = vsub.s32 0, %v3038
          %v3040 = vrot.slane %v3005, %v3039
          %v3042 = vadd.f32 %v3034, %v3040
          %v3043 = vadd.f32 %v3035, %v3040
          %3044 = vst [vmem:[%s971] sm:$0xff] %v3042
          %3045 = vst [vmem:[%s971 + $0x8] sm:$0xff] %v3043
        $region148: #{tpu_custom_call.1} parent=79 // pred_fallthru
          _
        %s3046 = sand.u32 %s451, 1
        %s3047 = scalar_lea.sflag [#allocation4], %s3046
        %s3048 = sand.u32 %s451, 1
        %s3049 = smul.addr %s3048, 16
        %s3050 = scalar_lea.vmem [#allocation26], %s3049
        // Predicated region
        $region149: #{tpu_custom_call.1} parent=79 // pred_check
          %p3051 = pneg %p461
        $region150: #{tpu_custom_call.1} parent=79 // pred_check_branch
          %3053 = sbr.rel (%p3051) target = $region152
        $region151: #{tpu_custom_call.1} parent=79 // pred_region
          %s3055 = ssub.s32 256, 256
          %3056 = vsyncadd %s3047, %s3055
          %s3057 = smul.addr %s55, 2
          %s3058 = smul.addr %s3057, 128
          %s3059 = scalar_lea.hbm %s15, %s3058
          %s3060 = sshll.u32 %s3050, 4
          %s3061 = int_to_ptr.vmem [resolvable:$true] %s3060
          %3066 = dma.vmem_to_hbm [thread:$0]  %s3061, 256, %s3059, %s3047, 128, 128, 8
        $region152: #{tpu_custom_call.1} parent=79 // pred_fallthru
          _
      $region80: #{tpu_custom_call.1} parent=5 // pred_fallthru
        _
      %p3067 = scmp.le.s32.totalorder 2, %s46
      // Predicated region
      $region153: #{tpu_custom_call.1} parent=5 // pred_check
        %p3068 = pneg %p3067
      $region154: #{tpu_custom_call.1} parent=5 // pred_check_branch
        %3070 = sbr.rel (%p3068) target = $region156
      $region155: #{tpu_custom_call.1} parent=5 // pred_region
        %s3071 = ssub.s32 %s46, 2
        // Predicated region
        $region157: #{tpu_custom_call.1} parent=155 // pred_check
          %p3072 = pneg %p467
        $region158: #{tpu_custom_call.1} parent=155 // pred_check_branch
          %3074 = sbr.rel (%p3072) target = $region160
        $region159: #{tpu_custom_call.1} parent=155 // pred_region
          %s3075 = sand.u32 %s452, 1
          %s3076 = scalar_lea.sflag [#allocation4], %s3075
          %s3077 = sand.u32 %s452, 1
          %s3078 = smul.addr %s3077, 16
          %s3079 = scalar_lea.vmem [#allocation26], %s3078
          %3080 = dma.done %s3076, 256
        $region160: #{tpu_custom_call.1} parent=155 // pred_fallthru
          _
      $region156: #{tpu_custom_call.1} parent=5 // pred_fallthru
        _
    $region6: #{tpu_custom_call.1} parent=1 // loop_footer
      %s50 = sadd.s32 1, %s46
    $region7: #{tpu_custom_call.1} parent=1 // loop_footer_branch
      %45 = sbr.rel target = $region3
    $region8: #{tpu_custom_call.1} parent=1 // loop_exit
      _
    %3081 = vsyncpa [#allocation3], 1
    %s3082 = scalar_lea.sflag [#allocation3], 1
    %3083 = vsyncpa %s3082, 1
    %3084 = vsyncpa [#allocation6], 1
    %s3085 = scalar_lea.sflag [#allocation6], 1
    %3086 = vsyncpa %s3085, 1
    %3087 = vsyncpa [#allocation9], 1
    %s3088 = scalar_lea.sflag [#allocation9], 1
    %3089 = vsyncpa %s3088, 1
    %3090 = vsyncpa [#allocation12], 1
    %s3091 = scalar_lea.sflag [#allocation12], 1
    %3092 = vsyncpa %s3091, 1
    %3093 = vsyncpa [#allocation15], 1
    %s3094 = scalar_lea.sflag [#allocation15], 1
    %3095 = vsyncpa %s3094, 1
    %3096 = vsyncpa [#allocation18], 1
    %s3097 = scalar_lea.sflag [#allocation18], 1
    %3098 = vsyncpa %s3097, 1
    %3099 = vsyncpa [#allocation21], 1
    %s3100 = scalar_lea.sflag [#allocation21], 1
    %3101 = vsyncpa %s3100, 1
    %3102 = vsyncpa [#allocation24], 1
    %3103 = vsyncpa [#allocation4], 1
    %s3104 = scalar_lea.sflag [#allocation4], 1
    %3105 = vsyncpa %s3104, 1

</llo_original>
